<compile_context>
chip_gen: v7x
topology: tpu7x:2x2x1
jax: 0.10.0
libtpu: 0.0.40
codegen_flags: <defaults>
</compile_context>

<pallas_src>
import functools

import jax
import jax.numpy as jnp
from jax.experimental import pallas as pl
from jax.experimental.pallas import tpu as pltpu


def _lgr_kernel(x_ref, w0_ref, b0_ref, wres_ref, bres_ref, wft_ref, bf_ref,
                logits_ref, xwx_ref, *, depth, block_b, n_per_batch):
    # x_ref: [4, L] with L = block_b * n_per_batch (batch folded onto lanes).
    L = x_ref.shape[-1]
    x = x_ref[...]                                            # [4, L]
    w0 = w0_ref[...]                                          # [C, 4]
    b0 = b0_ref[...]                                          # [C, 1]
    wft = wft_ref[...]                                        # [C, 1]
    bf = bf_ref[0, 0]                                         # scalar (SMEM)

    # ---- first conv (K=4): off the MXU -> VPU broadcast multiply-adds ----
    h = (w0[:, 0:1] * x[0:1, :]
         + w0[:, 1:2] * x[1:2, :]
         + w0[:, 2:3] * x[2:3, :]
         + w0[:, 3:4] * x[3:4, :]
         + b0)                                                # [C, L]

    # ---- resnet blocks: well-shaped CxC matmuls over L lanes -> MXU ----
    for d in range(depth):
        t = jnp.dot(wres_ref[d, 0], h, preferred_element_type=jnp.float32)
        t = jnp.maximum(t + bres_ref[d, 0], 0.0)
        t = jnp.dot(wres_ref[d, 1], t, preferred_element_type=jnp.float32)
        t = t + bres_ref[d, 1]
        h = jnp.maximum(h + t, 0.0)

    # ---- final conv (M=1): off the MXU -> VPU mul + sublane (XLU) reduce ----
    logit = jnp.sum(wft * h, axis=0, keepdims=True) + bf      # [1, L]
    logits_ref[...] = logit                                   # lane-dense store

    # ---- weight = relu(tanh(logits))  (tanh -> EUP slot) ----
    w = jnp.maximum(jnp.tanh(logit), 0.0)                     # [1, L]

    # ---- monomials X [9, L], full-sublane-width construction ----
    #   X = [x2,x2,x2, x3,x3,x3, 1,1,1] * [x0,x1,1, x0,x1,1, x0,x1,1]
    ones_row = jnp.ones((1, L), jnp.float32)
    base = jnp.concatenate([x[0:2, :], ones_row], axis=0)     # [3, L]
    q = jnp.concatenate([base, base, base], axis=0)           # [9, L]
    p = jnp.concatenate([jnp.broadcast_to(x[2:3, :], (3, L)),
                         jnp.broadcast_to(x[3:4, :], (3, L)),
                         jnp.ones((3, L), jnp.float32)], axis=0)   # [9, L]
    X = p * q                                                 # [9, L]
    wX = w * X                                                # [9, L]

    # ---- per-batch 9x9 Grams: transpose wX once, then standard matmuls ----
    wxt = wX.T                                                # [L, 9]
    grams = []
    for b in range(block_b):
        s = b * n_per_batch
        grams.append(
            jnp.dot(X[:, s:s + n_per_batch], wxt[s:s + n_per_batch, :],
                    preferred_element_type=jnp.float32))      # [9, 9]
    xwx_ref[...] = jnp.stack(grams, axis=0)                   # one store/step


def lgr_forward(x_in, params, *, depth, block_batch=None, interpret=False):
    """x_in: PyTorch-layout [B, 4, 1, N] float32. Returns dict of preds."""
    B, C4, one, N = x_in.shape
    assert C4 == 4 and one == 1
    C = params["w0"].shape[0]

    # Single grid step by default: v5e/v6e are single-TC and at small sizes a
    # split only adds per-step overhead on v7x too.
    Bb = B if block_batch is None else block_batch
    assert B % Bb == 0, "batch must be divisible by the batch block"

    # glue: fold batch into the lane axis -> [4, B*N] (batch-major lanes).
    x_4l = jnp.transpose(x_in[:, :, 0, :], (1, 0, 2)).reshape(4, B * N)
    wft = params["wf"].T                                      # [C, 1]

    kernel = functools.partial(_lgr_kernel, depth=depth, block_b=Bb,
                               n_per_batch=N)

    l_blk = Bb * N
    grid_spec = pltpu.PrefetchScalarGridSpec(
        num_scalar_prefetch=0,
        grid=(B // Bb,),
        in_specs=[
            pl.BlockSpec((4, l_blk), lambda i: (0, i)),              # x
            pl.BlockSpec((C, 4), lambda i: (0, 0)),                  # w0 [Cout,Cin]
            pl.BlockSpec((C, 1), lambda i: (0, 0)),                  # b0
            pl.BlockSpec((depth, 2, C, C), lambda i: (0, 0, 0, 0)),  # wres
            pl.BlockSpec((depth, 2, C, 1), lambda i: (0, 0, 0, 0)),  # bres
            pl.BlockSpec((C, 1), lambda i: (0, 0)),                  # wf^T
            pl.BlockSpec(memory_space=pltpu.MemorySpace.SMEM),       # bf scalar
        ],
        out_specs=[
            pl.BlockSpec((1, l_blk), lambda i: (0, i)),              # logits
            pl.BlockSpec((Bb, 9, 9), lambda i: (i, 0, 0)),           # XwX
        ],
    )

    logits2, xwx = pl.pallas_call(
        kernel,
        grid_spec=grid_spec,
        out_shape=(
            jax.ShapeDtypeStruct((1, B * N), jnp.float32),
            jax.ShapeDtypeStruct((B, 9, 9), jnp.float32),
        ),
        compiler_params=pltpu.CompilerParams(
            dimension_semantics=("arbitrary",),
            vmem_limit_bytes=32 * 1024 * 1024),
        interpret=interpret,
    )(x_4l, params["w0"], params["b0"], params["wres"], params["bres"],
      wft, params["bf"])

    logits = logits2.reshape(B, N)               # x.view(batch_size, n_cor)

    # essential: torch.rand(...)/norm -- deterministic JAX RNG stand-in (glue).
    v = jax.random.uniform(jax.random.PRNGKey(42), (B, 9), dtype=jnp.float32)
    essential = v / jnp.linalg.norm(v, axis=1, keepdims=True)

    return {"logits": logits, "essential": essential, "XwX": xwx}


def lgr_reference(x_in, params, *, depth):
    """Pure-JAX reference with identical math, for correctness checking."""
    x = x_in[:, :, 0, :]                                          # [B, 4, N]
    h = jnp.einsum("cd,bdn->bcn", params["w0"], x) + params["b0"][None]
    for d in range(depth):
        t = jnp.einsum("cd,bdn->bcn", params["wres"][d, 0], h)
        t = jnp.maximum(t + params["bres"][d, 0][None], 0.0)
        t = jnp.einsum("cd,bdn->bcn", params["wres"][d, 1], t)
        t = t + params["bres"][d, 1][None]
        h = jnp.maximum(h + t, 0.0)
    logits = (jnp.einsum("cd,bdn->bcn", params["wf"], h) + params["bf"][None])[:, 0, :]
    w = jnp.maximum(jnp.tanh(logits), 0.0)                        # [B, N]
    x0, x1, x2, x3 = x[:, 0], x[:, 1], x[:, 2], x[:, 3]
    X = jnp.stack([x2 * x0, x2 * x1, x2, x3 * x0, x3 * x1, x3,
                   x0, x1, jnp.ones_like(x0)], axis=1)            # [B, 9, N]
    wX = w[:, None, :] * X
    xwx = jnp.einsum("bkn,bln->bkl", X, wX)
    return logits, xwx


def init_params(key, depth, net_channel):
    C = net_channel
    ks = jax.random.split(key, 6)
    scale = 0.1
    return {
        "w0": scale * jax.random.normal(ks[0], (C, 4), jnp.float32),
        "b0": scale * jax.random.normal(ks[1], (C, 1), jnp.float32),
        "wres": scale * jax.random.normal(ks[2], (depth, 2, C, C), jnp.float32),
        "bres": scale * jax.random.normal(ks[3], (depth, 2, C, 1), jnp.float32),
        "wf": scale * jax.random.normal(ks[4], (1, C), jnp.float32),
        "bf": scale * jax.random.normal(ks[5], (1, 1), jnp.float32),
    }


if __name__ == "__main__":
    B, N = 4, 256            # batch, num correspondences
    DEPTH, CHANNEL = 2, 32   # config.net_depth, config.net_channel

    key = jax.random.PRNGKey(0)
    k_x, k_p = jax.random.split(key)

    # x_in in the PyTorch layout expected by LGR.forward: [B, 4, 1, N]
    x_in = jax.random.normal(k_x, (B, 4, 1, N), jnp.float32)
    params = init_params(k_p, DEPTH, CHANNEL)

    preds = lgr_forward(x_in, params, depth=DEPTH)
    jax.block_until_ready(preds)

    # sanity check against pure-JAX reference
    ref_logits, ref_xwx = lgr_reference(x_in, params, depth=DEPTH)
    assert jnp.allclose(preds["logits"], ref_logits, atol=1e-4, rtol=1e-4)
    assert jnp.allclose(preds["XwX"], ref_xwx, atol=1e-3, rtol=1e-3)
    assert preds["logits"].shape == (B, N)
    assert preds["essential"].shape == (B, 9)

    print("KERNEL_OK")
</pallas_src>

<mosaic_0001>
module attributes {stable_mosaic.version = 11 : i64} {
  func.func @_lgr_kernel(%arg0: i32, %arg1: memref<4x1024xf32, #tpu.memory_space<vmem>>, %arg2: memref<32x4xf32, #tpu.memory_space<vmem>>, %arg3: memref<32x1xf32, #tpu.memory_space<vmem>>, %arg4: memref<2x2x32x32xf32, #tpu.memory_space<vmem>>, %arg5: memref<2x2x32x1xf32, #tpu.memory_space<vmem>>, %arg6: memref<32x1xf32, #tpu.memory_space<vmem>>, %arg7: memref<1x1xf32, #tpu.memory_space<smem>>, %arg8: memref<1x1024xf32, #tpu.memory_space<vmem>>, %arg9: memref<4x9x9xf32, #tpu.memory_space<vmem>>) attributes {dimension_semantics = [#tpu.dimension_semantics<arbitrary>], iteration_bounds = array<i64: 1>, scalar_prefetch = 0 : i64, scratch_operands = 0 : i64, tpu.core_type = #tpu.core_type<tc>, window_params = [{transform_indices = @transform_0, window_bounds = array<i64: 4, 1024>}, {pipeline_mode = #tpu.pipeline_mode<synchronous>, transform_indices = @transform_1, window_bounds = array<i64: 32, 4>}, {pipeline_mode = #tpu.pipeline_mode<synchronous>, transform_indices = @transform_2, window_bounds = array<i64: 32, 1>}, {pipeline_mode = #tpu.pipeline_mode<synchronous>, transform_indices = @transform_3, window_bounds = array<i64: 2, 2, 32, 32>}, {pipeline_mode = #tpu.pipeline_mode<synchronous>, transform_indices = @transform_4, window_bounds = array<i64: 2, 2, 32, 1>}, {pipeline_mode = #tpu.pipeline_mode<synchronous>, transform_indices = @transform_5, window_bounds = array<i64: 32, 1>}, {transform_indices = @transform_6, window_bounds = array<i64: 1, 1>}, {transform_indices = @transform_7, window_bounds = array<i64: 1, 1024>}, {transform_indices = @transform_8, window_bounds = array<i64: 4, 9, 9>}]} {
    %c0 = arith.constant 0 : index
    %c0_0 = arith.constant 0 : index
    %0 = vector.load %arg1[%c0, %c0_0] : memref<4x1024xf32, #tpu.memory_space<vmem>>, vector<4x1024xf32>
    %c0_1 = arith.constant 0 : index
    %c0_2 = arith.constant 0 : index
    %1 = vector.load %arg2[%c0_1, %c0_2] : memref<32x4xf32, #tpu.memory_space<vmem>>, vector<32x4xf32>
    %c0_3 = arith.constant 0 : index
    %c0_4 = arith.constant 0 : index
    %2 = vector.load %arg3[%c0_3, %c0_4] : memref<32x1xf32, #tpu.memory_space<vmem>>, vector<32x1xf32>
    %c0_5 = arith.constant 0 : index
    %c0_6 = arith.constant 0 : index
    %3 = vector.load %arg6[%c0_5, %c0_6] : memref<32x1xf32, #tpu.memory_space<vmem>>, vector<32x1xf32>
    %c0_7 = arith.constant 0 : index
    %c0_8 = arith.constant 0 : index
    %4 = memref.load %arg7[%c0_7, %c0_8] : memref<1x1xf32, #tpu.memory_space<smem>>
    %5 = vector.extract_strided_slice %1 {offsets = [0, 0], sizes = [32, 1], strides = [1, 1]} : vector<32x4xf32> to vector<32x1xf32>
    %6 = vector.extract_strided_slice %0 {offsets = [0, 0], sizes = [1, 1024], strides = [1, 1]} : vector<4x1024xf32> to vector<1x1024xf32>
    %7 = vector.broadcast %5 : vector<32x1xf32> to vector<32x1024xf32>
    %8 = vector.broadcast %6 : vector<1x1024xf32> to vector<32x1024xf32>
    %9 = arith.mulf %7, %8 : vector<32x1024xf32>
    %10 = vector.extract_strided_slice %1 {offsets = [0, 1], sizes = [32, 1], strides = [1, 1]} : vector<32x4xf32> to vector<32x1xf32>
    %11 = vector.extract_strided_slice %0 {offsets = [1, 0], sizes = [1, 1024], strides = [1, 1]} : vector<4x1024xf32> to vector<1x1024xf32>
    %12 = vector.broadcast %10 : vector<32x1xf32> to vector<32x1024xf32>
    %13 = vector.broadcast %11 : vector<1x1024xf32> to vector<32x1024xf32>
    %14 = arith.mulf %12, %13 : vector<32x1024xf32>
    %15 = arith.addf %9, %14 : vector<32x1024xf32>
    %16 = vector.extract_strided_slice %1 {offsets = [0, 2], sizes = [32, 1], strides = [1, 1]} : vector<32x4xf32> to vector<32x1xf32>
    %17 = vector.extract_strided_slice %0 {offsets = [2, 0], sizes = [1, 1024], strides = [1, 1]} : vector<4x1024xf32> to vector<1x1024xf32>
    %18 = vector.broadcast %16 : vector<32x1xf32> to vector<32x1024xf32>
    %19 = vector.broadcast %17 : vector<1x1024xf32> to vector<32x1024xf32>
    %20 = arith.mulf %18, %19 : vector<32x1024xf32>
    %21 = arith.addf %15, %20 : vector<32x1024xf32>
    %22 = vector.extract_strided_slice %1 {offsets = [0, 3], sizes = [32, 1], strides = [1, 1]} : vector<32x4xf32> to vector<32x1xf32>
    %23 = vector.extract_strided_slice %0 {offsets = [3, 0], sizes = [1, 1024], strides = [1, 1]} : vector<4x1024xf32> to vector<1x1024xf32>
    %24 = vector.broadcast %22 : vector<32x1xf32> to vector<32x1024xf32>
    %25 = vector.broadcast %23 : vector<1x1024xf32> to vector<32x1024xf32>
    %26 = arith.mulf %24, %25 : vector<32x1024xf32>
    %27 = arith.addf %21, %26 : vector<32x1024xf32>
    %28 = vector.broadcast %2 : vector<32x1xf32> to vector<32x1024xf32>
    %29 = arith.addf %27, %28 : vector<32x1024xf32>
    %c0_9 = arith.constant 0 : index
    %c0_10 = arith.constant 0 : index
    %c0_11 = arith.constant 0 : index
    %c0_12 = arith.constant 0 : index
    %30 = vector.load %arg4[%c0_9, %c0_10, %c0_11, %c0_12] : memref<2x2x32x32xf32, #tpu.memory_space<vmem>>, vector<1x1x32x32xf32>
    %31 = vector.shape_cast %30 : vector<1x1x32x32xf32> to vector<32x32xf32>
    %cst = arith.constant dense<0.000000e+00> : vector<32x1024xf32>
    %32 = tpu.matmul %31, %29, %cst {dimension_numbers = #tpu.dot_dimension_numbers<[1], [0], [0], [1], [0, 0, 1, 1], [], []>} : vector<32x32xf32>, vector<32x1024xf32>, vector<32x1024xf32> -> vector<32x1024xf32>
    %c0_13 = arith.constant 0 : index
    %c0_14 = arith.constant 0 : index
    %c0_15 = arith.constant 0 : index
    %c0_16 = arith.constant 0 : index
    %33 = vector.load %arg5[%c0_13, %c0_14, %c0_15, %c0_16] : memref<2x2x32x1xf32, #tpu.memory_space<vmem>>, vector<1x1x32x1xf32>
    %34 = vector.shape_cast %33 : vector<1x1x32x1xf32> to vector<32x1xf32>
    %35 = vector.broadcast %34 : vector<32x1xf32> to vector<32x1024xf32>
    %36 = arith.addf %32, %35 : vector<32x1024xf32>
    %cst_17 = arith.constant 0.000000e+00 : f32
    %37 = vector.broadcast %cst_17 : f32 to vector<32x1024xf32>
    %38 = arith.maximumf %36, %37 : vector<32x1024xf32>
    %c0_18 = arith.constant 0 : index
    %c1 = arith.constant 1 : index
    %c0_19 = arith.constant 0 : index
    %c0_20 = arith.constant 0 : index
    %39 = vector.load %arg4[%c0_18, %c1, %c0_19, %c0_20] : memref<2x2x32x32xf32, #tpu.memory_space<vmem>>, vector<1x1x32x32xf32>
    %40 = vector.shape_cast %39 : vector<1x1x32x32xf32> to vector<32x32xf32>
    %cst_21 = arith.constant dense<0.000000e+00> : vector<32x1024xf32>
    %41 = tpu.matmul %40, %38, %cst_21 {dimension_numbers = #tpu.dot_dimension_numbers<[1], [0], [0], [1], [0, 0, 1, 1], [], []>} : vector<32x32xf32>, vector<32x1024xf32>, vector<32x1024xf32> -> vector<32x1024xf32>
    %c0_22 = arith.constant 0 : index
    %c1_23 = arith.constant 1 : index
    %c0_24 = arith.constant 0 : index
    %c0_25 = arith.constant 0 : index
    %42 = vector.load %arg5[%c0_22, %c1_23, %c0_24, %c0_25] : memref<2x2x32x1xf32, #tpu.memory_space<vmem>>, vector<1x1x32x1xf32>
    %43 = vector.shape_cast %42 : vector<1x1x32x1xf32> to vector<32x1xf32>
    %44 = vector.broadcast %43 : vector<32x1xf32> to vector<32x1024xf32>
    %45 = arith.addf %41, %44 : vector<32x1024xf32>
    %46 = arith.addf %29, %45 : vector<32x1024xf32>
    %cst_26 = arith.constant 0.000000e+00 : f32
    %47 = vector.broadcast %cst_26 : f32 to vector<32x1024xf32>
    %48 = arith.maximumf %46, %47 : vector<32x1024xf32>
    %c1_27 = arith.constant 1 : index
    %c0_28 = arith.constant 0 : index
    %c0_29 = arith.constant 0 : index
    %c0_30 = arith.constant 0 : index
    %49 = vector.load %arg4[%c1_27, %c0_28, %c0_29, %c0_30] : memref<2x2x32x32xf32, #tpu.memory_space<vmem>>, vector<1x1x32x32xf32>
    %50 = vector.shape_cast %49 : vector<1x1x32x32xf32> to vector<32x32xf32>
    %cst_31 = arith.constant dense<0.000000e+00> : vector<32x1024xf32>
    %51 = tpu.matmul %50, %48, %cst_31 {dimension_numbers = #tpu.dot_dimension_numbers<[1], [0], [0], [1], [0, 0, 1, 1], [], []>} : vector<32x32xf32>, vector<32x1024xf32>, vector<32x1024xf32> -> vector<32x1024xf32>
    %c1_32 = arith.constant 1 : index
    %c0_33 = arith.constant 0 : index
    %c0_34 = arith.constant 0 : index
    %c0_35 = arith.constant 0 : index
    %52 = vector.load %arg5[%c1_32, %c0_33, %c0_34, %c0_35] : memref<2x2x32x1xf32, #tpu.memory_space<vmem>>, vector<1x1x32x1xf32>
    %53 = vector.shape_cast %52 : vector<1x1x32x1xf32> to vector<32x1xf32>
    %54 = vector.broadcast %53 : vector<32x1xf32> to vector<32x1024xf32>
    %55 = arith.addf %51, %54 : vector<32x1024xf32>
    %cst_36 = arith.constant 0.000000e+00 : f32
    %56 = vector.broadcast %cst_36 : f32 to vector<32x1024xf32>
    %57 = arith.maximumf %55, %56 : vector<32x1024xf32>
    %c1_37 = arith.constant 1 : index
    %c1_38 = arith.constant 1 : index
    %c0_39 = arith.constant 0 : index
    %c0_40 = arith.constant 0 : index
    %58 = vector.load %arg4[%c1_37, %c1_38, %c0_39, %c0_40] : memref<2x2x32x32xf32, #tpu.memory_space<vmem>>, vector<1x1x32x32xf32>
    %59 = vector.shape_cast %58 : vector<1x1x32x32xf32> to vector<32x32xf32>
    %cst_41 = arith.constant dense<0.000000e+00> : vector<32x1024xf32>
    %60 = tpu.matmul %59, %57, %cst_41 {dimension_numbers = #tpu.dot_dimension_numbers<[1], [0], [0], [1], [0, 0, 1, 1], [], []>} : vector<32x32xf32>, vector<32x1024xf32>, vector<32x1024xf32> -> vector<32x1024xf32>
    %c1_42 = arith.constant 1 : index
    %c1_43 = arith.constant 1 : index
    %c0_44 = arith.constant 0 : index
    %c0_45 = arith.constant 0 : index
    %61 = vector.load %arg5[%c1_42, %c1_43, %c0_44, %c0_45] : memref<2x2x32x1xf32, #tpu.memory_space<vmem>>, vector<1x1x32x1xf32>
    %62 = vector.shape_cast %61 : vector<1x1x32x1xf32> to vector<32x1xf32>
    %63 = vector.broadcast %62 : vector<32x1xf32> to vector<32x1024xf32>
    %64 = arith.addf %60, %63 : vector<32x1024xf32>
    %65 = arith.addf %48, %64 : vector<32x1024xf32>
    %cst_46 = arith.constant 0.000000e+00 : f32
    %66 = vector.broadcast %cst_46 : f32 to vector<32x1024xf32>
    %67 = arith.maximumf %65, %66 : vector<32x1024xf32>
    %68 = vector.broadcast %3 : vector<32x1xf32> to vector<32x1024xf32>
    %69 = arith.mulf %68, %67 : vector<32x1024xf32>
    %cst_47 = arith.constant dense<0.000000e+00> : vector<1024xf32>
    %70 = vector.multi_reduction <add>, %69, %cst_47 [0] : vector<32x1024xf32> to vector<1024xf32>
    %71 = vector.shape_cast %70 : vector<1024xf32> to vector<1x1024xf32>
    %72 = vector.broadcast %4 : f32 to vector<1x1024xf32>
    %73 = arith.addf %71, %72 : vector<1x1024xf32>
    %c0_48 = arith.constant 0 : index
    %c0_49 = arith.constant 0 : index
    %74 = vector.load %arg8[%c0_48, %c0_49] : memref<1x1024xf32, #tpu.memory_space<vmem>>, vector<1x1024xf32>
    tpu.vector_store %arg8[%c0_48, %c0_49], %73 {strides = array<i32>} : memref<1x1024xf32, #tpu.memory_space<vmem>>, vector<1x1024xf32>,
    %75 = math.tanh %73 : vector<1x1024xf32>
    %cst_50 = arith.constant 0.000000e+00 : f32
    %76 = vector.broadcast %cst_50 : f32 to vector<1x1024xf32>
    %77 = arith.maximumf %75, %76 : vector<1x1024xf32>
    %cst_51 = arith.constant 1.000000e+00 : f32
    %78 = vector.broadcast %cst_51 : f32 to vector<1x1024xf32>
    %79 = vector.extract_strided_slice %0 {offsets = [0, 0], sizes = [2, 1024], strides = [1, 1]} : vector<4x1024xf32> to vector<2x1024xf32>
    %80 = tpu.concatenate %79, %78 in 0 : vector<2x1024xf32>, vector<1x1024xf32> -> vector<3x1024xf32>
    %81 = tpu.concatenate %80, %80, %80 in 0 : vector<3x1024xf32>, vector<3x1024xf32>, vector<3x1024xf32> -> vector<9x1024xf32>
    %82 = vector.extract_strided_slice %0 {offsets = [2, 0], sizes = [1, 1024], strides = [1, 1]} : vector<4x1024xf32> to vector<1x1024xf32>
    %83 = vector.shape_cast %82 : vector<1x1024xf32> to vector<1x1024xf32>
    %84 = vector.broadcast %83 : vector<1x1024xf32> to vector<3x1024xf32>
    %85 = vector.extract_strided_slice %0 {offsets = [3, 0], sizes = [1, 1024], strides = [1, 1]} : vector<4x1024xf32> to vector<1x1024xf32>
    %86 = vector.shape_cast %85 : vector<1x1024xf32> to vector<1x1024xf32>
    %87 = vector.broadcast %86 : vector<1x1024xf32> to vector<3x1024xf32>
    %cst_52 = arith.constant 1.000000e+00 : f32
    %88 = vector.broadcast %cst_52 : f32 to vector<3x1024xf32>
    %89 = tpu.concatenate %84, %87, %88 in 0 : vector<3x1024xf32>, vector<3x1024xf32>, vector<3x1024xf32> -> vector<9x1024xf32>
    %90 = arith.mulf %89, %81 : vector<9x1024xf32>
    %91 = vector.broadcast %77 : vector<1x1024xf32> to vector<9x1024xf32>
    %92 = arith.mulf %91, %90 : vector<9x1024xf32>
    %93 = tpu.transpose %92, [1, 0] : vector<9x1024xf32> -> vector<1024x9xf32>
    %94 = vector.extract_strided_slice %90 {offsets = [0, 0], sizes = [9, 256], strides = [1, 1]} : vector<9x1024xf32> to vector<9x256xf32>
    %95 = vector.extract_strided_slice %93 {offsets = [0, 0], sizes = [256, 9], strides = [1, 1]} : vector<1024x9xf32> to vector<256x9xf32>
    %cst_53 = arith.constant dense<0.000000e+00> : vector<9x9xf32>
    %96 = tpu.matmul %94, %95, %cst_53 {dimension_numbers = #tpu.dot_dimension_numbers<[1], [0], [0], [1], [0, 0, 1, 1], [], []>} : vector<9x256xf32>, vector<256x9xf32>, vector<9x9xf32> -> vector<9x9xf32>
    %97 = vector.extract_strided_slice %90 {offsets = [0, 256], sizes = [9, 256], strides = [1, 1]} : vector<9x1024xf32> to vector<9x256xf32>
    %98 = vector.extract_strided_slice %93 {offsets = [256, 0], sizes = [256, 9], strides = [1, 1]} : vector<1024x9xf32> to vector<256x9xf32>
    %cst_54 = arith.constant dense<0.000000e+00> : vector<9x9xf32>
    %99 = tpu.matmul %97, %98, %cst_54 {dimension_numbers = #tpu.dot_dimension_numbers<[1], [0], [0], [1], [0, 0, 1, 1], [], []>} : vector<9x256xf32>, vector<256x9xf32>, vector<9x9xf32> -> vector<9x9xf32>
    %100 = vector.extract_strided_slice %90 {offsets = [0, 512], sizes = [9, 256], strides = [1, 1]} : vector<9x1024xf32> to vector<9x256xf32>
    %101 = vector.extract_strided_slice %93 {offsets = [512, 0], sizes = [256, 9], strides = [1, 1]} : vector<1024x9xf32> to vector<256x9xf32>
    %cst_55 = arith.constant dense<0.000000e+00> : vector<9x9xf32>
    %102 = tpu.matmul %100, %101, %cst_55 {dimension_numbers = #tpu.dot_dimension_numbers<[1], [0], [0], [1], [0, 0, 1, 1], [], []>} : vector<9x256xf32>, vector<256x9xf32>, vector<9x9xf32> -> vector<9x9xf32>
    %103 = vector.extract_strided_slice %90 {offsets = [0, 768], sizes = [9, 256], strides = [1, 1]} : vector<9x1024xf32> to vector<9x256xf32>
    %104 = vector.extract_strided_slice %93 {offsets = [768, 0], sizes = [256, 9], strides = [1, 1]} : vector<1024x9xf32> to vector<256x9xf32>
    %cst_56 = arith.constant dense<0.000000e+00> : vector<9x9xf32>
    %105 = tpu.matmul %103, %104, %cst_56 {dimension_numbers = #tpu.dot_dimension_numbers<[1], [0], [0], [1], [0, 0, 1, 1], [], []>} : vector<9x256xf32>, vector<256x9xf32>, vector<9x9xf32> -> vector<9x9xf32>
    %106 = vector.shape_cast %96 : vector<9x9xf32> to vector<1x9x9xf32>
    %107 = vector.shape_cast %99 : vector<9x9xf32> to vector<1x9x9xf32>
    %108 = vector.shape_cast %102 : vector<9x9xf32> to vector<1x9x9xf32>
    %109 = vector.shape_cast %105 : vector<9x9xf32> to vector<1x9x9xf32>
    %110 = tpu.concatenate %106, %107, %108, %109 in 0 : vector<1x9x9xf32>, vector<1x9x9xf32>, vector<1x9x9xf32>, vector<1x9x9xf32> -> vector<4x9x9xf32>
    %c0_57 = arith.constant 0 : index
    %c0_58 = arith.constant 0 : index
    %c0_59 = arith.constant 0 : index
    %111 = vector.load %arg9[%c0_57, %c0_58, %c0_59] : memref<4x9x9xf32, #tpu.memory_space<vmem>>, vector<4x9x9xf32>
    tpu.vector_store %arg9[%c0_57, %c0_58, %c0_59], %110 {strides = array<i32>} : memref<4x9x9xf32, #tpu.memory_space<vmem>>, vector<4x9x9xf32>,
    return
  }
  func.func @transform_0(%arg0: i32) -> (i32, i32) {
    %c0_i32 = arith.constant 0 : i32
    %c0_i32_0 = arith.constant 0 : i32
    return %c0_i32, %arg0 : i32, i32
  }
  func.func @transform_1(%arg0: i32) -> (i32, i32) {
    %c0_i32 = arith.constant 0 : i32
    %c0_i32_0 = arith.constant 0 : i32
    %c0_i32_1 = arith.constant 0 : i32
    return %c0_i32, %c0_i32_0 : i32, i32
  }
  func.func @transform_2(%arg0: i32) -> (i32, i32) {
    %c0_i32 = arith.constant 0 : i32
    %c0_i32_0 = arith.constant 0 : i32
    %c0_i32_1 = arith.constant 0 : i32
    return %c0_i32, %c0_i32_0 : i32, i32
  }
  func.func @transform_3(%arg0: i32) -> (i32, i32, i32, i32) {
    %c0_i32 = arith.constant 0 : i32
    %c0_i32_0 = arith.constant 0 : i32
    %c0_i32_1 = arith.constant 0 : i32
    %c0_i32_2 = arith.constant 0 : i32
    %c0_i32_3 = arith.constant 0 : i32
    return %c0_i32, %c0_i32_0, %c0_i32_1, %c0_i32_2 : i32, i32, i32, i32
  }
  func.func @transform_4(%arg0: i32) -> (i32, i32, i32, i32) {
    %c0_i32 = arith.constant 0 : i32
    %c0_i32_0 = arith.constant 0 : i32
    %c0_i32_1 = arith.constant 0 : i32
    %c0_i32_2 = arith.constant 0 : i32
    %c0_i32_3 = arith.constant 0 : i32
    return %c0_i32, %c0_i32_0, %c0_i32_1, %c0_i32_2 : i32, i32, i32, i32
  }
  func.func @transform_5(%arg0: i32) -> (i32, i32) {
    %c0_i32 = arith.constant 0 : i32
    %c0_i32_0 = arith.constant 0 : i32
    %c0_i32_1 = arith.constant 0 : i32
    return %c0_i32, %c0_i32_0 : i32, i32
  }
  func.func @transform_6(%arg0: i32) -> (i32, i32) {
    %c0_i32 = arith.constant 0 : i32
    %c0_i32_0 = arith.constant 0 : i32
    %c0_i32_1 = arith.constant 0 : i32
    return %c0_i32, %c0_i32_0 : i32, i32
  }
  func.func @transform_7(%arg0: i32) -> (i32, i32) {
    %c0_i32 = arith.constant 0 : i32
    %c0_i32_0 = arith.constant 0 : i32
    return %c0_i32, %arg0 : i32, i32
  }
  func.func @transform_8(%arg0: i32) -> (i32, i32, i32) {
    %c0_i32 = arith.constant 0 : i32
    %c0_i32_0 = arith.constant 0 : i32
    %c0_i32_1 = arith.constant 0 : i32
    return %arg0, %c0_i32, %c0_i32_0 : i32, i32, i32
  }
}

</mosaic_0001>

<llo_original>
// kernel: tpu_custom_call.1
$region0: #{tpu_custom_call.1}
  #allocation0 [shape = 'u32[]', space=smem, size = 0x4, offset = 0x4, fixed_abs, tag = 'smem constant byte address 0x4 - core index']
  #allocation1 [shape = 'u32[144,128]{1,0:T(1,128)}', space=vmem, size = 0x12000, scoped, tag = 'internal scratch']
  #allocation2 [shape = 'f32[1,1]{1,0:T(1,128)S(6)}', space=smem, size = 0x200, scoped, tag = 'scoped memory for tpu_custom_call.1']
  %s0 = inlined_call_operand.vmem [shape: f32[4,1024], index: 0, kind: input, shape index: {}]
  %s1 = inlined_call_operand.vmem [shape: f32[32,4], index: 1, kind: input, shape index: {}]
  %s2 = inlined_call_operand.vmem [shape: f32[32,1], index: 2, kind: input, shape index: {}]
  %s3 = inlined_call_operand.vmem [shape: f32[2,2,32,32], index: 3, kind: input, shape index: {}]
  %s4 = inlined_call_operand.vmem [shape: f32[2,2,32,1], index: 4, kind: input, shape index: {}]
  %s5 = inlined_call_operand.vmem [shape: f32[32,1], index: 5, kind: input, shape index: {}]
  %s6 = inlined_call_operand.<no memory space> [shape: f32[1,1], index: 6, kind: input, shape index: {}]
  %s7 = inlined_call_operand.hbm [shape: f32[1,1024], index: 7, kind: output, shape index: {0}]
  %s8 = inlined_call_operand.vmem [shape: f32[4,9,9], index: 8, kind: output, shape index: {1}]
  %9 = xla_tuple %s7, %s8
  %s10 = sld [smem:[#allocation0]]
  $region46: #{tpu_custom_call.1} parent=0
    _
  %s12 = ssub.s32 1, %s10
  %s13 = scalar_select 0, %s12, %s10
  %14 = sst [smem:[#allocation2]] %s6
  $region1: #{tpu_custom_call.1} parent=0
    #allocation3 [shape = 'u8[4096]{0}', space=vmem, size = 0x1000, scoped, tag = 'output window, operand 0, single buffered']
    #allocation4 [shape = 's32[1]{0}', space=sflag, size = 0x4, scoped, tag = 'scoped memory for tpu_custom_call.1']
    %15 = vsyncpa [#allocation4], 0
    // Predicated region
    $region2: #{tpu_custom_call.1} parent=1 // pred_check
      _
    $region3: #{tpu_custom_call.1} parent=1 // pred_check_branch
      %17 = sbr.rel (0) target = $region5
    $region4: #{tpu_custom_call.1} parent=1 // pred_region
      _
    $region5: #{tpu_custom_call.1} parent=1 // pred_fallthru
      _
    // Predicated region
    $region6: #{tpu_custom_call.1} parent=1 // pred_check
      _
    $region7: #{tpu_custom_call.1} parent=1 // pred_check_branch
      %19 = sbr.rel (0) target = $region9
    $region8: #{tpu_custom_call.1} parent=1 // pred_region
      _
    $region9: #{tpu_custom_call.1} parent=1 // pred_fallthru
      _
    // Predicated region
    $region10: #{tpu_custom_call.1} parent=1 // pred_check
      _
    $region11: #{tpu_custom_call.1} parent=1 // pred_check_branch
      %21 = sbr.rel (0) target = $region13
    $region12: #{tpu_custom_call.1} parent=1 // pred_region
      _
    $region13: #{tpu_custom_call.1} parent=1 // pred_fallthru
      _
    // Predicated region
    $region14: #{tpu_custom_call.1} parent=1 // pred_check
      _
    $region15: #{tpu_custom_call.1} parent=1 // pred_check_branch
      %23 = sbr.rel (0) target = $region17
    $region16: #{tpu_custom_call.1} parent=1 // pred_region
      _
    $region17: #{tpu_custom_call.1} parent=1 // pred_fallthru
      _
    // Predicated region
    $region18: #{tpu_custom_call.1} parent=1 // pred_check
      _
    $region19: #{tpu_custom_call.1} parent=1 // pred_check_branch
      %25 = sbr.rel (0) target = $region21
    $region20: #{tpu_custom_call.1} parent=1 // pred_region
      _
    $region21: #{tpu_custom_call.1} parent=1 // pred_fallthru
      _
    // Predicated region
    $region22: #{tpu_custom_call.1} parent=1 // pred_check
      _
    $region23: #{tpu_custom_call.1} parent=1 // pred_check_branch
      %27 = sbr.rel (0) target = $region25
    $region24: #{tpu_custom_call.1} parent=1 // pred_region
      _
    $region25: #{tpu_custom_call.1} parent=1 // pred_fallthru
      _
    // Predicated region
    $region26: #{tpu_custom_call.1} parent=1 // pred_check
      _
    $region27: #{tpu_custom_call.1} parent=1 // pred_check_branch
      %29 = sbr.rel (0) target = $region29
    $region28: #{tpu_custom_call.1} parent=1 // pred_region
      _
    $region29: #{tpu_custom_call.1} parent=1 // pred_fallthru
      _
    %v30 = vld [vmem:[%s0] sm:$0xff]
    %v31 = vld [vmem:[%s0 + $0x8] sm:$0xff]
    %v32 = vld [vmem:[%s0 + $0x10] sm:$0xff]
    %v33 = vld [vmem:[%s0 + $0x18] sm:$0xff]
    %v34 = vld [vmem:[%s1] sm:$0xff]
    %v35 = vld [vmem:[%s1 + $0x8] sm:$0xff]
    %v36 = vld [vmem:[%s1 + $0x10] sm:$0xff]
    %v37 = vld [vmem:[%s1 + $0x18] sm:$0xff]
    %v38 = vld [vmem:[%s2] sm:$0xff]
    %v39 = vld [vmem:[%s2 + $0x8] sm:$0xff]
    %v40 = vld [vmem:[%s2 + $0x10] sm:$0xff]
    %v41 = vld [vmem:[%s2 + $0x18] sm:$0xff]
    %v42 = vld [vmem:[%s5] sm:$0xff]
    %v43 = vld [vmem:[%s5 + $0x8] sm:$0xff]
    %v44 = vld [vmem:[%s5 + $0x10] sm:$0xff]
    %v45 = vld [vmem:[%s5 + $0x18] sm:$0xff]
    %s46 = sld [smem:[#allocation2]]
    %48 = vset.pattern.permute.xlu0 0
    %49 = vperm.xlu0 %48, %v34
    %v50 = vpop.permute.xlu0 %49
    %53 = vset.pattern.permute.xlu0 0
    %54 = vperm.xlu0 %53, %v35
    %v55 = vpop.permute.xlu0 %54
    %58 = vset.pattern.permute.xlu0 0
    %59 = vperm.xlu0 %58, %v36
    %v60 = vpop.permute.xlu0 %59
    %63 = vset.pattern.permute.xlu0 0
    %64 = vperm.xlu0 %63, %v37
    %v65 = vpop.permute.xlu0 %64
    %v71 = vlaneseq
    %v72 = vshrl.u32 %v71, 7
    %v73 = vsub.s32 0, %v72
    %v74 = vrot.slane %v30, %v73
    %v75 = vlaneseq
    %v76 = vshrl.u32 %v75, 7
    %v77 = vsub.s32 4, %v76
    %v78 = vrot.slane %v30, %v77
    %v79 = vlaneseq
    %v80 = vshrl.u32 %v79, 7
    %v81 = vsub.s32 0, %v80
    %v82 = vrot.slane %v31, %v81
    %v83 = vlaneseq
    %v84 = vshrl.u32 %v83, 7
    %v85 = vsub.s32 4, %v84
    %v86 = vrot.slane %v31, %v85
    %v87 = vlaneseq
    %v88 = vshrl.u32 %v87, 7
    %v89 = vsub.s32 0, %v88
    %v90 = vrot.slane %v32, %v89
    %v91 = vlaneseq
    %v92 = vshrl.u32 %v91, 7
    %v93 = vsub.s32 4, %v92
    %v94 = vrot.slane %v32, %v93
    %v95 = vlaneseq
    %v96 = vshrl.u32 %v95, 7
    %v97 = vsub.s32 0, %v96
    %v98 = vrot.slane %v33, %v97
    %v99 = vlaneseq
    %v100 = vshrl.u32 %v99, 7
    %v101 = vsub.s32 4, %v100
    %v102 = vrot.slane %v33, %v101
    %v111 = vlaneseq
    %v112 = vshrl.u32 %v111, 7
    %v113 = vsub.s32 0, %v112
    %v114 = vrot.slane %v74, %v113
    %v115 = vlaneseq
    %v116 = vshrl.u32 %v115, 7
    %v117 = vsub.s32 0, %v116
    %v118 = vrot.slane %v78, %v117
    %v119 = vlaneseq
    %v120 = vshrl.u32 %v119, 7
    %v121 = vsub.s32 0, %v120
    %v122 = vrot.slane %v82, %v121
    %v123 = vlaneseq
    %v124 = vshrl.u32 %v123, 7
    %v125 = vsub.s32 0, %v124
    %v126 = vrot.slane %v86, %v125
    %v127 = vlaneseq
    %v128 = vshrl.u32 %v127, 7
    %v129 = vsub.s32 0, %v128
    %v130 = vrot.slane %v90, %v129
    %v131 = vlaneseq
    %v132 = vshrl.u32 %v131, 7
    %v133 = vsub.s32 0, %v132
    %v134 = vrot.slane %v94, %v133
    %v135 = vlaneseq
    %v136 = vshrl.u32 %v135, 7
    %v137 = vsub.s32 0, %v136
    %v138 = vrot.slane %v98, %v137
    %v139 = vlaneseq
    %v140 = vshrl.u32 %v139, 7
    %v141 = vsub.s32 0, %v140
    %v142 = vrot.slane %v102, %v141
    %v143 = vmul.f32 %v50, %v114
    %v144 = vmul.f32 %v50, %v118
    %v145 = vmul.f32 %v50, %v122
    %v146 = vmul.f32 %v50, %v126
    %v147 = vmul.f32 %v50, %v130
    %v148 = vmul.f32 %v50, %v134
    %v149 = vmul.f32 %v50, %v138
    %v150 = vmul.f32 %v50, %v142
    %v151 = vmul.f32 %v55, %v114
    %v152 = vmul.f32 %v55, %v118
    %v153 = vmul.f32 %v55, %v122
    %v154 = vmul.f32 %v55, %v126
    %v155 = vmul.f32 %v55, %v130
    %v156 = vmul.f32 %v55, %v134
    %v157 = vmul.f32 %v55, %v138
    %v158 = vmul.f32 %v55, %v142
    %v159 = vmul.f32 %v60, %v114
    %v160 = vmul.f32 %v60, %v118
    %v161 = vmul.f32 %v60, %v122
    %v162 = vmul.f32 %v60, %v126
    %v163 = vmul.f32 %v60, %v130
    %v164 = vmul.f32 %v60, %v134
    %v165 = vmul.f32 %v60, %v138
    %v166 = vmul.f32 %v60, %v142
    %v167 = vmul.f32 %v65, %v114
    %v168 = vmul.f32 %v65, %v118
    %v169 = vmul.f32 %v65, %v122
    %v170 = vmul.f32 %v65, %v126
    %v171 = vmul.f32 %v65, %v130
    %v172 = vmul.f32 %v65, %v134
    %v173 = vmul.f32 %v65, %v138
    %v174 = vmul.f32 %v65, %v142
    %175 = vset.pattern.permute.xlu0 1
    %176 = vperm.xlu0 %175, %v34
    %v177 = vpop.permute.xlu0 %176
    %179 = vset.pattern.permute.xlu0 1
    %180 = vperm.xlu0 %179, %v35
    %v181 = vpop.permute.xlu0 %180
    %183 = vset.pattern.permute.xlu0 1
    %184 = vperm.xlu0 %183, %v36
    %v185 = vpop.permute.xlu0 %184
    %187 = vset.pattern.permute.xlu0 1
    %188 = vperm.xlu0 %187, %v37
    %v189 = vpop.permute.xlu0 %188
    %v191 = vlaneseq
    %v192 = vshrl.u32 %v191, 7
    %v193 = vsub.s32 1, %v192
    %v194 = vrot.slane %v30, %v193
    %v195 = vlaneseq
    %v196 = vshrl.u32 %v195, 7
    %v197 = vsub.s32 5, %v196
    %v198 = vrot.slane %v30, %v197
    %v199 = vlaneseq
    %v200 = vshrl.u32 %v199, 7
    %v201 = vsub.s32 1, %v200
    %v202 = vrot.slane %v31, %v201
    %v203 = vlaneseq
    %v204 = vshrl.u32 %v203, 7
    %v205 = vsub.s32 5, %v204
    %v206 = vrot.slane %v31, %v205
    %v207 = vlaneseq
    %v208 = vshrl.u32 %v207, 7
    %v209 = vsub.s32 1, %v208
    %v210 = vrot.slane %v32, %v209
    %v211 = vlaneseq
    %v212 = vshrl.u32 %v211, 7
    %v213 = vsub.s32 5, %v212
    %v214 = vrot.slane %v32, %v213
    %v215 = vlaneseq
    %v216 = vshrl.u32 %v215, 7
    %v217 = vsub.s32 1, %v216
    %v218 = vrot.slane %v33, %v217
    %v219 = vlaneseq
    %v220 = vshrl.u32 %v219, 7
    %v221 = vsub.s32 5, %v220
    %v222 = vrot.slane %v33, %v221
    %v231 = vlaneseq
    %v232 = vshrl.u32 %v231, 7
    %v233 = vsub.s32 1, %v232
    %v234 = vrot.slane %v194, %v233
    %v235 = vlaneseq
    %v236 = vshrl.u32 %v235, 7
    %v237 = vsub.s32 1, %v236
    %v238 = vrot.slane %v198, %v237
    %v239 = vlaneseq
    %v240 = vshrl.u32 %v239, 7
    %v241 = vsub.s32 1, %v240
    %v242 = vrot.slane %v202, %v241
    %v243 = vlaneseq
    %v244 = vshrl.u32 %v243, 7
    %v245 = vsub.s32 1, %v244
    %v246 = vrot.slane %v206, %v245
    %v247 = vlaneseq
    %v248 = vshrl.u32 %v247, 7
    %v249 = vsub.s32 1, %v248
    %v250 = vrot.slane %v210, %v249
    %v251 = vlaneseq
    %v252 = vshrl.u32 %v251, 7
    %v253 = vsub.s32 1, %v252
    %v254 = vrot.slane %v214, %v253
    %v255 = vlaneseq
    %v256 = vshrl.u32 %v255, 7
    %v257 = vsub.s32 1, %v256
    %v258 = vrot.slane %v218, %v257
    %v259 = vlaneseq
    %v260 = vshrl.u32 %v259, 7
    %v261 = vsub.s32 1, %v260
    %v262 = vrot.slane %v222, %v261
    %v263 = vmul.f32 %v177, %v234
    %v264 = vmul.f32 %v177, %v238
    %v265 = vmul.f32 %v177, %v242
    %v266 = vmul.f32 %v177, %v246
    %v267 = vmul.f32 %v177, %v250
    %v268 = vmul.f32 %v177, %v254
    %v269 = vmul.f32 %v177, %v258
    %v270 = vmul.f32 %v177, %v262
    %v271 = vmul.f32 %v181, %v234
    %v272 = vmul.f32 %v181, %v238
    %v273 = vmul.f32 %v181, %v242
    %v274 = vmul.f32 %v181, %v246
    %v275 = vmul.f32 %v181, %v250
    %v276 = vmul.f32 %v181, %v254
    %v277 = vmul.f32 %v181, %v258
    %v278 = vmul.f32 %v181, %v262
    %v279 = vmul.f32 %v185, %v234
    %v280 = vmul.f32 %v185, %v238
    %v281 = vmul.f32 %v185, %v242
    %v282 = vmul.f32 %v185, %v246
    %v283 = vmul.f32 %v185, %v250
    %v284 = vmul.f32 %v185, %v254
    %v285 = vmul.f32 %v185, %v258
    %v286 = vmul.f32 %v185, %v262
    %v287 = vmul.f32 %v189, %v234
    %v288 = vmul.f32 %v189, %v238
    %v289 = vmul.f32 %v189, %v242
    %v290 = vmul.f32 %v189, %v246
    %v291 = vmul.f32 %v189, %v250
    %v292 = vmul.f32 %v189, %v254
    %v293 = vmul.f32 %v189, %v258
    %v294 = vmul.f32 %v189, %v262
    %v295 = vadd.f32 %v143, %v263
    %v296 = vadd.f32 %v144, %v264
    %v297 = vadd.f32 %v145, %v265
    %v298 = vadd.f32 %v146, %v266
    %v299 = vadd.f32 %v147, %v267
    %v300 = vadd.f32 %v148, %v268
    %v301 = vadd.f32 %v149, %v269
    %v302 = vadd.f32 %v150, %v270
    %v303 = vadd.f32 %v151, %v271
    %v304 = vadd.f32 %v152, %v272
    %v305 = vadd.f32 %v153, %v273
    %v306 = vadd.f32 %v154, %v274
    %v307 = vadd.f32 %v155, %v275
    %v308 = vadd.f32 %v156, %v276
    %v309 = vadd.f32 %v157, %v277
    %v310 = vadd.f32 %v158, %v278
    %v311 = vadd.f32 %v159, %v279
    %v312 = vadd.f32 %v160, %v280
    %v313 = vadd.f32 %v161, %v281
    %v314 = vadd.f32 %v162, %v282
    %v315 = vadd.f32 %v163, %v283
    %v316 = vadd.f32 %v164, %v284
    %v317 = vadd.f32 %v165, %v285
    %v318 = vadd.f32 %v166, %v286
    %v319 = vadd.f32 %v167, %v287
    %v320 = vadd.f32 %v168, %v288
    %v321 = vadd.f32 %v169, %v289
    %v322 = vadd.f32 %v170, %v290
    %v323 = vadd.f32 %v171, %v291
    %v324 = vadd.f32 %v172, %v292
    %v325 = vadd.f32 %v173, %v293
    %v326 = vadd.f32 %v174, %v294
    %327 = vset.pattern.permute.xlu0 2
    %328 = vperm.xlu0 %327, %v34
    %v329 = vpop.permute.xlu0 %328
    %331 = vset.pattern.permute.xlu0 2
    %332 = vperm.xlu0 %331, %v35
    %v333 = vpop.permute.xlu0 %332
    %335 = vset.pattern.permute.xlu0 2
    %336 = vperm.xlu0 %335, %v36
    %v337 = vpop.permute.xlu0 %336
    %339 = vset.pattern.permute.xlu0 2
    %340 = vperm.xlu0 %339, %v37
    %v341 = vpop.permute.xlu0 %340
    %v343 = vlaneseq
    %v344 = vshrl.u32 %v343, 7
    %v345 = vsub.s32 2, %v344
    %v346 = vrot.slane %v30, %v345
    %v347 = vlaneseq
    %v348 = vshrl.u32 %v347, 7
    %v349 = vsub.s32 6, %v348
    %v350 = vrot.slane %v30, %v349
    %v351 = vlaneseq
    %v352 = vshrl.u32 %v351, 7
    %v353 = vsub.s32 2, %v352
    %v354 = vrot.slane %v31, %v353
    %v355 = vlaneseq
    %v356 = vshrl.u32 %v355, 7
    %v357 = vsub.s32 6, %v356
    %v358 = vrot.slane %v31, %v357
    %v359 = vlaneseq
    %v360 = vshrl.u32 %v359, 7
    %v361 = vsub.s32 2, %v360
    %v362 = vrot.slane %v32, %v361
    %v363 = vlaneseq
    %v364 = vshrl.u32 %v363, 7
    %v365 = vsub.s32 6, %v364
    %v366 = vrot.slane %v32, %v365
    %v367 = vlaneseq
    %v368 = vshrl.u32 %v367, 7
    %v369 = vsub.s32 2, %v368
    %v370 = vrot.slane %v33, %v369
    %v371 = vlaneseq
    %v372 = vshrl.u32 %v371, 7
    %v373 = vsub.s32 6, %v372
    %v374 = vrot.slane %v33, %v373
    %v383 = vlaneseq
    %v384 = vshrl.u32 %v383, 7
    %v385 = vsub.s32 2, %v384
    %v386 = vrot.slane %v346, %v385
    %v387 = vlaneseq
    %v388 = vshrl.u32 %v387, 7
    %v389 = vsub.s32 2, %v388
    %v390 = vrot.slane %v350, %v389
    %v391 = vlaneseq
    %v392 = vshrl.u32 %v391, 7
    %v393 = vsub.s32 2, %v392
    %v394 = vrot.slane %v354, %v393
    %v395 = vlaneseq
    %v396 = vshrl.u32 %v395, 7
    %v397 = vsub.s32 2, %v396
    %v398 = vrot.slane %v358, %v397
    %v399 = vlaneseq
    %v400 = vshrl.u32 %v399, 7
    %v401 = vsub.s32 2, %v400
    %v402 = vrot.slane %v362, %v401
    %v403 = vlaneseq
    %v404 = vshrl.u32 %v403, 7
    %v405 = vsub.s32 2, %v404
    %v406 = vrot.slane %v366, %v405
    %v407 = vlaneseq
    %v408 = vshrl.u32 %v407, 7
    %v409 = vsub.s32 2, %v408
    %v410 = vrot.slane %v370, %v409
    %v411 = vlaneseq
    %v412 = vshrl.u32 %v411, 7
    %v413 = vsub.s32 2, %v412
    %v414 = vrot.slane %v374, %v413
    %v415 = vmul.f32 %v329, %v386
    %v416 = vmul.f32 %v329, %v390
    %v417 = vmul.f32 %v329, %v394
    %v418 = vmul.f32 %v329, %v398
    %v419 = vmul.f32 %v329, %v402
    %v420 = vmul.f32 %v329, %v406
    %v421 = vmul.f32 %v329, %v410
    %v422 = vmul.f32 %v329, %v414
    %v423 = vmul.f32 %v333, %v386
    %v424 = vmul.f32 %v333, %v390
    %v425 = vmul.f32 %v333, %v394
    %v426 = vmul.f32 %v333, %v398
    %v427 = vmul.f32 %v333, %v402
    %v428 = vmul.f32 %v333, %v406
    %v429 = vmul.f32 %v333, %v410
    %v430 = vmul.f32 %v333, %v414
    %v431 = vmul.f32 %v337, %v386
    %v432 = vmul.f32 %v337, %v390
    %v433 = vmul.f32 %v337, %v394
    %v434 = vmul.f32 %v337, %v398
    %v435 = vmul.f32 %v337, %v402
    %v436 = vmul.f32 %v337, %v406
    %v437 = vmul.f32 %v337, %v410
    %v438 = vmul.f32 %v337, %v414
    %v439 = vmul.f32 %v341, %v386
    %v440 = vmul.f32 %v341, %v390
    %v441 = vmul.f32 %v341, %v394
    %v442 = vmul.f32 %v341, %v398
    %v443 = vmul.f32 %v341, %v402
    %v444 = vmul.f32 %v341, %v406
    %v445 = vmul.f32 %v341, %v410
    %v446 = vmul.f32 %v341, %v414
    %v447 = vadd.f32 %v295, %v415
    %v448 = vadd.f32 %v296, %v416
    %v449 = vadd.f32 %v297, %v417
    %v450 = vadd.f32 %v298, %v418
    %v451 = vadd.f32 %v299, %v419
    %v452 = vadd.f32 %v300, %v420
    %v453 = vadd.f32 %v301, %v421
    %v454 = vadd.f32 %v302, %v422
    %v455 = vadd.f32 %v303, %v423
    %v456 = vadd.f32 %v304, %v424
    %v457 = vadd.f32 %v305, %v425
    %v458 = vadd.f32 %v306, %v426
    %v459 = vadd.f32 %v307, %v427
    %v460 = vadd.f32 %v308, %v428
    %v461 = vadd.f32 %v309, %v429
    %v462 = vadd.f32 %v310, %v430
    %v463 = vadd.f32 %v311, %v431
    %v464 = vadd.f32 %v312, %v432
    %v465 = vadd.f32 %v313, %v433
    %v466 = vadd.f32 %v314, %v434
    %v467 = vadd.f32 %v315, %v435
    %v468 = vadd.f32 %v316, %v436
    %v469 = vadd.f32 %v317, %v437
    %v470 = vadd.f32 %v318, %v438
    %v471 = vadd.f32 %v319, %v439
    %v472 = vadd.f32 %v320, %v440
    %v473 = vadd.f32 %v321, %v441
    %v474 = vadd.f32 %v322, %v442
    %v475 = vadd.f32 %v323, %v443
    %v476 = vadd.f32 %v324, %v444
    %v477 = vadd.f32 %v325, %v445
    %v478 = vadd.f32 %v326, %v446
    %479 = vset.pattern.permute.xlu0 3
    %480 = vperm.xlu0 %479, %v34
    %v481 = vpop.permute.xlu0 %480
    %483 = vset.pattern.permute.xlu0 3
    %484 = vperm.xlu0 %483, %v35
    %v485 = vpop.permute.xlu0 %484
    %487 = vset.pattern.permute.xlu0 3
    %488 = vperm.xlu0 %487, %v36
    %v489 = vpop.permute.xlu0 %488
    %491 = vset.pattern.permute.xlu0 3
    %492 = vperm.xlu0 %491, %v37
    %v493 = vpop.permute.xlu0 %492
    %v495 = vlaneseq
    %v496 = vshrl.u32 %v495, 7
    %v497 = vsub.s32 3, %v496
    %v498 = vrot.slane %v30, %v497
    %v499 = vlaneseq
    %v500 = vshrl.u32 %v499, 7
    %v501 = vsub.s32 7, %v500
    %v502 = vrot.slane %v30, %v501
    %v503 = vlaneseq
    %v504 = vshrl.u32 %v503, 7
    %v505 = vsub.s32 3, %v504
    %v506 = vrot.slane %v31, %v505
    %v507 = vlaneseq
    %v508 = vshrl.u32 %v507, 7
    %v509 = vsub.s32 7, %v508
    %v510 = vrot.slane %v31, %v509
    %v511 = vlaneseq
    %v512 = vshrl.u32 %v511, 7
    %v513 = vsub.s32 3, %v512
    %v514 = vrot.slane %v32, %v513
    %v515 = vlaneseq
    %v516 = vshrl.u32 %v515, 7
    %v517 = vsub.s32 7, %v516
    %v518 = vrot.slane %v32, %v517
    %v519 = vlaneseq
    %v520 = vshrl.u32 %v519, 7
    %v521 = vsub.s32 3, %v520
    %v522 = vrot.slane %v33, %v521
    %v523 = vlaneseq
    %v524 = vshrl.u32 %v523, 7
    %v525 = vsub.s32 7, %v524
    %v526 = vrot.slane %v33, %v525
    %v535 = vlaneseq
    %v536 = vshrl.u32 %v535, 7
    %v537 = vsub.s32 3, %v536
    %v538 = vrot.slane %v498, %v537
    %v539 = vlaneseq
    %v540 = vshrl.u32 %v539, 7
    %v541 = vsub.s32 3, %v540
    %v542 = vrot.slane %v502, %v541
    %v543 = vlaneseq
    %v544 = vshrl.u32 %v543, 7
    %v545 = vsub.s32 3, %v544
    %v546 = vrot.slane %v506, %v545
    %v547 = vlaneseq
    %v548 = vshrl.u32 %v547, 7
    %v549 = vsub.s32 3, %v548
    %v550 = vrot.slane %v510, %v549
    %v551 = vlaneseq
    %v552 = vshrl.u32 %v551, 7
    %v553 = vsub.s32 3, %v552
    %v554 = vrot.slane %v514, %v553
    %v555 = vlaneseq
    %v556 = vshrl.u32 %v555, 7
    %v557 = vsub.s32 3, %v556
    %v558 = vrot.slane %v518, %v557
    %v559 = vlaneseq
    %v560 = vshrl.u32 %v559, 7
    %v561 = vsub.s32 3, %v560
    %v562 = vrot.slane %v522, %v561
    %v563 = vlaneseq
    %v564 = vshrl.u32 %v563, 7
    %v565 = vsub.s32 3, %v564
    %v566 = vrot.slane %v526, %v565
    %v567 = vmul.f32 %v481, %v538
    %v568 = vmul.f32 %v481, %v542
    %v569 = vmul.f32 %v481, %v546
    %v570 = vmul.f32 %v481, %v550
    %v571 = vmul.f32 %v481, %v554
    %v572 = vmul.f32 %v481, %v558
    %v573 = vmul.f32 %v481, %v562
    %v574 = vmul.f32 %v481, %v566
    %v575 = vmul.f32 %v485, %v538
    %v576 = vmul.f32 %v485, %v542
    %v577 = vmul.f32 %v485, %v546
    %v578 = vmul.f32 %v485, %v550
    %v579 = vmul.f32 %v485, %v554
    %v580 = vmul.f32 %v485, %v558
    %v581 = vmul.f32 %v485, %v562
    %v582 = vmul.f32 %v485, %v566
    %v583 = vmul.f32 %v489, %v538
    %v584 = vmul.f32 %v489, %v542
    %v585 = vmul.f32 %v489, %v546
    %v586 = vmul.f32 %v489, %v550
    %v587 = vmul.f32 %v489, %v554
    %v588 = vmul.f32 %v489, %v558
    %v589 = vmul.f32 %v489, %v562
    %v590 = vmul.f32 %v489, %v566
    %v591 = vmul.f32 %v493, %v538
    %v592 = vmul.f32 %v493, %v542
    %v593 = vmul.f32 %v493, %v546
    %v594 = vmul.f32 %v493, %v550
    %v595 = vmul.f32 %v493, %v554
    %v596 = vmul.f32 %v493, %v558
    %v597 = vmul.f32 %v493, %v562
    %v598 = vmul.f32 %v493, %v566
    %v599 = vadd.f32 %v447, %v567
    %v600 = vadd.f32 %v448, %v568
    %v601 = vadd.f32 %v449, %v569
    %v602 = vadd.f32 %v450, %v570
    %v603 = vadd.f32 %v451, %v571
    %v604 = vadd.f32 %v452, %v572
    %v605 = vadd.f32 %v453, %v573
    %v606 = vadd.f32 %v454, %v574
    %v607 = vadd.f32 %v455, %v575
    %v608 = vadd.f32 %v456, %v576
    %v609 = vadd.f32 %v457, %v577
    %v610 = vadd.f32 %v458, %v578
    %v611 = vadd.f32 %v459, %v579
    %v612 = vadd.f32 %v460, %v580
    %v613 = vadd.f32 %v461, %v581
    %v614 = vadd.f32 %v462, %v582
    %v615 = vadd.f32 %v463, %v583
    %v616 = vadd.f32 %v464, %v584
    %v617 = vadd.f32 %v465, %v585
    %v618 = vadd.f32 %v466, %v586
    %v619 = vadd.f32 %v467, %v587
    %v620 = vadd.f32 %v468, %v588
    %v621 = vadd.f32 %v469, %v589
    %v622 = vadd.f32 %v470, %v590
    %v623 = vadd.f32 %v471, %v591
    %v624 = vadd.f32 %v472, %v592
    %v625 = vadd.f32 %v473, %v593
    %v626 = vadd.f32 %v474, %v594
    %v627 = vadd.f32 %v475, %v595
    %v628 = vadd.f32 %v476, %v596
    %v629 = vadd.f32 %v477, %v597
    %v630 = vadd.f32 %v478, %v598
    %632 = vset.pattern.permute.xlu0 0
    %633 = vperm.xlu0 %632, %v38
    %v634 = vpop.permute.xlu0 %633
    %637 = vset.pattern.permute.xlu0 0
    %638 = vperm.xlu0 %637, %v39
    %v639 = vpop.permute.xlu0 %638
    %642 = vset.pattern.permute.xlu0 0
    %643 = vperm.xlu0 %642, %v40
    %v644 = vpop.permute.xlu0 %643
    %647 = vset.pattern.permute.xlu0 0
    %648 = vperm.xlu0 %647, %v41
    %v649 = vpop.permute.xlu0 %648
    %v651 = vadd.f32 %v599, %v634
    %v652 = vadd.f32 %v600, %v634
    %v653 = vadd.f32 %v601, %v634
    %v654 = vadd.f32 %v602, %v634
    %v655 = vadd.f32 %v603, %v634
    %v656 = vadd.f32 %v604, %v634
    %v657 = vadd.f32 %v605, %v634
    %v658 = vadd.f32 %v606, %v634
    %v659 = vadd.f32 %v607, %v639
    %v660 = vadd.f32 %v608, %v639
    %v661 = vadd.f32 %v609, %v639
    %v662 = vadd.f32 %v610, %v639
    %v663 = vadd.f32 %v611, %v639
    %v664 = vadd.f32 %v612, %v639
    %v665 = vadd.f32 %v613, %v639
    %v666 = vadd.f32 %v614, %v639
    %v667 = vadd.f32 %v615, %v644
    %v668 = vadd.f32 %v616, %v644
    %v669 = vadd.f32 %v617, %v644
    %v670 = vadd.f32 %v618, %v644
    %v671 = vadd.f32 %v619, %v644
    %v672 = vadd.f32 %v620, %v644
    %v673 = vadd.f32 %v621, %v644
    %v674 = vadd.f32 %v622, %v644
    %v675 = vadd.f32 %v623, %v649
    %v676 = vadd.f32 %v624, %v649
    %v677 = vadd.f32 %v625, %v649
    %v678 = vadd.f32 %v626, %v649
    %v679 = vadd.f32 %v627, %v649
    %v680 = vadd.f32 %v628, %v649
    %v681 = vadd.f32 %v629, %v649
    %v682 = vadd.f32 %v630, %v649
    %v683 = vld [vmem:[%s3] sm:$0xff]
    %v684 = vld [vmem:[%s3 + $0x8] sm:$0xff]
    %v685 = vld [vmem:[%s3 + $0x10] sm:$0xff]
    %v686 = vld [vmem:[%s3 + $0x18] sm:$0xff]
    %v687 = vld [vmem:[%s4] sm:$0xff]
    %v688 = vld [vmem:[%s4 + $0x8] sm:$0xff]
    %v689 = vld [vmem:[%s4 + $0x10] sm:$0xff]
    %v690 = vld [vmem:[%s4 + $0x18] sm:$0xff]
    %692 = vset.pattern.permute.xlu0 0
    %693 = vperm.xlu0 %692, %v687
    %v694 = vpop.permute.xlu0 %693
    %697 = vset.pattern.permute.xlu0 0
    %698 = vperm.xlu0 %697, %v688
    %v699 = vpop.permute.xlu0 %698
    %702 = vset.pattern.permute.xlu0 0
    %703 = vperm.xlu0 %702, %v689
    %v704 = vpop.permute.xlu0 %703
    %707 = vset.pattern.permute.xlu0 0
    %708 = vperm.xlu0 %707, %v690
    %v709 = vpop.permute.xlu0 %708
    %vm711 = vcmask 261120
    %v713 = vsel %vm711, %v683, 0
    %v716 = vsel %vm711, %v684, 0
    %v719 = vsel %vm711, %v685, 0
    %v722 = vsel %vm711, %v686, 0
    %724 = vmatprep.subr.mxu0 %v652
    %725 = vmatpush1.msra.mxu0 %v651
    %726 = vmatprep.subr.mxu0 %v660
    %727 = vmatpush1.msra.mxu0 %v659
    %728 = vmatprep.subr.mxu0 %v668
    %729 = vmatpush1.msra.mxu0 %v667
    %730 = vmatprep.subr.mxu0 %v676
    %731 = vmatpush1.msra.mxu0 %v675
    %732 = vmatprep.subr.mxu0 0.0
    %733 = vmatpush1.msra.mxu0 0.0
    %734 = vmatprep.subr.mxu0 0.0
    %735 = vmatpush1.msra.mxu0 0.0
    %736 = vmatprep.subr.mxu0 0.0
    %737 = vmatpush1.msra.mxu0 0.0
    %738 = vmatprep.subr.mxu0 0.0
    %739 = vmatpush1.msra.mxu0 0.0
    %740 = vmatprep.subr.mxu0 0.0
    %741 = vmatpush1.msra.mxu0 0.0
    %742 = vmatprep.subr.mxu0 0.0
    %743 = vmatpush1.msra.mxu0 0.0
    %744 = vmatprep.subr.mxu0 0.0
    %745 = vmatpush1.msra.mxu0 0.0
    %746 = vmatprep.subr.mxu0 0.0
    %747 = vmatpush1.msra.mxu0 0.0
    %748 = vmatprep.subr.mxu0 0.0
    %749 = vmatpush1.msra.mxu0 0.0
    %750 = vmatprep.subr.mxu0 0.0
    %751 = vmatpush1.msra.mxu0 0.0
    %752 = vmatprep.subr.mxu0 0.0
    %753 = vmatpush1.msra.mxu0 0.0
    %754 = vmatprep.subr.mxu0 0.0
    %755 = vmatpush1.msra.mxu0 0.0
    %756 = vmatprep.subr.mxu0 0.0
    %757 = vmatpush1.msra.mxu0 0.0
    %758 = vmatprep.subr.mxu0 0.0
    %759 = vmatpush1.msra.mxu0 0.0
    %760 = vmatprep.subr.mxu0 0.0
    %761 = vmatpush1.msra.mxu0 0.0
    %762 = vmatprep.subr.mxu0 0.0
    %763 = vmatpush1.msra.mxu0 0.0
    %764 = vmatprep.subr.mxu0 0.0
    %765 = vmatpush1.msra.mxu0 0.0
    %766 = vmatprep.subr.mxu0 0.0
    %767 = vmatpush1.msra.mxu0 0.0
    %768 = vmatprep.subr.mxu0 0.0
    %769 = vmatpush1.msra.mxu0 0.0
    %770 = vmatprep.subr.mxu0 0.0
    %771 = vmatpush1.msra.mxu0 0.0
    %772 = vmatprep.subr.mxu0 0.0
    %773 = vmatpush1.msra.mxu0 0.0
    %774 = vmatprep.subr.mxu0 0.0
    %775 = vmatpush1.msra.mxu0 0.0
    %776 = vmatprep.subr.mxu0 0.0
    %777 = vmatpush1.msra.mxu0 0.0
    %778 = vmatprep.subr.mxu0 0.0
    %779 = vmatpush1.msra.mxu0 0.0
    %780 = vmatprep.subr.mxu0 0.0
    %781 = vmatpush1.msra.mxu0 0.0
    %782 = vmatprep.subr.mxu0 0.0
    %783 = vmatpush1.msra.mxu0 0.0
    %784 = vmatprep.subr.mxu0 0.0
    %785 = vmatpush1.msra.mxu0 0.0
    %786 = vmatprep.subr.mxu0 0.0
    %787 = vmatpush1.msra.mxu0 0.0
    %788 = vmatprep.mubr.f32.mxu0 0.0
    %789 = vmatmul.mubr.f32.gmra.mrb[0].mxu0 %v713
    %v790 = vpop.f32.mrb[0].mxu0
    %v791 = vadd.f32 %v694, %v790
    %v792 = vpop.f32.mrb[0].mxu0
    %v793 = vadd.f32 %v694, %v792
    %794 = vmatprep.mubr.f32.mxu0 0.0
    %795 = vmatmul.mubr.f32.gmra.mrb[0].mxu0 %v716
    %v796 = vpop.f32.mrb[0].mxu0
    %v797 = vadd.f32 %v699, %v796
    %v798 = vpop.f32.mrb[0].mxu0
    %v799 = vadd.f32 %v699, %v798
    %800 = vmatprep.mubr.f32.mxu0 0.0
    %801 = vmatmul.mubr.f32.gmra.mrb[0].mxu0 %v719
    %v802 = vpop.f32.mrb[0].mxu0
    %v803 = vadd.f32 %v704, %v802
    %v804 = vpop.f32.mrb[0].mxu0
    %v805 = vadd.f32 %v704, %v804
    %806 = vmatprep.mubr.f32.mxu0 0.0
    %807 = vmatmul.mubr.f32.gmra.mrb[0].mxu0 %v722
    %v808 = vpop.f32.mrb[0].mxu0
    %v809 = vadd.f32 %v709, %v808
    %v810 = vpop.f32.mrb[0].mxu0
    %v811 = vadd.f32 %v709, %v810
    %812 = vdwg.mxu0
    %813 = vmatprep.subr.mxu0 %v654
    %814 = vmatpush1.msra.mxu0 %v653
    %815 = vmatprep.subr.mxu0 %v662
    %816 = vmatpush1.msra.mxu0 %v661
    %817 = vmatprep.subr.mxu0 %v670
    %818 = vmatpush1.msra.mxu0 %v669
    %819 = vmatprep.subr.mxu0 %v678
    %820 = vmatpush1.msra.mxu0 %v677
    %821 = vmatprep.subr.mxu0 0.0
    %822 = vmatpush1.msra.mxu0 0.0
    %823 = vmatprep.subr.mxu0 0.0
    %824 = vmatpush1.msra.mxu0 0.0
    %825 = vmatprep.subr.mxu0 0.0
    %826 = vmatpush1.msra.mxu0 0.0
    %827 = vmatprep.subr.mxu0 0.0
    %828 = vmatpush1.msra.mxu0 0.0
    %829 = vmatprep.subr.mxu0 0.0
    %830 = vmatpush1.msra.mxu0 0.0
    %831 = vmatprep.subr.mxu0 0.0
    %832 = vmatpush1.msra.mxu0 0.0
    %833 = vmatprep.subr.mxu0 0.0
    %834 = vmatpush1.msra.mxu0 0.0
    %835 = vmatprep.subr.mxu0 0.0
    %836 = vmatpush1.msra.mxu0 0.0
    %837 = vmatprep.subr.mxu0 0.0
    %838 = vmatpush1.msra.mxu0 0.0
    %839 = vmatprep.subr.mxu0 0.0
    %840 = vmatpush1.msra.mxu0 0.0
    %841 = vmatprep.subr.mxu0 0.0
    %842 = vmatpush1.msra.mxu0 0.0
    %843 = vmatprep.subr.mxu0 0.0
    %844 = vmatpush1.msra.mxu0 0.0
    %845 = vmatprep.subr.mxu0 0.0
    %846 = vmatpush1.msra.mxu0 0.0
    %847 = vmatprep.subr.mxu0 0.0
    %848 = vmatpush1.msra.mxu0 0.0
    %849 = vmatprep.subr.mxu0 0.0
    %850 = vmatpush1.msra.mxu0 0.0
    %851 = vmatprep.subr.mxu0 0.0
    %852 = vmatpush1.msra.mxu0 0.0
    %853 = vmatprep.subr.mxu0 0.0
    %854 = vmatpush1.msra.mxu0 0.0
    %855 = vmatprep.subr.mxu0 0.0
    %856 = vmatpush1.msra.mxu0 0.0
    %857 = vmatprep.subr.mxu0 0.0
    %858 = vmatpush1.msra.mxu0 0.0
    %859 = vmatprep.subr.mxu0 0.0
    %860 = vmatpush1.msra.mxu0 0.0
    %861 = vmatprep.subr.mxu0 0.0
    %862 = vmatpush1.msra.mxu0 0.0
    %863 = vmatprep.subr.mxu0 0.0
    %864 = vmatpush1.msra.mxu0 0.0
    %865 = vmatprep.subr.mxu0 0.0
    %866 = vmatpush1.msra.mxu0 0.0
    %867 = vmatprep.subr.mxu0 0.0
    %868 = vmatpush1.msra.mxu0 0.0
    %869 = vmatprep.subr.mxu0 0.0
    %870 = vmatpush1.msra.mxu0 0.0
    %871 = vmatprep.subr.mxu0 0.0
    %872 = vmatpush1.msra.mxu0 0.0
    %873 = vmatprep.subr.mxu0 0.0
    %874 = vmatpush1.msra.mxu0 0.0
    %875 = vmatprep.subr.mxu0 0.0
    %876 = vmatpush1.msra.mxu0 0.0
    %877 = vmatprep.mubr.f32.mxu0 0.0
    %878 = vmatmul.mubr.f32.gmra.mrb[0].mxu0 %v713
    %v879 = vpop.f32.mrb[0].mxu0
    %v880 = vadd.f32 %v694, %v879
    %v881 = vpop.f32.mrb[0].mxu0
    %v882 = vadd.f32 %v694, %v881
    %883 = vmatprep.mubr.f32.mxu0 0.0
    %884 = vmatmul.mubr.f32.gmra.mrb[0].mxu0 %v716
    %v885 = vpop.f32.mrb[0].mxu0
    %v886 = vadd.f32 %v699, %v885
    %v887 = vpop.f32.mrb[0].mxu0
    %v888 = vadd.f32 %v699, %v887
    %889 = vmatprep.mubr.f32.mxu0 0.0
    %890 = vmatmul.mubr.f32.gmra.mrb[0].mxu0 %v719
    %v891 = vpop.f32.mrb[0].mxu0
    %v892 = vadd.f32 %v704, %v891
    %v893 = vpop.f32.mrb[0].mxu0
    %v894 = vadd.f32 %v704, %v893
    %895 = vmatprep.mubr.f32.mxu0 0.0
    %896 = vmatmul.mubr.f32.gmra.mrb[0].mxu0 %v722
    %v897 = vpop.f32.mrb[0].mxu0
    %v898 = vadd.f32 %v709, %v897
    %v899 = vpop.f32.mrb[0].mxu0
    %v900 = vadd.f32 %v709, %v899
    %901 = vdwg.mxu0
    %902 = vmatprep.subr.mxu0 %v656
    %903 = vmatpush1.msra.mxu0 %v655
    %904 = vmatprep.subr.mxu0 %v664
    %905 = vmatpush1.msra.mxu0 %v663
    %906 = vmatprep.subr.mxu0 %v672
    %907 = vmatpush1.msra.mxu0 %v671
    %908 = vmatprep.subr.mxu0 %v680
    %909 = vmatpush1.msra.mxu0 %v679
    %910 = vmatprep.subr.mxu0 0.0
    %911 = vmatpush1.msra.mxu0 0.0
    %912 = vmatprep.subr.mxu0 0.0
    %913 = vmatpush1.msra.mxu0 0.0
    %914 = vmatprep.subr.mxu0 0.0
    %915 = vmatpush1.msra.mxu0 0.0
    %916 = vmatprep.subr.mxu0 0.0
    %917 = vmatpush1.msra.mxu0 0.0
    %918 = vmatprep.subr.mxu0 0.0
    %919 = vmatpush1.msra.mxu0 0.0
    %920 = vmatprep.subr.mxu0 0.0
    %921 = vmatpush1.msra.mxu0 0.0
    %922 = vmatprep.subr.mxu0 0.0
    %923 = vmatpush1.msra.mxu0 0.0
    %924 = vmatprep.subr.mxu0 0.0
    %925 = vmatpush1.msra.mxu0 0.0
    %926 = vmatprep.subr.mxu0 0.0
    %927 = vmatpush1.msra.mxu0 0.0
    %928 = vmatprep.subr.mxu0 0.0
    %929 = vmatpush1.msra.mxu0 0.0
    %930 = vmatprep.subr.mxu0 0.0
    %931 = vmatpush1.msra.mxu0 0.0
    %932 = vmatprep.subr.mxu0 0.0
    %933 = vmatpush1.msra.mxu0 0.0
    %934 = vmatprep.subr.mxu0 0.0
    %935 = vmatpush1.msra.mxu0 0.0
    %936 = vmatprep.subr.mxu0 0.0
    %937 = vmatpush1.msra.mxu0 0.0
    %938 = vmatprep.subr.mxu0 0.0
    %939 = vmatpush1.msra.mxu0 0.0
    %940 = vmatprep.subr.mxu0 0.0
    %941 = vmatpush1.msra.mxu0 0.0
    %942 = vmatprep.subr.mxu0 0.0
    %943 = vmatpush1.msra.mxu0 0.0
    %944 = vmatprep.subr.mxu0 0.0
    %945 = vmatpush1.msra.mxu0 0.0
    %946 = vmatprep.subr.mxu0 0.0
    %947 = vmatpush1.msra.mxu0 0.0
    %948 = vmatprep.subr.mxu0 0.0
    %949 = vmatpush1.msra.mxu0 0.0
    %950 = vmatprep.subr.mxu0 0.0
    %951 = vmatpush1.msra.mxu0 0.0
    %952 = vmatprep.subr.mxu0 0.0
    %953 = vmatpush1.msra.mxu0 0.0
    %954 = vmatprep.subr.mxu0 0.0
    %955 = vmatpush1.msra.mxu0 0.0
    %956 = vmatprep.subr.mxu0 0.0
    %957 = vmatpush1.msra.mxu0 0.0
    %958 = vmatprep.subr.mxu0 0.0
    %959 = vmatpush1.msra.mxu0 0.0
    %960 = vmatprep.subr.mxu0 0.0
    %961 = vmatpush1.msra.mxu0 0.0
    %962 = vmatprep.subr.mxu0 0.0
    %963 = vmatpush1.msra.mxu0 0.0
    %964 = vmatprep.subr.mxu0 0.0
    %965 = vmatpush1.msra.mxu0 0.0
    %966 = vmatprep.mubr.f32.mxu0 0.0
    %967 = vmatmul.mubr.f32.gmra.mrb[0].mxu0 %v713
    %v968 = vpop.f32.mrb[0].mxu0
    %v969 = vadd.f32 %v694, %v968
    %v970 = vpop.f32.mrb[0].mxu0
    %v971 = vadd.f32 %v694, %v970
    %972 = vmatprep.mubr.f32.mxu0 0.0
    %973 = vmatmul.mubr.f32.gmra.mrb[0].mxu0 %v716
    %v974 = vpop.f32.mrb[0].mxu0
    %v975 = vadd.f32 %v699, %v974
    %v976 = vpop.f32.mrb[0].mxu0
    %v977 = vadd.f32 %v699, %v976
    %978 = vmatprep.mubr.f32.mxu0 0.0
    %979 = vmatmul.mubr.f32.gmra.mrb[0].mxu0 %v719
    %v980 = vpop.f32.mrb[0].mxu0
    %v981 = vadd.f32 %v704, %v980
    %v982 = vpop.f32.mrb[0].mxu0
    %v983 = vadd.f32 %v704, %v982
    %984 = vmatprep.mubr.f32.mxu0 0.0
    %985 = vmatmul.mubr.f32.gmra.mrb[0].mxu0 %v722
    %v986 = vpop.f32.mrb[0].mxu0
    %v987 = vadd.f32 %v709, %v986
    %v988 = vpop.f32.mrb[0].mxu0
    %v989 = vadd.f32 %v709, %v988
    %990 = vdwg.mxu0
    %991 = vmatprep.subr.mxu0 %v658
    %992 = vmatpush1.msra.mxu0 %v657
    %993 = vmatprep.subr.mxu0 %v666
    %994 = vmatpush1.msra.mxu0 %v665
    %995 = vmatprep.subr.mxu0 %v674
    %996 = vmatpush1.msra.mxu0 %v673
    %997 = vmatprep.subr.mxu0 %v682
    %998 = vmatpush1.msra.mxu0 %v681
    %999 = vmatprep.subr.mxu0 0.0
    %1000 = vmatpush1.msra.mxu0 0.0
    %1001 = vmatprep.subr.mxu0 0.0
    %1002 = vmatpush1.msra.mxu0 0.0
    %1003 = vmatprep.subr.mxu0 0.0
    %1004 = vmatpush1.msra.mxu0 0.0
    %1005 = vmatprep.subr.mxu0 0.0
    %1006 = vmatpush1.msra.mxu0 0.0
    %1007 = vmatprep.subr.mxu0 0.0
    %1008 = vmatpush1.msra.mxu0 0.0
    %1009 = vmatprep.subr.mxu0 0.0
    %1010 = vmatpush1.msra.mxu0 0.0
    %1011 = vmatprep.subr.mxu0 0.0
    %1012 = vmatpush1.msra.mxu0 0.0
    %1013 = vmatprep.subr.mxu0 0.0
    %1014 = vmatpush1.msra.mxu0 0.0
    %1015 = vmatprep.subr.mxu0 0.0
    %1016 = vmatpush1.msra.mxu0 0.0
    %1017 = vmatprep.subr.mxu0 0.0
    %1018 = vmatpush1.msra.mxu0 0.0
    %1019 = vmatprep.subr.mxu0 0.0
    %1020 = vmatpush1.msra.mxu0 0.0
    %1021 = vmatprep.subr.mxu0 0.0
    %1022 = vmatpush1.msra.mxu0 0.0
    %1023 = vmatprep.subr.mxu0 0.0
    %1024 = vmatpush1.msra.mxu0 0.0
    %1025 = vmatprep.subr.mxu0 0.0
    %1026 = vmatpush1.msra.mxu0 0.0
    %1027 = vmatprep.subr.mxu0 0.0
    %1028 = vmatpush1.msra.mxu0 0.0
    %1029 = vmatprep.subr.mxu0 0.0
    %1030 = vmatpush1.msra.mxu0 0.0
    %1031 = vmatprep.subr.mxu0 0.0
    %1032 = vmatpush1.msra.mxu0 0.0
    %1033 = vmatprep.subr.mxu0 0.0
    %1034 = vmatpush1.msra.mxu0 0.0
    %1035 = vmatprep.subr.mxu0 0.0
    %1036 = vmatpush1.msra.mxu0 0.0
    %1037 = vmatprep.subr.mxu0 0.0
    %1038 = vmatpush1.msra.mxu0 0.0
    %1039 = vmatprep.subr.mxu0 0.0
    %1040 = vmatpush1.msra.mxu0 0.0
    %1041 = vmatprep.subr.mxu0 0.0
    %1042 = vmatpush1.msra.mxu0 0.0
    %1043 = vmatprep.subr.mxu0 0.0
    %1044 = vmatpush1.msra.mxu0 0.0
    %1045 = vmatprep.subr.mxu0 0.0
    %1046 = vmatpush1.msra.mxu0 0.0
    %1047 = vmatprep.subr.mxu0 0.0
    %1048 = vmatpush1.msra.mxu0 0.0
    %1049 = vmatprep.subr.mxu0 0.0
    %1050 = vmatpush1.msra.mxu0 0.0
    %1051 = vmatprep.subr.mxu0 0.0
    %1052 = vmatpush1.msra.mxu0 0.0
    %1053 = vmatprep.subr.mxu0 0.0
    %1054 = vmatpush1.msra.mxu0 0.0
    %1055 = vmatprep.mubr.f32.mxu0 0.0
    %1056 = vmatmul.mubr.f32.gmra.mrb[0].mxu0 %v713
    %v1057 = vpop.f32.mrb[0].mxu0
    %v1058 = vadd.f32 %v694, %v1057
    %v1059 = vpop.f32.mrb[0].mxu0
    %v1060 = vadd.f32 %v694, %v1059
    %1061 = vmatprep.mubr.f32.mxu0 0.0
    %1062 = vmatmul.mubr.f32.gmra.mrb[0].mxu0 %v716
    %v1063 = vpop.f32.mrb[0].mxu0
    %v1064 = vadd.f32 %v699, %v1063
    %v1065 = vpop.f32.mrb[0].mxu0
    %v1066 = vadd.f32 %v699, %v1065
    %1067 = vmatprep.mubr.f32.mxu0 0.0
    %1068 = vmatmul.mubr.f32.gmra.mrb[0].mxu0 %v719
    %v1069 = vpop.f32.mrb[0].mxu0
    %v1070 = vadd.f32 %v704, %v1069
    %v1071 = vpop.f32.mrb[0].mxu0
    %v1072 = vadd.f32 %v704, %v1071
    %1073 = vmatprep.mubr.f32.mxu0 0.0
    %1074 = vmatmul.mubr.f32.gmra.mrb[0].mxu0 %v722
    %v1075 = vpop.f32.mrb[0].mxu0
    %v1076 = vadd.f32 %v709, %v1075
    %v1077 = vpop.f32.mrb[0].mxu0
    %v1078 = vadd.f32 %v709, %v1077
    %1079 = vdwg.mxu0
    %v1080 = vmax.f32 %v791, 0.0
    %v1081 = vmax.f32 %v793, 0.0
    %v1082 = vmax.f32 %v880, 0.0
    %v1083 = vmax.f32 %v882, 0.0
    %v1084 = vmax.f32 %v969, 0.0
    %v1085 = vmax.f32 %v971, 0.0
    %v1086 = vmax.f32 %v1058, 0.0
    %v1087 = vmax.f32 %v1060, 0.0
    %v1088 = vmax.f32 %v797, 0.0
    %v1089 = vmax.f32 %v799, 0.0
    %v1090 = vmax.f32 %v886, 0.0
    %v1091 = vmax.f32 %v888, 0.0
    %v1092 = vmax.f32 %v975, 0.0
    %v1093 = vmax.f32 %v977, 0.0
    %v1094 = vmax.f32 %v1064, 0.0
    %v1095 = vmax.f32 %v1066, 0.0
    %v1096 = vmax.f32 %v803, 0.0
    %v1097 = vmax.f32 %v805, 0.0
    %v1098 = vmax.f32 %v892, 0.0
    %v1099 = vmax.f32 %v894, 0.0
    %v1100 = vmax.f32 %v981, 0.0
    %v1101 = vmax.f32 %v983, 0.0
    %v1102 = vmax.f32 %v1070, 0.0
    %v1103 = vmax.f32 %v1072, 0.0
    %v1104 = vmax.f32 %v809, 0.0
    %v1105 = vmax.f32 %v811, 0.0
    %v1106 = vmax.f32 %v898, 0.0
    %v1107 = vmax.f32 %v900, 0.0
    %v1108 = vmax.f32 %v987, 0.0
    %v1109 = vmax.f32 %v989, 0.0
    %v1110 = vmax.f32 %v1076, 0.0
    %v1111 = vmax.f32 %v1078, 0.0
    %s1112 = scalar_lea.vmem %s3, 32
    %v1113 = vld [vmem:[%s1112] sm:$0xff]
    %v1114 = vld [vmem:[%s1112 + $0x8] sm:$0xff]
    %v1115 = vld [vmem:[%s1112 + $0x10] sm:$0xff]
    %v1116 = vld [vmem:[%s1112 + $0x18] sm:$0xff]
    %s1117 = scalar_lea.vmem %s4, 32
    %v1118 = vld [vmem:[%s1117] sm:$0xff]
    %v1119 = vld [vmem:[%s1117 + $0x8] sm:$0xff]
    %v1120 = vld [vmem:[%s1117 + $0x10] sm:$0xff]
    %v1121 = vld [vmem:[%s1117 + $0x18] sm:$0xff]
    %1123 = vset.pattern.permute.xlu0 0
    %1124 = vperm.xlu0 %1123, %v1118
    %v1125 = vpop.permute.xlu0 %1124
    %1128 = vset.pattern.permute.xlu0 0
    %1129 = vperm.xlu0 %1128, %v1119
    %v1130 = vpop.permute.xlu0 %1129
    %1133 = vset.pattern.permute.xlu0 0
    %1134 = vperm.xlu0 %1133, %v1120
    %v1135 = vpop.permute.xlu0 %1134
    %1138 = vset.pattern.permute.xlu0 0
    %1139 = vperm.xlu0 %1138, %v1121
    %v1140 = vpop.permute.xlu0 %1139
    %v1143 = vsel %vm711, %v1113, 0
    %v1146 = vsel %vm711, %v1114, 0
    %v1149 = vsel %vm711, %v1115, 0
    %v1152 = vsel %vm711, %v1116, 0
    %1154 = vmatprep.subr.mxu0 %v1081
    %1155 = vmatpush1.msra.mxu0 %v1080
    %1156 = vmatprep.subr.mxu0 %v1089
    %1157 = vmatpush1.msra.mxu0 %v1088
    %1158 = vmatprep.subr.mxu0 %v1097
    %1159 = vmatpush1.msra.mxu0 %v1096
    %1160 = vmatprep.subr.mxu0 %v1105
    %1161 = vmatpush1.msra.mxu0 %v1104
    %1162 = vmatprep.subr.mxu0 0.0
    %1163 = vmatpush1.msra.mxu0 0.0
    %1164 = vmatprep.subr.mxu0 0.0
    %1165 = vmatpush1.msra.mxu0 0.0
    %1166 = vmatprep.subr.mxu0 0.0
    %1167 = vmatpush1.msra.mxu0 0.0
    %1168 = vmatprep.subr.mxu0 0.0
    %1169 = vmatpush1.msra.mxu0 0.0
    %1170 = vmatprep.subr.mxu0 0.0
    %1171 = vmatpush1.msra.mxu0 0.0
    %1172 = vmatprep.subr.mxu0 0.0
    %1173 = vmatpush1.msra.mxu0 0.0
    %1174 = vmatprep.subr.mxu0 0.0
    %1175 = vmatpush1.msra.mxu0 0.0
    %1176 = vmatprep.subr.mxu0 0.0
    %1177 = vmatpush1.msra.mxu0 0.0
    %1178 = vmatprep.subr.mxu0 0.0
    %1179 = vmatpush1.msra.mxu0 0.0
    %1180 = vmatprep.subr.mxu0 0.0
    %1181 = vmatpush1.msra.mxu0 0.0
    %1182 = vmatprep.subr.mxu0 0.0
    %1183 = vmatpush1.msra.mxu0 0.0
    %1184 = vmatprep.subr.mxu0 0.0
    %1185 = vmatpush1.msra.mxu0 0.0
    %1186 = vmatprep.subr.mxu0 0.0
    %1187 = vmatpush1.msra.mxu0 0.0
    %1188 = vmatprep.subr.mxu0 0.0
    %1189 = vmatpush1.msra.mxu0 0.0
    %1190 = vmatprep.subr.mxu0 0.0
    %1191 = vmatpush1.msra.mxu0 0.0
    %1192 = vmatprep.subr.mxu0 0.0
    %1193 = vmatpush1.msra.mxu0 0.0
    %1194 = vmatprep.subr.mxu0 0.0
    %1195 = vmatpush1.msra.mxu0 0.0
    %1196 = vmatprep.subr.mxu0 0.0
    %1197 = vmatpush1.msra.mxu0 0.0
    %1198 = vmatprep.subr.mxu0 0.0
    %1199 = vmatpush1.msra.mxu0 0.0
    %1200 = vmatprep.subr.mxu0 0.0
    %1201 = vmatpush1.msra.mxu0 0.0
    %1202 = vmatprep.subr.mxu0 0.0
    %1203 = vmatpush1.msra.mxu0 0.0
    %1204 = vmatprep.subr.mxu0 0.0
    %1205 = vmatpush1.msra.mxu0 0.0
    %1206 = vmatprep.subr.mxu0 0.0
    %1207 = vmatpush1.msra.mxu0 0.0
    %1208 = vmatprep.subr.mxu0 0.0
    %1209 = vmatpush1.msra.mxu0 0.0
    %1210 = vmatprep.subr.mxu0 0.0
    %1211 = vmatpush1.msra.mxu0 0.0
    %1212 = vmatprep.subr.mxu0 0.0
    %1213 = vmatpush1.msra.mxu0 0.0
    %1214 = vmatprep.subr.mxu0 0.0
    %1215 = vmatpush1.msra.mxu0 0.0
    %1216 = vmatprep.subr.mxu0 0.0
    %1217 = vmatpush1.msra.mxu0 0.0
    %1218 = vmatprep.mubr.f32.mxu0 0.0
    %1219 = vmatmul.mubr.f32.gmra.mrb[0].mxu0 %v1143
    %v1220 = vpop.f32.mrb[0].mxu0
    %v1221 = vadd.f32 %v1125, %v1220
    %v1222 = vpop.f32.mrb[0].mxu0
    %v1223 = vadd.f32 %v1125, %v1222
    %1224 = vmatprep.mubr.f32.mxu0 0.0
    %1225 = vmatmul.mubr.f32.gmra.mrb[0].mxu0 %v1146
    %v1226 = vpop.f32.mrb[0].mxu0
    %v1227 = vadd.f32 %v1130, %v1226
    %v1228 = vpop.f32.mrb[0].mxu0
    %v1229 = vadd.f32 %v1130, %v1228
    %1230 = vmatprep.mubr.f32.mxu0 0.0
    %1231 = vmatmul.mubr.f32.gmra.mrb[0].mxu0 %v1149
    %v1232 = vpop.f32.mrb[0].mxu0
    %v1233 = vadd.f32 %v1135, %v1232
    %v1234 = vpop.f32.mrb[0].mxu0
    %v1235 = vadd.f32 %v1135, %v1234
    %1236 = vmatprep.mubr.f32.mxu0 0.0
    %1237 = vmatmul.mubr.f32.gmra.mrb[0].mxu0 %v1152
    %v1238 = vpop.f32.mrb[0].mxu0
    %v1239 = vadd.f32 %v1140, %v1238
    %v1240 = vpop.f32.mrb[0].mxu0
    %v1241 = vadd.f32 %v1140, %v1240
    %1242 = vdwg.mxu0
    %1243 = vmatprep.subr.mxu0 %v1083
    %1244 = vmatpush1.msra.mxu0 %v1082
    %1245 = vmatprep.subr.mxu0 %v1091
    %1246 = vmatpush1.msra.mxu0 %v1090
    %1247 = vmatprep.subr.mxu0 %v1099
    %1248 = vmatpush1.msra.mxu0 %v1098
    %1249 = vmatprep.subr.mxu0 %v1107
    %1250 = vmatpush1.msra.mxu0 %v1106
    %1251 = vmatprep.subr.mxu0 0.0
    %1252 = vmatpush1.msra.mxu0 0.0
    %1253 = vmatprep.subr.mxu0 0.0
    %1254 = vmatpush1.msra.mxu0 0.0
    %1255 = vmatprep.subr.mxu0 0.0
    %1256 = vmatpush1.msra.mxu0 0.0
    %1257 = vmatprep.subr.mxu0 0.0
    %1258 = vmatpush1.msra.mxu0 0.0
    %1259 = vmatprep.subr.mxu0 0.0
    %1260 = vmatpush1.msra.mxu0 0.0
    %1261 = vmatprep.subr.mxu0 0.0
    %1262 = vmatpush1.msra.mxu0 0.0
    %1263 = vmatprep.subr.mxu0 0.0
    %1264 = vmatpush1.msra.mxu0 0.0
    %1265 = vmatprep.subr.mxu0 0.0
    %1266 = vmatpush1.msra.mxu0 0.0
    %1267 = vmatprep.subr.mxu0 0.0
    %1268 = vmatpush1.msra.mxu0 0.0
    %1269 = vmatprep.subr.mxu0 0.0
    %1270 = vmatpush1.msra.mxu0 0.0
    %1271 = vmatprep.subr.mxu0 0.0
    %1272 = vmatpush1.msra.mxu0 0.0
    %1273 = vmatprep.subr.mxu0 0.0
    %1274 = vmatpush1.msra.mxu0 0.0
    %1275 = vmatprep.subr.mxu0 0.0
    %1276 = vmatpush1.msra.mxu0 0.0
    %1277 = vmatprep.subr.mxu0 0.0
    %1278 = vmatpush1.msra.mxu0 0.0
    %1279 = vmatprep.subr.mxu0 0.0
    %1280 = vmatpush1.msra.mxu0 0.0
    %1281 = vmatprep.subr.mxu0 0.0
    %1282 = vmatpush1.msra.mxu0 0.0
    %1283 = vmatprep.subr.mxu0 0.0
    %1284 = vmatpush1.msra.mxu0 0.0
    %1285 = vmatprep.subr.mxu0 0.0
    %1286 = vmatpush1.msra.mxu0 0.0
    %1287 = vmatprep.subr.mxu0 0.0
    %1288 = vmatpush1.msra.mxu0 0.0
    %1289 = vmatprep.subr.mxu0 0.0
    %1290 = vmatpush1.msra.mxu0 0.0
    %1291 = vmatprep.subr.mxu0 0.0
    %1292 = vmatpush1.msra.mxu0 0.0
    %1293 = vmatprep.subr.mxu0 0.0
    %1294 = vmatpush1.msra.mxu0 0.0
    %1295 = vmatprep.subr.mxu0 0.0
    %1296 = vmatpush1.msra.mxu0 0.0
    %1297 = vmatprep.subr.mxu0 0.0
    %1298 = vmatpush1.msra.mxu0 0.0
    %1299 = vmatprep.subr.mxu0 0.0
    %1300 = vmatpush1.msra.mxu0 0.0
    %1301 = vmatprep.subr.mxu0 0.0
    %1302 = vmatpush1.msra.mxu0 0.0
    %1303 = vmatprep.subr.mxu0 0.0
    %1304 = vmatpush1.msra.mxu0 0.0
    %1305 = vmatprep.subr.mxu0 0.0
    %1306 = vmatpush1.msra.mxu0 0.0
    %1307 = vmatprep.mubr.f32.mxu0 0.0
    %1308 = vmatmul.mubr.f32.gmra.mrb[0].mxu0 %v1143
    %v1309 = vpop.f32.mrb[0].mxu0
    %v1310 = vadd.f32 %v1125, %v1309
    %v1311 = vpop.f32.mrb[0].mxu0
    %v1312 = vadd.f32 %v1125, %v1311
    %1313 = vmatprep.mubr.f32.mxu0 0.0
    %1314 = vmatmul.mubr.f32.gmra.mrb[0].mxu0 %v1146
    %v1315 = vpop.f32.mrb[0].mxu0
    %v1316 = vadd.f32 %v1130, %v1315
    %v1317 = vpop.f32.mrb[0].mxu0
    %v1318 = vadd.f32 %v1130, %v1317
    %1319 = vmatprep.mubr.f32.mxu0 0.0
    %1320 = vmatmul.mubr.f32.gmra.mrb[0].mxu0 %v1149
    %v1321 = vpop.f32.mrb[0].mxu0
    %v1322 = vadd.f32 %v1135, %v1321
    %v1323 = vpop.f32.mrb[0].mxu0
    %v1324 = vadd.f32 %v1135, %v1323
    %1325 = vmatprep.mubr.f32.mxu0 0.0
    %1326 = vmatmul.mubr.f32.gmra.mrb[0].mxu0 %v1152
    %v1327 = vpop.f32.mrb[0].mxu0
    %v1328 = vadd.f32 %v1140, %v1327
    %v1329 = vpop.f32.mrb[0].mxu0
    %v1330 = vadd.f32 %v1140, %v1329
    %1331 = vdwg.mxu0
    %1332 = vmatprep.subr.mxu0 %v1085
    %1333 = vmatpush1.msra.mxu0 %v1084
    %1334 = vmatprep.subr.mxu0 %v1093
    %1335 = vmatpush1.msra.mxu0 %v1092
    %1336 = vmatprep.subr.mxu0 %v1101
    %1337 = vmatpush1.msra.mxu0 %v1100
    %1338 = vmatprep.subr.mxu0 %v1109
    %1339 = vmatpush1.msra.mxu0 %v1108
    %1340 = vmatprep.subr.mxu0 0.0
    %1341 = vmatpush1.msra.mxu0 0.0
    %1342 = vmatprep.subr.mxu0 0.0
    %1343 = vmatpush1.msra.mxu0 0.0
    %1344 = vmatprep.subr.mxu0 0.0
    %1345 = vmatpush1.msra.mxu0 0.0
    %1346 = vmatprep.subr.mxu0 0.0
    %1347 = vmatpush1.msra.mxu0 0.0
    %1348 = vmatprep.subr.mxu0 0.0
    %1349 = vmatpush1.msra.mxu0 0.0
    %1350 = vmatprep.subr.mxu0 0.0
    %1351 = vmatpush1.msra.mxu0 0.0
    %1352 = vmatprep.subr.mxu0 0.0
    %1353 = vmatpush1.msra.mxu0 0.0
    %1354 = vmatprep.subr.mxu0 0.0
    %1355 = vmatpush1.msra.mxu0 0.0
    %1356 = vmatprep.subr.mxu0 0.0
    %1357 = vmatpush1.msra.mxu0 0.0
    %1358 = vmatprep.subr.mxu0 0.0
    %1359 = vmatpush1.msra.mxu0 0.0
    %1360 = vmatprep.subr.mxu0 0.0
    %1361 = vmatpush1.msra.mxu0 0.0
    %1362 = vmatprep.subr.mxu0 0.0
    %1363 = vmatpush1.msra.mxu0 0.0
    %1364 = vmatprep.subr.mxu0 0.0
    %1365 = vmatpush1.msra.mxu0 0.0
    %1366 = vmatprep.subr.mxu0 0.0
    %1367 = vmatpush1.msra.mxu0 0.0
    %1368 = vmatprep.subr.mxu0 0.0
    %1369 = vmatpush1.msra.mxu0 0.0
    %1370 = vmatprep.subr.mxu0 0.0
    %1371 = vmatpush1.msra.mxu0 0.0
    %1372 = vmatprep.subr.mxu0 0.0
    %1373 = vmatpush1.msra.mxu0 0.0
    %1374 = vmatprep.subr.mxu0 0.0
    %1375 = vmatpush1.msra.mxu0 0.0
    %1376 = vmatprep.subr.mxu0 0.0
    %1377 = vmatpush1.msra.mxu0 0.0
    %1378 = vmatprep.subr.mxu0 0.0
    %1379 = vmatpush1.msra.mxu0 0.0
    %1380 = vmatprep.subr.mxu0 0.0
    %1381 = vmatpush1.msra.mxu0 0.0
    %1382 = vmatprep.subr.mxu0 0.0
    %1383 = vmatpush1.msra.mxu0 0.0
    %1384 = vmatprep.subr.mxu0 0.0
    %1385 = vmatpush1.msra.mxu0 0.0
    %1386 = vmatprep.subr.mxu0 0.0
    %1387 = vmatpush1.msra.mxu0 0.0
    %1388 = vmatprep.subr.mxu0 0.0
    %1389 = vmatpush1.msra.mxu0 0.0
    %1390 = vmatprep.subr.mxu0 0.0
    %1391 = vmatpush1.msra.mxu0 0.0
    %1392 = vmatprep.subr.mxu0 0.0
    %1393 = vmatpush1.msra.mxu0 0.0
    %1394 = vmatprep.subr.mxu0 0.0
    %1395 = vmatpush1.msra.mxu0 0.0
    %1396 = vmatprep.mubr.f32.mxu0 0.0
    %1397 = vmatmul.mubr.f32.gmra.mrb[0].mxu0 %v1143
    %v1398 = vpop.f32.mrb[0].mxu0
    %v1399 = vadd.f32 %v1125, %v1398
    %v1400 = vpop.f32.mrb[0].mxu0
    %v1401 = vadd.f32 %v1125, %v1400
    %1402 = vmatprep.mubr.f32.mxu0 0.0
    %1403 = vmatmul.mubr.f32.gmra.mrb[0].mxu0 %v1146
    %v1404 = vpop.f32.mrb[0].mxu0
    %v1405 = vadd.f32 %v1130, %v1404
    %v1406 = vpop.f32.mrb[0].mxu0
    %v1407 = vadd.f32 %v1130, %v1406
    %1408 = vmatprep.mubr.f32.mxu0 0.0
    %1409 = vmatmul.mubr.f32.gmra.mrb[0].mxu0 %v1149
    %v1410 = vpop.f32.mrb[0].mxu0
    %v1411 = vadd.f32 %v1135, %v1410
    %v1412 = vpop.f32.mrb[0].mxu0
    %v1413 = vadd.f32 %v1135, %v1412
    %1414 = vmatprep.mubr.f32.mxu0 0.0
    %1415 = vmatmul.mubr.f32.gmra.mrb[0].mxu0 %v1152
    %v1416 = vpop.f32.mrb[0].mxu0
    %v1417 = vadd.f32 %v1140, %v1416
    %v1418 = vpop.f32.mrb[0].mxu0
    %v1419 = vadd.f32 %v1140, %v1418
    %1420 = vdwg.mxu0
    %1421 = vmatprep.subr.mxu0 %v1087
    %1422 = vmatpush1.msra.mxu0 %v1086
    %1423 = vmatprep.subr.mxu0 %v1095
    %1424 = vmatpush1.msra.mxu0 %v1094
    %1425 = vmatprep.subr.mxu0 %v1103
    %1426 = vmatpush1.msra.mxu0 %v1102
    %1427 = vmatprep.subr.mxu0 %v1111
    %1428 = vmatpush1.msra.mxu0 %v1110
    %1429 = vmatprep.subr.mxu0 0.0
    %1430 = vmatpush1.msra.mxu0 0.0
    %1431 = vmatprep.subr.mxu0 0.0
    %1432 = vmatpush1.msra.mxu0 0.0
    %1433 = vmatprep.subr.mxu0 0.0
    %1434 = vmatpush1.msra.mxu0 0.0
    %1435 = vmatprep.subr.mxu0 0.0
    %1436 = vmatpush1.msra.mxu0 0.0
    %1437 = vmatprep.subr.mxu0 0.0
    %1438 = vmatpush1.msra.mxu0 0.0
    %1439 = vmatprep.subr.mxu0 0.0
    %1440 = vmatpush1.msra.mxu0 0.0
    %1441 = vmatprep.subr.mxu0 0.0
    %1442 = vmatpush1.msra.mxu0 0.0
    %1443 = vmatprep.subr.mxu0 0.0
    %1444 = vmatpush1.msra.mxu0 0.0
    %1445 = vmatprep.subr.mxu0 0.0
    %1446 = vmatpush1.msra.mxu0 0.0
    %1447 = vmatprep.subr.mxu0 0.0
    %1448 = vmatpush1.msra.mxu0 0.0
    %1449 = vmatprep.subr.mxu0 0.0
    %1450 = vmatpush1.msra.mxu0 0.0
    %1451 = vmatprep.subr.mxu0 0.0
    %1452 = vmatpush1.msra.mxu0 0.0
    %1453 = vmatprep.subr.mxu0 0.0
    %1454 = vmatpush1.msra.mxu0 0.0
    %1455 = vmatprep.subr.mxu0 0.0
    %1456 = vmatpush1.msra.mxu0 0.0
    %1457 = vmatprep.subr.mxu0 0.0
    %1458 = vmatpush1.msra.mxu0 0.0
    %1459 = vmatprep.subr.mxu0 0.0
    %1460 = vmatpush1.msra.mxu0 0.0
    %1461 = vmatprep.subr.mxu0 0.0
    %1462 = vmatpush1.msra.mxu0 0.0
    %1463 = vmatprep.subr.mxu0 0.0
    %1464 = vmatpush1.msra.mxu0 0.0
    %1465 = vmatprep.subr.mxu0 0.0
    %1466 = vmatpush1.msra.mxu0 0.0
    %1467 = vmatprep.subr.mxu0 0.0
    %1468 = vmatpush1.msra.mxu0 0.0
    %1469 = vmatprep.subr.mxu0 0.0
    %1470 = vmatpush1.msra.mxu0 0.0
    %1471 = vmatprep.subr.mxu0 0.0
    %1472 = vmatpush1.msra.mxu0 0.0
    %1473 = vmatprep.subr.mxu0 0.0
    %1474 = vmatpush1.msra.mxu0 0.0
    %1475 = vmatprep.subr.mxu0 0.0
    %1476 = vmatpush1.msra.mxu0 0.0
    %1477 = vmatprep.subr.mxu0 0.0
    %1478 = vmatpush1.msra.mxu0 0.0
    %1479 = vmatprep.subr.mxu0 0.0
    %1480 = vmatpush1.msra.mxu0 0.0
    %1481 = vmatprep.subr.mxu0 0.0
    %1482 = vmatpush1.msra.mxu0 0.0
    %1483 = vmatprep.subr.mxu0 0.0
    %1484 = vmatpush1.msra.mxu0 0.0
    %1485 = vmatprep.mubr.f32.mxu0 0.0
    %1486 = vmatmul.mubr.f32.gmra.mrb[0].mxu0 %v1143
    %v1487 = vpop.f32.mrb[0].mxu0
    %v1488 = vadd.f32 %v1125, %v1487
    %v1489 = vpop.f32.mrb[0].mxu0
    %v1490 = vadd.f32 %v1125, %v1489
    %1491 = vmatprep.mubr.f32.mxu0 0.0
    %1492 = vmatmul.mubr.f32.gmra.mrb[0].mxu0 %v1146
    %v1493 = vpop.f32.mrb[0].mxu0
    %v1494 = vadd.f32 %v1130, %v1493
    %v1495 = vpop.f32.mrb[0].mxu0
    %v1496 = vadd.f32 %v1130, %v1495
    %1497 = vmatprep.mubr.f32.mxu0 0.0
    %1498 = vmatmul.mubr.f32.gmra.mrb[0].mxu0 %v1149
    %v1499 = vpop.f32.mrb[0].mxu0
    %v1500 = vadd.f32 %v1135, %v1499
    %v1501 = vpop.f32.mrb[0].mxu0
    %v1502 = vadd.f32 %v1135, %v1501
    %1503 = vmatprep.mubr.f32.mxu0 0.0
    %1504 = vmatmul.mubr.f32.gmra.mrb[0].mxu0 %v1152
    %v1505 = vpop.f32.mrb[0].mxu0
    %v1506 = vadd.f32 %v1140, %v1505
    %v1507 = vpop.f32.mrb[0].mxu0
    %v1508 = vadd.f32 %v1140, %v1507
    %1509 = vdwg.mxu0
    %v1510 = vadd.f32 %v651, %v1221
    %v1511 = vadd.f32 %v652, %v1223
    %v1512 = vadd.f32 %v653, %v1310
    %v1513 = vadd.f32 %v654, %v1312
    %v1514 = vadd.f32 %v655, %v1399
    %v1515 = vadd.f32 %v656, %v1401
    %v1516 = vadd.f32 %v657, %v1488
    %v1517 = vadd.f32 %v658, %v1490
    %v1518 = vadd.f32 %v659, %v1227
    %v1519 = vadd.f32 %v660, %v1229
    %v1520 = vadd.f32 %v661, %v1316
    %v1521 = vadd.f32 %v662, %v1318
    %v1522 = vadd.f32 %v663, %v1405
    %v1523 = vadd.f32 %v664, %v1407
    %v1524 = vadd.f32 %v665, %v1494
    %v1525 = vadd.f32 %v666, %v1496
    %v1526 = vadd.f32 %v667, %v1233
    %v1527 = vadd.f32 %v668, %v1235
    %v1528 = vadd.f32 %v669, %v1322
    %v1529 = vadd.f32 %v670, %v1324
    %v1530 = vadd.f32 %v671, %v1411
    %v1531 = vadd.f32 %v672, %v1413
    %v1532 = vadd.f32 %v673, %v1500
    %v1533 = vadd.f32 %v674, %v1502
    %v1534 = vadd.f32 %v675, %v1239
    %v1535 = vadd.f32 %v676, %v1241
    %v1536 = vadd.f32 %v677, %v1328
    %v1537 = vadd.f32 %v678, %v1330
    %v1538 = vadd.f32 %v679, %v1417
    %v1539 = vadd.f32 %v680, %v1419
    %v1540 = vadd.f32 %v681, %v1506
    %v1541 = vadd.f32 %v682, %v1508
    %v1542 = vmax.f32 %v1510, 0.0
    %v1543 = vmax.f32 %v1511, 0.0
    %v1544 = vmax.f32 %v1512, 0.0
    %v1545 = vmax.f32 %v1513, 0.0
    %v1546 = vmax.f32 %v1514, 0.0
    %v1547 = vmax.f32 %v1515, 0.0
    %v1548 = vmax.f32 %v1516, 0.0
    %v1549 = vmax.f32 %v1517, 0.0
    %v1550 = vmax.f32 %v1518, 0.0
    %v1551 = vmax.f32 %v1519, 0.0
    %v1552 = vmax.f32 %v1520, 0.0
    %v1553 = vmax.f32 %v1521, 0.0
    %v1554 = vmax.f32 %v1522, 0.0
    %v1555 = vmax.f32 %v1523, 0.0
    %v1556 = vmax.f32 %v1524, 0.0
    %v1557 = vmax.f32 %v1525, 0.0
    %v1558 = vmax.f32 %v1526, 0.0
    %v1559 = vmax.f32 %v1527, 0.0
    %v1560 = vmax.f32 %v1528, 0.0
    %v1561 = vmax.f32 %v1529, 0.0
    %v1562 = vmax.f32 %v1530, 0.0
    %v1563 = vmax.f32 %v1531, 0.0
    %v1564 = vmax.f32 %v1532, 0.0
    %v1565 = vmax.f32 %v1533, 0.0
    %v1566 = vmax.f32 %v1534, 0.0
    %v1567 = vmax.f32 %v1535, 0.0
    %v1568 = vmax.f32 %v1536, 0.0
    %v1569 = vmax.f32 %v1537, 0.0
    %v1570 = vmax.f32 %v1538, 0.0
    %v1571 = vmax.f32 %v1539, 0.0
    %v1572 = vmax.f32 %v1540, 0.0
    %v1573 = vmax.f32 %v1541, 0.0
    %s1574 = scalar_lea.vmem %s3, 64
    %v1575 = vld [vmem:[%s1574] sm:$0xff]
    %v1576 = vld [vmem:[%s1574 + $0x8] sm:$0xff]
    %v1577 = vld [vmem:[%s1574 + $0x10] sm:$0xff]
    %v1578 = vld [vmem:[%s1574 + $0x18] sm:$0xff]
    %s1579 = scalar_lea.vmem %s4, 64
    %v1580 = vld [vmem:[%s1579] sm:$0xff]
    %v1581 = vld [vmem:[%s1579 + $0x8] sm:$0xff]
    %v1582 = vld [vmem:[%s1579 + $0x10] sm:$0xff]
    %v1583 = vld [vmem:[%s1579 + $0x18] sm:$0xff]
    %1585 = vset.pattern.permute.xlu0 0
    %1586 = vperm.xlu0 %1585, %v1580
    %v1587 = vpop.permute.xlu0 %1586
    %1590 = vset.pattern.permute.xlu0 0
    %1591 = vperm.xlu0 %1590, %v1581
    %v1592 = vpop.permute.xlu0 %1591
    %1595 = vset.pattern.permute.xlu0 0
    %1596 = vperm.xlu0 %1595, %v1582
    %v1597 = vpop.permute.xlu0 %1596
    %1600 = vset.pattern.permute.xlu0 0
    %1601 = vperm.xlu0 %1600, %v1583
    %v1602 = vpop.permute.xlu0 %1601
    %v1605 = vsel %vm711, %v1575, 0
    %v1608 = vsel %vm711, %v1576, 0
    %v1611 = vsel %vm711, %v1577, 0
    %v1614 = vsel %vm711, %v1578, 0
    %1616 = vmatprep.subr.mxu0 %v1543
    %1617 = vmatpush1.msra.mxu0 %v1542
    %1618 = vmatprep.subr.mxu0 %v1551
    %1619 = vmatpush1.msra.mxu0 %v1550
    %1620 = vmatprep.subr.mxu0 %v1559
    %1621 = vmatpush1.msra.mxu0 %v1558
    %1622 = vmatprep.subr.mxu0 %v1567
    %1623 = vmatpush1.msra.mxu0 %v1566
    %1624 = vmatprep.subr.mxu0 0.0
    %1625 = vmatpush1.msra.mxu0 0.0
    %1626 = vmatprep.subr.mxu0 0.0
    %1627 = vmatpush1.msra.mxu0 0.0
    %1628 = vmatprep.subr.mxu0 0.0
    %1629 = vmatpush1.msra.mxu0 0.0
    %1630 = vmatprep.subr.mxu0 0.0
    %1631 = vmatpush1.msra.mxu0 0.0
    %1632 = vmatprep.subr.mxu0 0.0
    %1633 = vmatpush1.msra.mxu0 0.0
    %1634 = vmatprep.subr.mxu0 0.0
    %1635 = vmatpush1.msra.mxu0 0.0
    %1636 = vmatprep.subr.mxu0 0.0
    %1637 = vmatpush1.msra.mxu0 0.0
    %1638 = vmatprep.subr.mxu0 0.0
    %1639 = vmatpush1.msra.mxu0 0.0
    %1640 = vmatprep.subr.mxu0 0.0
    %1641 = vmatpush1.msra.mxu0 0.0
    %1642 = vmatprep.subr.mxu0 0.0
    %1643 = vmatpush1.msra.mxu0 0.0
    %1644 = vmatprep.subr.mxu0 0.0
    %1645 = vmatpush1.msra.mxu0 0.0
    %1646 = vmatprep.subr.mxu0 0.0
    %1647 = vmatpush1.msra.mxu0 0.0
    %1648 = vmatprep.subr.mxu0 0.0
    %1649 = vmatpush1.msra.mxu0 0.0
    %1650 = vmatprep.subr.mxu0 0.0
    %1651 = vmatpush1.msra.mxu0 0.0
    %1652 = vmatprep.subr.mxu0 0.0
    %1653 = vmatpush1.msra.mxu0 0.0
    %1654 = vmatprep.subr.mxu0 0.0
    %1655 = vmatpush1.msra.mxu0 0.0
    %1656 = vmatprep.subr.mxu0 0.0
    %1657 = vmatpush1.msra.mxu0 0.0
    %1658 = vmatprep.subr.mxu0 0.0
    %1659 = vmatpush1.msra.mxu0 0.0
    %1660 = vmatprep.subr.mxu0 0.0
    %1661 = vmatpush1.msra.mxu0 0.0
    %1662 = vmatprep.subr.mxu0 0.0
    %1663 = vmatpush1.msra.mxu0 0.0
    %1664 = vmatprep.subr.mxu0 0.0
    %1665 = vmatpush1.msra.mxu0 0.0
    %1666 = vmatprep.subr.mxu0 0.0
    %1667 = vmatpush1.msra.mxu0 0.0
    %1668 = vmatprep.subr.mxu0 0.0
    %1669 = vmatpush1.msra.mxu0 0.0
    %1670 = vmatprep.subr.mxu0 0.0
    %1671 = vmatpush1.msra.mxu0 0.0
    %1672 = vmatprep.subr.mxu0 0.0
    %1673 = vmatpush1.msra.mxu0 0.0
    %1674 = vmatprep.subr.mxu0 0.0
    %1675 = vmatpush1.msra.mxu0 0.0
    %1676 = vmatprep.subr.mxu0 0.0
    %1677 = vmatpush1.msra.mxu0 0.0
    %1678 = vmatprep.subr.mxu0 0.0
    %1679 = vmatpush1.msra.mxu0 0.0
    %1680 = vmatprep.mubr.f32.mxu0 0.0
    %1681 = vmatmul.mubr.f32.gmra.mrb[0].mxu0 %v1605
    %v1682 = vpop.f32.mrb[0].mxu0
    %v1683 = vadd.f32 %v1587, %v1682
    %v1684 = vpop.f32.mrb[0].mxu0
    %v1685 = vadd.f32 %v1587, %v1684
    %1686 = vmatprep.mubr.f32.mxu0 0.0
    %1687 = vmatmul.mubr.f32.gmra.mrb[0].mxu0 %v1608
    %v1688 = vpop.f32.mrb[0].mxu0
    %v1689 = vadd.f32 %v1592, %v1688
    %v1690 = vpop.f32.mrb[0].mxu0
    %v1691 = vadd.f32 %v1592, %v1690
    %1692 = vmatprep.mubr.f32.mxu0 0.0
    %1693 = vmatmul.mubr.f32.gmra.mrb[0].mxu0 %v1611
    %v1694 = vpop.f32.mrb[0].mxu0
    %v1695 = vadd.f32 %v1597, %v1694
    %v1696 = vpop.f32.mrb[0].mxu0
    %v1697 = vadd.f32 %v1597, %v1696
    %1698 = vmatprep.mubr.f32.mxu0 0.0
    %1699 = vmatmul.mubr.f32.gmra.mrb[0].mxu0 %v1614
    %v1700 = vpop.f32.mrb[0].mxu0
    %v1701 = vadd.f32 %v1602, %v1700
    %v1702 = vpop.f32.mrb[0].mxu0
    %v1703 = vadd.f32 %v1602, %v1702
    %1704 = vdwg.mxu0
    %1705 = vmatprep.subr.mxu0 %v1545
    %1706 = vmatpush1.msra.mxu0 %v1544
    %1707 = vmatprep.subr.mxu0 %v1553
    %1708 = vmatpush1.msra.mxu0 %v1552
    %1709 = vmatprep.subr.mxu0 %v1561
    %1710 = vmatpush1.msra.mxu0 %v1560
    %1711 = vmatprep.subr.mxu0 %v1569
    %1712 = vmatpush1.msra.mxu0 %v1568
    %1713 = vmatprep.subr.mxu0 0.0
    %1714 = vmatpush1.msra.mxu0 0.0
    %1715 = vmatprep.subr.mxu0 0.0
    %1716 = vmatpush1.msra.mxu0 0.0
    %1717 = vmatprep.subr.mxu0 0.0
    %1718 = vmatpush1.msra.mxu0 0.0
    %1719 = vmatprep.subr.mxu0 0.0
    %1720 = vmatpush1.msra.mxu0 0.0
    %1721 = vmatprep.subr.mxu0 0.0
    %1722 = vmatpush1.msra.mxu0 0.0
    %1723 = vmatprep.subr.mxu0 0.0
    %1724 = vmatpush1.msra.mxu0 0.0
    %1725 = vmatprep.subr.mxu0 0.0
    %1726 = vmatpush1.msra.mxu0 0.0
    %1727 = vmatprep.subr.mxu0 0.0
    %1728 = vmatpush1.msra.mxu0 0.0
    %1729 = vmatprep.subr.mxu0 0.0
    %1730 = vmatpush1.msra.mxu0 0.0
    %1731 = vmatprep.subr.mxu0 0.0
    %1732 = vmatpush1.msra.mxu0 0.0
    %1733 = vmatprep.subr.mxu0 0.0
    %1734 = vmatpush1.msra.mxu0 0.0
    %1735 = vmatprep.subr.mxu0 0.0
    %1736 = vmatpush1.msra.mxu0 0.0
    %1737 = vmatprep.subr.mxu0 0.0
    %1738 = vmatpush1.msra.mxu0 0.0
    %1739 = vmatprep.subr.mxu0 0.0
    %1740 = vmatpush1.msra.mxu0 0.0
    %1741 = vmatprep.subr.mxu0 0.0
    %1742 = vmatpush1.msra.mxu0 0.0
    %1743 = vmatprep.subr.mxu0 0.0
    %1744 = vmatpush1.msra.mxu0 0.0
    %1745 = vmatprep.subr.mxu0 0.0
    %1746 = vmatpush1.msra.mxu0 0.0
    %1747 = vmatprep.subr.mxu0 0.0
    %1748 = vmatpush1.msra.mxu0 0.0
    %1749 = vmatprep.subr.mxu0 0.0
    %1750 = vmatpush1.msra.mxu0 0.0
    %1751 = vmatprep.subr.mxu0 0.0
    %1752 = vmatpush1.msra.mxu0 0.0
    %1753 = vmatprep.subr.mxu0 0.0
    %1754 = vmatpush1.msra.mxu0 0.0
    %1755 = vmatprep.subr.mxu0 0.0
    %1756 = vmatpush1.msra.mxu0 0.0
    %1757 = vmatprep.subr.mxu0 0.0
    %1758 = vmatpush1.msra.mxu0 0.0
    %1759 = vmatprep.subr.mxu0 0.0
    %1760 = vmatpush1.msra.mxu0 0.0
    %1761 = vmatprep.subr.mxu0 0.0
    %1762 = vmatpush1.msra.mxu0 0.0
    %1763 = vmatprep.subr.mxu0 0.0
    %1764 = vmatpush1.msra.mxu0 0.0
    %1765 = vmatprep.subr.mxu0 0.0
    %1766 = vmatpush1.msra.mxu0 0.0
    %1767 = vmatprep.subr.mxu0 0.0
    %1768 = vmatpush1.msra.mxu0 0.0
    %1769 = vmatprep.mubr.f32.mxu0 0.0
    %1770 = vmatmul.mubr.f32.gmra.mrb[0].mxu0 %v1605
    %v1771 = vpop.f32.mrb[0].mxu0
    %v1772 = vadd.f32 %v1587, %v1771
    %v1773 = vpop.f32.mrb[0].mxu0
    %v1774 = vadd.f32 %v1587, %v1773
    %1775 = vmatprep.mubr.f32.mxu0 0.0
    %1776 = vmatmul.mubr.f32.gmra.mrb[0].mxu0 %v1608
    %v1777 = vpop.f32.mrb[0].mxu0
    %v1778 = vadd.f32 %v1592, %v1777
    %v1779 = vpop.f32.mrb[0].mxu0
    %v1780 = vadd.f32 %v1592, %v1779
    %1781 = vmatprep.mubr.f32.mxu0 0.0
    %1782 = vmatmul.mubr.f32.gmra.mrb[0].mxu0 %v1611
    %v1783 = vpop.f32.mrb[0].mxu0
    %v1784 = vadd.f32 %v1597, %v1783
    %v1785 = vpop.f32.mrb[0].mxu0
    %v1786 = vadd.f32 %v1597, %v1785
    %1787 = vmatprep.mubr.f32.mxu0 0.0
    %1788 = vmatmul.mubr.f32.gmra.mrb[0].mxu0 %v1614
    %v1789 = vpop.f32.mrb[0].mxu0
    %v1790 = vadd.f32 %v1602, %v1789
    %v1791 = vpop.f32.mrb[0].mxu0
    %v1792 = vadd.f32 %v1602, %v1791
    %1793 = vdwg.mxu0
    %1794 = vmatprep.subr.mxu0 %v1547
    %1795 = vmatpush1.msra.mxu0 %v1546
    %1796 = vmatprep.subr.mxu0 %v1555
    %1797 = vmatpush1.msra.mxu0 %v1554
    %1798 = vmatprep.subr.mxu0 %v1563
    %1799 = vmatpush1.msra.mxu0 %v1562
    %1800 = vmatprep.subr.mxu0 %v1571
    %1801 = vmatpush1.msra.mxu0 %v1570
    %1802 = vmatprep.subr.mxu0 0.0
    %1803 = vmatpush1.msra.mxu0 0.0
    %1804 = vmatprep.subr.mxu0 0.0
    %1805 = vmatpush1.msra.mxu0 0.0
    %1806 = vmatprep.subr.mxu0 0.0
    %1807 = vmatpush1.msra.mxu0 0.0
    %1808 = vmatprep.subr.mxu0 0.0
    %1809 = vmatpush1.msra.mxu0 0.0
    %1810 = vmatprep.subr.mxu0 0.0
    %1811 = vmatpush1.msra.mxu0 0.0
    %1812 = vmatprep.subr.mxu0 0.0
    %1813 = vmatpush1.msra.mxu0 0.0
    %1814 = vmatprep.subr.mxu0 0.0
    %1815 = vmatpush1.msra.mxu0 0.0
    %1816 = vmatprep.subr.mxu0 0.0
    %1817 = vmatpush1.msra.mxu0 0.0
    %1818 = vmatprep.subr.mxu0 0.0
    %1819 = vmatpush1.msra.mxu0 0.0
    %1820 = vmatprep.subr.mxu0 0.0
    %1821 = vmatpush1.msra.mxu0 0.0
    %1822 = vmatprep.subr.mxu0 0.0
    %1823 = vmatpush1.msra.mxu0 0.0
    %1824 = vmatprep.subr.mxu0 0.0
    %1825 = vmatpush1.msra.mxu0 0.0
    %1826 = vmatprep.subr.mxu0 0.0
    %1827 = vmatpush1.msra.mxu0 0.0
    %1828 = vmatprep.subr.mxu0 0.0
    %1829 = vmatpush1.msra.mxu0 0.0
    %1830 = vmatprep.subr.mxu0 0.0
    %1831 = vmatpush1.msra.mxu0 0.0
    %1832 = vmatprep.subr.mxu0 0.0
    %1833 = vmatpush1.msra.mxu0 0.0
    %1834 = vmatprep.subr.mxu0 0.0
    %1835 = vmatpush1.msra.mxu0 0.0
    %1836 = vmatprep.subr.mxu0 0.0
    %1837 = vmatpush1.msra.mxu0 0.0
    %1838 = vmatprep.subr.mxu0 0.0
    %1839 = vmatpush1.msra.mxu0 0.0
    %1840 = vmatprep.subr.mxu0 0.0
    %1841 = vmatpush1.msra.mxu0 0.0
    %1842 = vmatprep.subr.mxu0 0.0
    %1843 = vmatpush1.msra.mxu0 0.0
    %1844 = vmatprep.subr.mxu0 0.0
    %1845 = vmatpush1.msra.mxu0 0.0
    %1846 = vmatprep.subr.mxu0 0.0
    %1847 = vmatpush1.msra.mxu0 0.0
    %1848 = vmatprep.subr.mxu0 0.0
    %1849 = vmatpush1.msra.mxu0 0.0
    %1850 = vmatprep.subr.mxu0 0.0
    %1851 = vmatpush1.msra.mxu0 0.0
    %1852 = vmatprep.subr.mxu0 0.0
    %1853 = vmatpush1.msra.mxu0 0.0
    %1854 = vmatprep.subr.mxu0 0.0
    %1855 = vmatpush1.msra.mxu0 0.0
    %1856 = vmatprep.subr.mxu0 0.0
    %1857 = vmatpush1.msra.mxu0 0.0
    %1858 = vmatprep.mubr.f32.mxu0 0.0
    %1859 = vmatmul.mubr.f32.gmra.mrb[0].mxu0 %v1605
    %v1860 = vpop.f32.mrb[0].mxu0
    %v1861 = vadd.f32 %v1587, %v1860
    %v1862 = vpop.f32.mrb[0].mxu0
    %v1863 = vadd.f32 %v1587, %v1862
    %1864 = vmatprep.mubr.f32.mxu0 0.0
    %1865 = vmatmul.mubr.f32.gmra.mrb[0].mxu0 %v1608
    %v1866 = vpop.f32.mrb[0].mxu0
    %v1867 = vadd.f32 %v1592, %v1866
    %v1868 = vpop.f32.mrb[0].mxu0
    %v1869 = vadd.f32 %v1592, %v1868
    %1870 = vmatprep.mubr.f32.mxu0 0.0
    %1871 = vmatmul.mubr.f32.gmra.mrb[0].mxu0 %v1611
    %v1872 = vpop.f32.mrb[0].mxu0
    %v1873 = vadd.f32 %v1597, %v1872
    %v1874 = vpop.f32.mrb[0].mxu0
    %v1875 = vadd.f32 %v1597, %v1874
    %1876 = vmatprep.mubr.f32.mxu0 0.0
    %1877 = vmatmul.mubr.f32.gmra.mrb[0].mxu0 %v1614
    %v1878 = vpop.f32.mrb[0].mxu0
    %v1879 = vadd.f32 %v1602, %v1878
    %v1880 = vpop.f32.mrb[0].mxu0
    %v1881 = vadd.f32 %v1602, %v1880
    %1882 = vdwg.mxu0
    %1883 = vmatprep.subr.mxu0 %v1549
    %1884 = vmatpush1.msra.mxu0 %v1548
    %1885 = vmatprep.subr.mxu0 %v1557
    %1886 = vmatpush1.msra.mxu0 %v1556
    %1887 = vmatprep.subr.mxu0 %v1565
    %1888 = vmatpush1.msra.mxu0 %v1564
    %1889 = vmatprep.subr.mxu0 %v1573
    %1890 = vmatpush1.msra.mxu0 %v1572
    %1891 = vmatprep.subr.mxu0 0.0
    %1892 = vmatpush1.msra.mxu0 0.0
    %1893 = vmatprep.subr.mxu0 0.0
    %1894 = vmatpush1.msra.mxu0 0.0
    %1895 = vmatprep.subr.mxu0 0.0
    %1896 = vmatpush1.msra.mxu0 0.0
    %1897 = vmatprep.subr.mxu0 0.0
    %1898 = vmatpush1.msra.mxu0 0.0
    %1899 = vmatprep.subr.mxu0 0.0
    %1900 = vmatpush1.msra.mxu0 0.0
    %1901 = vmatprep.subr.mxu0 0.0
    %1902 = vmatpush1.msra.mxu0 0.0
    %1903 = vmatprep.subr.mxu0 0.0
    %1904 = vmatpush1.msra.mxu0 0.0
    %1905 = vmatprep.subr.mxu0 0.0
    %1906 = vmatpush1.msra.mxu0 0.0
    %1907 = vmatprep.subr.mxu0 0.0
    %1908 = vmatpush1.msra.mxu0 0.0
    %1909 = vmatprep.subr.mxu0 0.0
    %1910 = vmatpush1.msra.mxu0 0.0
    %1911 = vmatprep.subr.mxu0 0.0
    %1912 = vmatpush1.msra.mxu0 0.0
    %1913 = vmatprep.subr.mxu0 0.0
    %1914 = vmatpush1.msra.mxu0 0.0
    %1915 = vmatprep.subr.mxu0 0.0
    %1916 = vmatpush1.msra.mxu0 0.0
    %1917 = vmatprep.subr.mxu0 0.0
    %1918 = vmatpush1.msra.mxu0 0.0
    %1919 = vmatprep.subr.mxu0 0.0
    %1920 = vmatpush1.msra.mxu0 0.0
    %1921 = vmatprep.subr.mxu0 0.0
    %1922 = vmatpush1.msra.mxu0 0.0
    %1923 = vmatprep.subr.mxu0 0.0
    %1924 = vmatpush1.msra.mxu0 0.0
    %1925 = vmatprep.subr.mxu0 0.0
    %1926 = vmatpush1.msra.mxu0 0.0
    %1927 = vmatprep.subr.mxu0 0.0
    %1928 = vmatpush1.msra.mxu0 0.0
    %1929 = vmatprep.subr.mxu0 0.0
    %1930 = vmatpush1.msra.mxu0 0.0
    %1931 = vmatprep.subr.mxu0 0.0
    %1932 = vmatpush1.msra.mxu0 0.0
    %1933 = vmatprep.subr.mxu0 0.0
    %1934 = vmatpush1.msra.mxu0 0.0
    %1935 = vmatprep.subr.mxu0 0.0
    %1936 = vmatpush1.msra.mxu0 0.0
    %1937 = vmatprep.subr.mxu0 0.0
    %1938 = vmatpush1.msra.mxu0 0.0
    %1939 = vmatprep.subr.mxu0 0.0
    %1940 = vmatpush1.msra.mxu0 0.0
    %1941 = vmatprep.subr.mxu0 0.0
    %1942 = vmatpush1.msra.mxu0 0.0
    %1943 = vmatprep.subr.mxu0 0.0
    %1944 = vmatpush1.msra.mxu0 0.0
    %1945 = vmatprep.subr.mxu0 0.0
    %1946 = vmatpush1.msra.mxu0 0.0
    %1947 = vmatprep.mubr.f32.mxu0 0.0
    %1948 = vmatmul.mubr.f32.gmra.mrb[0].mxu0 %v1605
    %v1949 = vpop.f32.mrb[0].mxu0
    %v1950 = vadd.f32 %v1587, %v1949
    %v1951 = vpop.f32.mrb[0].mxu0
    %v1952 = vadd.f32 %v1587, %v1951
    %1953 = vmatprep.mubr.f32.mxu0 0.0
    %1954 = vmatmul.mubr.f32.gmra.mrb[0].mxu0 %v1608
    %v1955 = vpop.f32.mrb[0].mxu0
    %v1956 = vadd.f32 %v1592, %v1955
    %v1957 = vpop.f32.mrb[0].mxu0
    %v1958 = vadd.f32 %v1592, %v1957
    %1959 = vmatprep.mubr.f32.mxu0 0.0
    %1960 = vmatmul.mubr.f32.gmra.mrb[0].mxu0 %v1611
    %v1961 = vpop.f32.mrb[0].mxu0
    %v1962 = vadd.f32 %v1597, %v1961
    %v1963 = vpop.f32.mrb[0].mxu0
    %v1964 = vadd.f32 %v1597, %v1963
    %1965 = vmatprep.mubr.f32.mxu0 0.0
    %1966 = vmatmul.mubr.f32.gmra.mrb[0].mxu0 %v1614
    %v1967 = vpop.f32.mrb[0].mxu0
    %v1968 = vadd.f32 %v1602, %v1967
    %v1969 = vpop.f32.mrb[0].mxu0
    %v1970 = vadd.f32 %v1602, %v1969
    %1971 = vdwg.mxu0
    %v1972 = vmax.f32 %v1683, 0.0
    %v1973 = vmax.f32 %v1685, 0.0
    %v1974 = vmax.f32 %v1772, 0.0
    %v1975 = vmax.f32 %v1774, 0.0
    %v1976 = vmax.f32 %v1861, 0.0
    %v1977 = vmax.f32 %v1863, 0.0
    %v1978 = vmax.f32 %v1950, 0.0
    %v1979 = vmax.f32 %v1952, 0.0
    %v1980 = vmax.f32 %v1689, 0.0
    %v1981 = vmax.f32 %v1691, 0.0
    %v1982 = vmax.f32 %v1778, 0.0
    %v1983 = vmax.f32 %v1780, 0.0
    %v1984 = vmax.f32 %v1867, 0.0
    %v1985 = vmax.f32 %v1869, 0.0
    %v1986 = vmax.f32 %v1956, 0.0
    %v1987 = vmax.f32 %v1958, 0.0
    %v1988 = vmax.f32 %v1695, 0.0
    %v1989 = vmax.f32 %v1697, 0.0
    %v1990 = vmax.f32 %v1784, 0.0
    %v1991 = vmax.f32 %v1786, 0.0
    %v1992 = vmax.f32 %v1873, 0.0
    %v1993 = vmax.f32 %v1875, 0.0
    %v1994 = vmax.f32 %v1962, 0.0
    %v1995 = vmax.f32 %v1964, 0.0
    %v1996 = vmax.f32 %v1701, 0.0
    %v1997 = vmax.f32 %v1703, 0.0
    %v1998 = vmax.f32 %v1790, 0.0
    %v1999 = vmax.f32 %v1792, 0.0
    %v2000 = vmax.f32 %v1879, 0.0
    %v2001 = vmax.f32 %v1881, 0.0
    %v2002 = vmax.f32 %v1968, 0.0
    %v2003 = vmax.f32 %v1970, 0.0
    %s2004 = scalar_lea.vmem %s3, 96
    %v2005 = vld [vmem:[%s2004] sm:$0xff]
    %v2006 = vld [vmem:[%s2004 + $0x8] sm:$0xff]
    %v2007 = vld [vmem:[%s2004 + $0x10] sm:$0xff]
    %v2008 = vld [vmem:[%s2004 + $0x18] sm:$0xff]
    %s2009 = scalar_lea.vmem %s4, 96
    %v2010 = vld [vmem:[%s2009] sm:$0xff]
    %v2011 = vld [vmem:[%s2009 + $0x8] sm:$0xff]
    %v2012 = vld [vmem:[%s2009 + $0x10] sm:$0xff]
    %v2013 = vld [vmem:[%s2009 + $0x18] sm:$0xff]
    %2015 = vset.pattern.permute.xlu0 0
    %2016 = vperm.xlu0 %2015, %v2010
    %v2017 = vpop.permute.xlu0 %2016
    %2020 = vset.pattern.permute.xlu0 0
    %2021 = vperm.xlu0 %2020, %v2011
    %v2022 = vpop.permute.xlu0 %2021
    %2025 = vset.pattern.permute.xlu0 0
    %2026 = vperm.xlu0 %2025, %v2012
    %v2027 = vpop.permute.xlu0 %2026
    %2030 = vset.pattern.permute.xlu0 0
    %2031 = vperm.xlu0 %2030, %v2013
    %v2032 = vpop.permute.xlu0 %2031
    %v2035 = vsel %vm711, %v2005, 0
    %v2038 = vsel %vm711, %v2006, 0
    %v2041 = vsel %vm711, %v2007, 0
    %v2044 = vsel %vm711, %v2008, 0
    %2046 = vmatprep.subr.mxu0 %v1973
    %2047 = vmatpush1.msra.mxu0 %v1972
    %2048 = vmatprep.subr.mxu0 %v1981
    %2049 = vmatpush1.msra.mxu0 %v1980
    %2050 = vmatprep.subr.mxu0 %v1989
    %2051 = vmatpush1.msra.mxu0 %v1988
    %2052 = vmatprep.subr.mxu0 %v1997
    %2053 = vmatpush1.msra.mxu0 %v1996
    %2054 = vmatprep.subr.mxu0 0.0
    %2055 = vmatpush1.msra.mxu0 0.0
    %2056 = vmatprep.subr.mxu0 0.0
    %2057 = vmatpush1.msra.mxu0 0.0
    %2058 = vmatprep.subr.mxu0 0.0
    %2059 = vmatpush1.msra.mxu0 0.0
    %2060 = vmatprep.subr.mxu0 0.0
    %2061 = vmatpush1.msra.mxu0 0.0
    %2062 = vmatprep.subr.mxu0 0.0
    %2063 = vmatpush1.msra.mxu0 0.0
    %2064 = vmatprep.subr.mxu0 0.0
    %2065 = vmatpush1.msra.mxu0 0.0
    %2066 = vmatprep.subr.mxu0 0.0
    %2067 = vmatpush1.msra.mxu0 0.0
    %2068 = vmatprep.subr.mxu0 0.0
    %2069 = vmatpush1.msra.mxu0 0.0
    %2070 = vmatprep.subr.mxu0 0.0
    %2071 = vmatpush1.msra.mxu0 0.0
    %2072 = vmatprep.subr.mxu0 0.0
    %2073 = vmatpush1.msra.mxu0 0.0
    %2074 = vmatprep.subr.mxu0 0.0
    %2075 = vmatpush1.msra.mxu0 0.0
    %2076 = vmatprep.subr.mxu0 0.0
    %2077 = vmatpush1.msra.mxu0 0.0
    %2078 = vmatprep.subr.mxu0 0.0
    %2079 = vmatpush1.msra.mxu0 0.0
    %2080 = vmatprep.subr.mxu0 0.0
    %2081 = vmatpush1.msra.mxu0 0.0
    %2082 = vmatprep.subr.mxu0 0.0
    %2083 = vmatpush1.msra.mxu0 0.0
    %2084 = vmatprep.subr.mxu0 0.0
    %2085 = vmatpush1.msra.mxu0 0.0
    %2086 = vmatprep.subr.mxu0 0.0
    %2087 = vmatpush1.msra.mxu0 0.0
    %2088 = vmatprep.subr.mxu0 0.0
    %2089 = vmatpush1.msra.mxu0 0.0
    %2090 = vmatprep.subr.mxu0 0.0
    %2091 = vmatpush1.msra.mxu0 0.0
    %2092 = vmatprep.subr.mxu0 0.0
    %2093 = vmatpush1.msra.mxu0 0.0
    %2094 = vmatprep.subr.mxu0 0.0
    %2095 = vmatpush1.msra.mxu0 0.0
    %2096 = vmatprep.subr.mxu0 0.0
    %2097 = vmatpush1.msra.mxu0 0.0
    %2098 = vmatprep.subr.mxu0 0.0
    %2099 = vmatpush1.msra.mxu0 0.0
    %2100 = vmatprep.subr.mxu0 0.0
    %2101 = vmatpush1.msra.mxu0 0.0
    %2102 = vmatprep.subr.mxu0 0.0
    %2103 = vmatpush1.msra.mxu0 0.0
    %2104 = vmatprep.subr.mxu0 0.0
    %2105 = vmatpush1.msra.mxu0 0.0
    %2106 = vmatprep.subr.mxu0 0.0
    %2107 = vmatpush1.msra.mxu0 0.0
    %2108 = vmatprep.subr.mxu0 0.0
    %2109 = vmatpush1.msra.mxu0 0.0
    %2110 = vmatprep.mubr.f32.mxu0 0.0
    %2111 = vmatmul.mubr.f32.gmra.mrb[0].mxu0 %v2035
    %v2112 = vpop.f32.mrb[0].mxu0
    %v2113 = vadd.f32 %v2017, %v2112
    %v2114 = vpop.f32.mrb[0].mxu0
    %v2115 = vadd.f32 %v2017, %v2114
    %2116 = vmatprep.mubr.f32.mxu0 0.0
    %2117 = vmatmul.mubr.f32.gmra.mrb[0].mxu0 %v2038
    %v2118 = vpop.f32.mrb[0].mxu0
    %v2119 = vadd.f32 %v2022, %v2118
    %v2120 = vpop.f32.mrb[0].mxu0
    %v2121 = vadd.f32 %v2022, %v2120
    %2122 = vmatprep.mubr.f32.mxu0 0.0
    %2123 = vmatmul.mubr.f32.gmra.mrb[0].mxu0 %v2041
    %v2124 = vpop.f32.mrb[0].mxu0
    %v2125 = vadd.f32 %v2027, %v2124
    %v2126 = vpop.f32.mrb[0].mxu0
    %v2127 = vadd.f32 %v2027, %v2126
    %2128 = vmatprep.mubr.f32.mxu0 0.0
    %2129 = vmatmul.mubr.f32.gmra.mrb[0].mxu0 %v2044
    %v2130 = vpop.f32.mrb[0].mxu0
    %v2131 = vadd.f32 %v2032, %v2130
    %v2132 = vpop.f32.mrb[0].mxu0
    %v2133 = vadd.f32 %v2032, %v2132
    %2134 = vdwg.mxu0
    %2135 = vmatprep.subr.mxu0 %v1975
    %2136 = vmatpush1.msra.mxu0 %v1974
    %2137 = vmatprep.subr.mxu0 %v1983
    %2138 = vmatpush1.msra.mxu0 %v1982
    %2139 = vmatprep.subr.mxu0 %v1991
    %2140 = vmatpush1.msra.mxu0 %v1990
    %2141 = vmatprep.subr.mxu0 %v1999
    %2142 = vmatpush1.msra.mxu0 %v1998
    %2143 = vmatprep.subr.mxu0 0.0
    %2144 = vmatpush1.msra.mxu0 0.0
    %2145 = vmatprep.subr.mxu0 0.0
    %2146 = vmatpush1.msra.mxu0 0.0
    %2147 = vmatprep.subr.mxu0 0.0
    %2148 = vmatpush1.msra.mxu0 0.0
    %2149 = vmatprep.subr.mxu0 0.0
    %2150 = vmatpush1.msra.mxu0 0.0
    %2151 = vmatprep.subr.mxu0 0.0
    %2152 = vmatpush1.msra.mxu0 0.0
    %2153 = vmatprep.subr.mxu0 0.0
    %2154 = vmatpush1.msra.mxu0 0.0
    %2155 = vmatprep.subr.mxu0 0.0
    %2156 = vmatpush1.msra.mxu0 0.0
    %2157 = vmatprep.subr.mxu0 0.0
    %2158 = vmatpush1.msra.mxu0 0.0
    %2159 = vmatprep.subr.mxu0 0.0
    %2160 = vmatpush1.msra.mxu0 0.0
    %2161 = vmatprep.subr.mxu0 0.0
    %2162 = vmatpush1.msra.mxu0 0.0
    %2163 = vmatprep.subr.mxu0 0.0
    %2164 = vmatpush1.msra.mxu0 0.0
    %2165 = vmatprep.subr.mxu0 0.0
    %2166 = vmatpush1.msra.mxu0 0.0
    %2167 = vmatprep.subr.mxu0 0.0
    %2168 = vmatpush1.msra.mxu0 0.0
    %2169 = vmatprep.subr.mxu0 0.0
    %2170 = vmatpush1.msra.mxu0 0.0
    %2171 = vmatprep.subr.mxu0 0.0
    %2172 = vmatpush1.msra.mxu0 0.0
    %2173 = vmatprep.subr.mxu0 0.0
    %2174 = vmatpush1.msra.mxu0 0.0
    %2175 = vmatprep.subr.mxu0 0.0
    %2176 = vmatpush1.msra.mxu0 0.0
    %2177 = vmatprep.subr.mxu0 0.0
    %2178 = vmatpush1.msra.mxu0 0.0
    %2179 = vmatprep.subr.mxu0 0.0
    %2180 = vmatpush1.msra.mxu0 0.0
    %2181 = vmatprep.subr.mxu0 0.0
    %2182 = vmatpush1.msra.mxu0 0.0
    %2183 = vmatprep.subr.mxu0 0.0
    %2184 = vmatpush1.msra.mxu0 0.0
    %2185 = vmatprep.subr.mxu0 0.0
    %2186 = vmatpush1.msra.mxu0 0.0
    %2187 = vmatprep.subr.mxu0 0.0
    %2188 = vmatpush1.msra.mxu0 0.0
    %2189 = vmatprep.subr.mxu0 0.0
    %2190 = vmatpush1.msra.mxu0 0.0
    %2191 = vmatprep.subr.mxu0 0.0
    %2192 = vmatpush1.msra.mxu0 0.0
    %2193 = vmatprep.subr.mxu0 0.0
    %2194 = vmatpush1.msra.mxu0 0.0
    %2195 = vmatprep.subr.mxu0 0.0
    %2196 = vmatpush1.msra.mxu0 0.0
    %2197 = vmatprep.subr.mxu0 0.0
    %2198 = vmatpush1.msra.mxu0 0.0
    %2199 = vmatprep.mubr.f32.mxu0 0.0
    %2200 = vmatmul.mubr.f32.gmra.mrb[0].mxu0 %v2035
    %v2201 = vpop.f32.mrb[0].mxu0
    %v2202 = vadd.f32 %v2017, %v2201
    %v2203 = vpop.f32.mrb[0].mxu0
    %v2204 = vadd.f32 %v2017, %v2203
    %2205 = vmatprep.mubr.f32.mxu0 0.0
    %2206 = vmatmul.mubr.f32.gmra.mrb[0].mxu0 %v2038
    %v2207 = vpop.f32.mrb[0].mxu0
    %v2208 = vadd.f32 %v2022, %v2207
    %v2209 = vpop.f32.mrb[0].mxu0
    %v2210 = vadd.f32 %v2022, %v2209
    %2211 = vmatprep.mubr.f32.mxu0 0.0
    %2212 = vmatmul.mubr.f32.gmra.mrb[0].mxu0 %v2041
    %v2213 = vpop.f32.mrb[0].mxu0
    %v2214 = vadd.f32 %v2027, %v2213
    %v2215 = vpop.f32.mrb[0].mxu0
    %v2216 = vadd.f32 %v2027, %v2215
    %2217 = vmatprep.mubr.f32.mxu0 0.0
    %2218 = vmatmul.mubr.f32.gmra.mrb[0].mxu0 %v2044
    %v2219 = vpop.f32.mrb[0].mxu0
    %v2220 = vadd.f32 %v2032, %v2219
    %v2221 = vpop.f32.mrb[0].mxu0
    %v2222 = vadd.f32 %v2032, %v2221
    %2223 = vdwg.mxu0
    %2224 = vmatprep.subr.mxu0 %v1977
    %2225 = vmatpush1.msra.mxu0 %v1976
    %2226 = vmatprep.subr.mxu0 %v1985
    %2227 = vmatpush1.msra.mxu0 %v1984
    %2228 = vmatprep.subr.mxu0 %v1993
    %2229 = vmatpush1.msra.mxu0 %v1992
    %2230 = vmatprep.subr.mxu0 %v2001
    %2231 = vmatpush1.msra.mxu0 %v2000
    %2232 = vmatprep.subr.mxu0 0.0
    %2233 = vmatpush1.msra.mxu0 0.0
    %2234 = vmatprep.subr.mxu0 0.0
    %2235 = vmatpush1.msra.mxu0 0.0
    %2236 = vmatprep.subr.mxu0 0.0
    %2237 = vmatpush1.msra.mxu0 0.0
    %2238 = vmatprep.subr.mxu0 0.0
    %2239 = vmatpush1.msra.mxu0 0.0
    %2240 = vmatprep.subr.mxu0 0.0
    %2241 = vmatpush1.msra.mxu0 0.0
    %2242 = vmatprep.subr.mxu0 0.0
    %2243 = vmatpush1.msra.mxu0 0.0
    %2244 = vmatprep.subr.mxu0 0.0
    %2245 = vmatpush1.msra.mxu0 0.0
    %2246 = vmatprep.subr.mxu0 0.0
    %2247 = vmatpush1.msra.mxu0 0.0
    %2248 = vmatprep.subr.mxu0 0.0
    %2249 = vmatpush1.msra.mxu0 0.0
    %2250 = vmatprep.subr.mxu0 0.0
    %2251 = vmatpush1.msra.mxu0 0.0
    %2252 = vmatprep.subr.mxu0 0.0
    %2253 = vmatpush1.msra.mxu0 0.0
    %2254 = vmatprep.subr.mxu0 0.0
    %2255 = vmatpush1.msra.mxu0 0.0
    %2256 = vmatprep.subr.mxu0 0.0
    %2257 = vmatpush1.msra.mxu0 0.0
    %2258 = vmatprep.subr.mxu0 0.0
    %2259 = vmatpush1.msra.mxu0 0.0
    %2260 = vmatprep.subr.mxu0 0.0
    %2261 = vmatpush1.msra.mxu0 0.0
    %2262 = vmatprep.subr.mxu0 0.0
    %2263 = vmatpush1.msra.mxu0 0.0
    %2264 = vmatprep.subr.mxu0 0.0
    %2265 = vmatpush1.msra.mxu0 0.0
    %2266 = vmatprep.subr.mxu0 0.0
    %2267 = vmatpush1.msra.mxu0 0.0
    %2268 = vmatprep.subr.mxu0 0.0
    %2269 = vmatpush1.msra.mxu0 0.0
    %2270 = vmatprep.subr.mxu0 0.0
    %2271 = vmatpush1.msra.mxu0 0.0
    %2272 = vmatprep.subr.mxu0 0.0
    %2273 = vmatpush1.msra.mxu0 0.0
    %2274 = vmatprep.subr.mxu0 0.0
    %2275 = vmatpush1.msra.mxu0 0.0
    %2276 = vmatprep.subr.mxu0 0.0
    %2277 = vmatpush1.msra.mxu0 0.0
    %2278 = vmatprep.subr.mxu0 0.0
    %2279 = vmatpush1.msra.mxu0 0.0
    %2280 = vmatprep.subr.mxu0 0.0
    %2281 = vmatpush1.msra.mxu0 0.0
    %2282 = vmatprep.subr.mxu0 0.0
    %2283 = vmatpush1.msra.mxu0 0.0
    %2284 = vmatprep.subr.mxu0 0.0
    %2285 = vmatpush1.msra.mxu0 0.0
    %2286 = vmatprep.subr.mxu0 0.0
    %2287 = vmatpush1.msra.mxu0 0.0
    %2288 = vmatprep.mubr.f32.mxu0 0.0
    %2289 = vmatmul.mubr.f32.gmra.mrb[0].mxu0 %v2035
    %v2290 = vpop.f32.mrb[0].mxu0
    %v2291 = vadd.f32 %v2017, %v2290
    %v2292 = vpop.f32.mrb[0].mxu0
    %v2293 = vadd.f32 %v2017, %v2292
    %2294 = vmatprep.mubr.f32.mxu0 0.0
    %2295 = vmatmul.mubr.f32.gmra.mrb[0].mxu0 %v2038
    %v2296 = vpop.f32.mrb[0].mxu0
    %v2297 = vadd.f32 %v2022, %v2296
    %v2298 = vpop.f32.mrb[0].mxu0
    %v2299 = vadd.f32 %v2022, %v2298
    %2300 = vmatprep.mubr.f32.mxu0 0.0
    %2301 = vmatmul.mubr.f32.gmra.mrb[0].mxu0 %v2041
    %v2302 = vpop.f32.mrb[0].mxu0
    %v2303 = vadd.f32 %v2027, %v2302
    %v2304 = vpop.f32.mrb[0].mxu0
    %v2305 = vadd.f32 %v2027, %v2304
    %2306 = vmatprep.mubr.f32.mxu0 0.0
    %2307 = vmatmul.mubr.f32.gmra.mrb[0].mxu0 %v2044
    %v2308 = vpop.f32.mrb[0].mxu0
    %v2309 = vadd.f32 %v2032, %v2308
    %v2310 = vpop.f32.mrb[0].mxu0
    %v2311 = vadd.f32 %v2032, %v2310
    %2312 = vdwg.mxu0
    %2313 = vmatprep.subr.mxu0 %v1979
    %2314 = vmatpush1.msra.mxu0 %v1978
    %2315 = vmatprep.subr.mxu0 %v1987
    %2316 = vmatpush1.msra.mxu0 %v1986
    %2317 = vmatprep.subr.mxu0 %v1995
    %2318 = vmatpush1.msra.mxu0 %v1994
    %2319 = vmatprep.subr.mxu0 %v2003
    %2320 = vmatpush1.msra.mxu0 %v2002
    %2321 = vmatprep.subr.mxu0 0.0
    %2322 = vmatpush1.msra.mxu0 0.0
    %2323 = vmatprep.subr.mxu0 0.0
    %2324 = vmatpush1.msra.mxu0 0.0
    %2325 = vmatprep.subr.mxu0 0.0
    %2326 = vmatpush1.msra.mxu0 0.0
    %2327 = vmatprep.subr.mxu0 0.0
    %2328 = vmatpush1.msra.mxu0 0.0
    %2329 = vmatprep.subr.mxu0 0.0
    %2330 = vmatpush1.msra.mxu0 0.0
    %2331 = vmatprep.subr.mxu0 0.0
    %2332 = vmatpush1.msra.mxu0 0.0
    %2333 = vmatprep.subr.mxu0 0.0
    %2334 = vmatpush1.msra.mxu0 0.0
    %2335 = vmatprep.subr.mxu0 0.0
    %2336 = vmatpush1.msra.mxu0 0.0
    %2337 = vmatprep.subr.mxu0 0.0
    %2338 = vmatpush1.msra.mxu0 0.0
    %2339 = vmatprep.subr.mxu0 0.0
    %2340 = vmatpush1.msra.mxu0 0.0
    %2341 = vmatprep.subr.mxu0 0.0
    %2342 = vmatpush1.msra.mxu0 0.0
    %2343 = vmatprep.subr.mxu0 0.0
    %2344 = vmatpush1.msra.mxu0 0.0
    %2345 = vmatprep.subr.mxu0 0.0
    %2346 = vmatpush1.msra.mxu0 0.0
    %2347 = vmatprep.subr.mxu0 0.0
    %2348 = vmatpush1.msra.mxu0 0.0
    %2349 = vmatprep.subr.mxu0 0.0
    %2350 = vmatpush1.msra.mxu0 0.0
    %2351 = vmatprep.subr.mxu0 0.0
    %2352 = vmatpush1.msra.mxu0 0.0
    %2353 = vmatprep.subr.mxu0 0.0
    %2354 = vmatpush1.msra.mxu0 0.0
    %2355 = vmatprep.subr.mxu0 0.0
    %2356 = vmatpush1.msra.mxu0 0.0
    %2357 = vmatprep.subr.mxu0 0.0
    %2358 = vmatpush1.msra.mxu0 0.0
    %2359 = vmatprep.subr.mxu0 0.0
    %2360 = vmatpush1.msra.mxu0 0.0
    %2361 = vmatprep.subr.mxu0 0.0
    %2362 = vmatpush1.msra.mxu0 0.0
    %2363 = vmatprep.subr.mxu0 0.0
    %2364 = vmatpush1.msra.mxu0 0.0
    %2365 = vmatprep.subr.mxu0 0.0
    %2366 = vmatpush1.msra.mxu0 0.0
    %2367 = vmatprep.subr.mxu0 0.0
    %2368 = vmatpush1.msra.mxu0 0.0
    %2369 = vmatprep.subr.mxu0 0.0
    %2370 = vmatpush1.msra.mxu0 0.0
    %2371 = vmatprep.subr.mxu0 0.0
    %2372 = vmatpush1.msra.mxu0 0.0
    %2373 = vmatprep.subr.mxu0 0.0
    %2374 = vmatpush1.msra.mxu0 0.0
    %2375 = vmatprep.subr.mxu0 0.0
    %2376 = vmatpush1.msra.mxu0 0.0
    %2377 = vmatprep.mubr.f32.mxu0 0.0
    %2378 = vmatmul.mubr.f32.gmra.mrb[0].mxu0 %v2035
    %v2379 = vpop.f32.mrb[0].mxu0
    %v2380 = vadd.f32 %v2017, %v2379
    %v2381 = vpop.f32.mrb[0].mxu0
    %v2382 = vadd.f32 %v2017, %v2381
    %2383 = vmatprep.mubr.f32.mxu0 0.0
    %2384 = vmatmul.mubr.f32.gmra.mrb[0].mxu0 %v2038
    %v2385 = vpop.f32.mrb[0].mxu0
    %v2386 = vadd.f32 %v2022, %v2385
    %v2387 = vpop.f32.mrb[0].mxu0
    %v2388 = vadd.f32 %v2022, %v2387
    %2389 = vmatprep.mubr.f32.mxu0 0.0
    %2390 = vmatmul.mubr.f32.gmra.mrb[0].mxu0 %v2041
    %v2391 = vpop.f32.mrb[0].mxu0
    %v2392 = vadd.f32 %v2027, %v2391
    %v2393 = vpop.f32.mrb[0].mxu0
    %v2394 = vadd.f32 %v2027, %v2393
    %2395 = vmatprep.mubr.f32.mxu0 0.0
    %2396 = vmatmul.mubr.f32.gmra.mrb[0].mxu0 %v2044
    %v2397 = vpop.f32.mrb[0].mxu0
    %v2398 = vadd.f32 %v2032, %v2397
    %v2399 = vpop.f32.mrb[0].mxu0
    %v2400 = vadd.f32 %v2032, %v2399
    %2401 = vdwg.mxu0
    %v2402 = vadd.f32 %v1542, %v2113
    %v2403 = vadd.f32 %v1543, %v2115
    %v2404 = vadd.f32 %v1544, %v2202
    %v2405 = vadd.f32 %v1545, %v2204
    %v2406 = vadd.f32 %v1546, %v2291
    %v2407 = vadd.f32 %v1547, %v2293
    %v2408 = vadd.f32 %v1548, %v2380
    %v2409 = vadd.f32 %v1549, %v2382
    %v2410 = vadd.f32 %v1550, %v2119
    %v2411 = vadd.f32 %v1551, %v2121
    %v2412 = vadd.f32 %v1552, %v2208
    %v2413 = vadd.f32 %v1553, %v2210
    %v2414 = vadd.f32 %v1554, %v2297
    %v2415 = vadd.f32 %v1555, %v2299
    %v2416 = vadd.f32 %v1556, %v2386
    %v2417 = vadd.f32 %v1557, %v2388
    %v2418 = vadd.f32 %v1558, %v2125
    %v2419 = vadd.f32 %v1559, %v2127
    %v2420 = vadd.f32 %v1560, %v2214
    %v2421 = vadd.f32 %v1561, %v2216
    %v2422 = vadd.f32 %v1562, %v2303
    %v2423 = vadd.f32 %v1563, %v2305
    %v2424 = vadd.f32 %v1564, %v2392
    %v2425 = vadd.f32 %v1565, %v2394
    %v2426 = vadd.f32 %v1566, %v2131
    %v2427 = vadd.f32 %v1567, %v2133
    %v2428 = vadd.f32 %v1568, %v2220
    %v2429 = vadd.f32 %v1569, %v2222
    %v2430 = vadd.f32 %v1570, %v2309
    %v2431 = vadd.f32 %v1571, %v2311
    %v2432 = vadd.f32 %v1572, %v2398
    %v2433 = vadd.f32 %v1573, %v2400
    %v2434 = vmax.f32 %v2402, 0.0
    %v2435 = vmax.f32 %v2403, 0.0
    %v2436 = vmax.f32 %v2404, 0.0
    %v2437 = vmax.f32 %v2405, 0.0
    %v2438 = vmax.f32 %v2406, 0.0
    %v2439 = vmax.f32 %v2407, 0.0
    %v2440 = vmax.f32 %v2408, 0.0
    %v2441 = vmax.f32 %v2409, 0.0
    %v2442 = vmax.f32 %v2410, 0.0
    %v2443 = vmax.f32 %v2411, 0.0
    %v2444 = vmax.f32 %v2412, 0.0
    %v2445 = vmax.f32 %v2413, 0.0
    %v2446 = vmax.f32 %v2414, 0.0
    %v2447 = vmax.f32 %v2415, 0.0
    %v2448 = vmax.f32 %v2416, 0.0
    %v2449 = vmax.f32 %v2417, 0.0
    %v2450 = vmax.f32 %v2418, 0.0
    %v2451 = vmax.f32 %v2419, 0.0
    %v2452 = vmax.f32 %v2420, 0.0
    %v2453 = vmax.f32 %v2421, 0.0
    %v2454 = vmax.f32 %v2422, 0.0
    %v2455 = vmax.f32 %v2423, 0.0
    %v2456 = vmax.f32 %v2424, 0.0
    %v2457 = vmax.f32 %v2425, 0.0
    %v2458 = vmax.f32 %v2426, 0.0
    %v2459 = vmax.f32 %v2427, 0.0
    %v2460 = vmax.f32 %v2428, 0.0
    %v2461 = vmax.f32 %v2429, 0.0
    %v2462 = vmax.f32 %v2430, 0.0
    %v2463 = vmax.f32 %v2431, 0.0
    %v2464 = vmax.f32 %v2432, 0.0
    %v2465 = vmax.f32 %v2433, 0.0
    %2467 = vset.pattern.permute.xlu0 0
    %2468 = vperm.xlu0 %2467, %v42
    %v2469 = vpop.permute.xlu0 %2468
    %2472 = vset.pattern.permute.xlu0 0
    %2473 = vperm.xlu0 %2472, %v43
    %v2474 = vpop.permute.xlu0 %2473
    %2477 = vset.pattern.permute.xlu0 0
    %2478 = vperm.xlu0 %2477, %v44
    %v2479 = vpop.permute.xlu0 %2478
    %2482 = vset.pattern.permute.xlu0 0
    %2483 = vperm.xlu0 %2482, %v45
    %v2484 = vpop.permute.xlu0 %2483
    %v2486 = vmul.f32 %v2469, %v2434
    %v2487 = vmul.f32 %v2469, %v2435
    %v2488 = vmul.f32 %v2469, %v2436
    %v2489 = vmul.f32 %v2469, %v2437
    %v2490 = vmul.f32 %v2469, %v2438
    %v2491 = vmul.f32 %v2469, %v2439
    %v2492 = vmul.f32 %v2469, %v2440
    %v2493 = vmul.f32 %v2469, %v2441
    %v2494 = vmul.f32 %v2474, %v2442
    %v2495 = vmul.f32 %v2474, %v2443
    %v2496 = vmul.f32 %v2474, %v2444
    %v2497 = vmul.f32 %v2474, %v2445
    %v2498 = vmul.f32 %v2474, %v2446
    %v2499 = vmul.f32 %v2474, %v2447
    %v2500 = vmul.f32 %v2474, %v2448
    %v2501 = vmul.f32 %v2474, %v2449
    %v2502 = vmul.f32 %v2479, %v2450
    %v2503 = vmul.f32 %v2479, %v2451
    %v2504 = vmul.f32 %v2479, %v2452
    %v2505 = vmul.f32 %v2479, %v2453
    %v2506 = vmul.f32 %v2479, %v2454
    %v2507 = vmul.f32 %v2479, %v2455
    %v2508 = vmul.f32 %v2479, %v2456
    %v2509 = vmul.f32 %v2479, %v2457
    %v2510 = vmul.f32 %v2484, %v2458
    %v2511 = vmul.f32 %v2484, %v2459
    %v2512 = vmul.f32 %v2484, %v2460
    %v2513 = vmul.f32 %v2484, %v2461
    %v2514 = vmul.f32 %v2484, %v2462
    %v2515 = vmul.f32 %v2484, %v2463
    %v2516 = vmul.f32 %v2484, %v2464
    %v2517 = vmul.f32 %v2484, %v2465
    %v2518 = vadd.f32 %v2486, %v2494
    %v2519 = vadd.f32 %v2518, %v2502
    %v2520 = vadd.f32 %v2519, %v2510
    %v2521 = vrot.slane %v2520, 4
    %v2522 = vadd.f32 %v2520, %v2521
    %v2523 = vrot.slane %v2522, 2
    %v2524 = vadd.f32 %v2522, %v2523
    %v2525 = vrot.slane %v2524, 1
    %v2526 = vadd.f32 %v2524, %v2525
    %v2527 = vadd.f32 %v2487, %v2495
    %v2528 = vadd.f32 %v2527, %v2503
    %v2529 = vadd.f32 %v2528, %v2511
    %v2530 = vrot.slane %v2529, 4
    %v2531 = vadd.f32 %v2529, %v2530
    %v2532 = vrot.slane %v2531, 2
    %v2533 = vadd.f32 %v2531, %v2532
    %v2534 = vrot.slane %v2533, 1
    %v2535 = vadd.f32 %v2533, %v2534
    %v2536 = vadd.f32 %v2488, %v2496
    %v2537 = vadd.f32 %v2536, %v2504
    %v2538 = vadd.f32 %v2537, %v2512
    %v2539 = vrot.slane %v2538, 4
    %v2540 = vadd.f32 %v2538, %v2539
    %v2541 = vrot.slane %v2540, 2
    %v2542 = vadd.f32 %v2540, %v2541
    %v2543 = vrot.slane %v2542, 1
    %v2544 = vadd.f32 %v2542, %v2543
    %v2545 = vadd.f32 %v2489, %v2497
    %v2546 = vadd.f32 %v2545, %v2505
    %v2547 = vadd.f32 %v2546, %v2513
    %v2548 = vrot.slane %v2547, 4
    %v2549 = vadd.f32 %v2547, %v2548
    %v2550 = vrot.slane %v2549, 2
    %v2551 = vadd.f32 %v2549, %v2550
    %v2552 = vrot.slane %v2551, 1
    %v2553 = vadd.f32 %v2551, %v2552
    %v2554 = vadd.f32 %v2490, %v2498
    %v2555 = vadd.f32 %v2554, %v2506
    %v2556 = vadd.f32 %v2555, %v2514
    %v2557 = vrot.slane %v2556, 4
    %v2558 = vadd.f32 %v2556, %v2557
    %v2559 = vrot.slane %v2558, 2
    %v2560 = vadd.f32 %v2558, %v2559
    %v2561 = vrot.slane %v2560, 1
    %v2562 = vadd.f32 %v2560, %v2561
    %v2563 = vadd.f32 %v2491, %v2499
    %v2564 = vadd.f32 %v2563, %v2507
    %v2565 = vadd.f32 %v2564, %v2515
    %v2566 = vrot.slane %v2565, 4
    %v2567 = vadd.f32 %v2565, %v2566
    %v2568 = vrot.slane %v2567, 2
    %v2569 = vadd.f32 %v2567, %v2568
    %v2570 = vrot.slane %v2569, 1
    %v2571 = vadd.f32 %v2569, %v2570
    %v2572 = vadd.f32 %v2492, %v2500
    %v2573 = vadd.f32 %v2572, %v2508
    %v2574 = vadd.f32 %v2573, %v2516
    %v2575 = vrot.slane %v2574, 4
    %v2576 = vadd.f32 %v2574, %v2575
    %v2577 = vrot.slane %v2576, 2
    %v2578 = vadd.f32 %v2576, %v2577
    %v2579 = vrot.slane %v2578, 1
    %v2580 = vadd.f32 %v2578, %v2579
    %v2581 = vadd.f32 %v2493, %v2501
    %v2582 = vadd.f32 %v2581, %v2509
    %v2583 = vadd.f32 %v2582, %v2517
    %v2584 = vrot.slane %v2583, 4
    %v2585 = vadd.f32 %v2583, %v2584
    %v2586 = vrot.slane %v2585, 2
    %v2587 = vadd.f32 %v2585, %v2586
    %v2588 = vrot.slane %v2587, 1
    %v2589 = vadd.f32 %v2587, %v2588
    %v2590 = vstv %s46
    %v2591 = vadd.f32 %v2526, %v2590
    %v2592 = vadd.f32 %v2535, %v2590
    %v2593 = vadd.f32 %v2544, %v2590
    %v2594 = vadd.f32 %v2553, %v2590
    %v2595 = vadd.f32 %v2562, %v2590
    %v2596 = vadd.f32 %v2571, %v2590
    %v2597 = vadd.f32 %v2580, %v2590
    %v2598 = vadd.f32 %v2589, %v2590
    %v2607 = vcombine.low %v2591, %v2592
    %v2608 = vcombine.low %v2593, %v2594
    %v2609 = vcombine.low %v2595, %v2596
    %v2610 = vcombine.low %v2597, %v2598
    %v2612 = vunpack.c.l.s4 1966171168
    %v2613 = vunpack.c.0.s8 %v2612
    %v2614 = vlaneseq
    %v2615 = vshrl.u32 %v2614, 7
    %v2616 = vsub.s32 %v2613, %v2615
    %v2617 = vrot.slane %v2607, %v2616
    %v2619 = vunpack.c.l.s4 1966171168
    %v2620 = vunpack.c.0.s8 %v2619
    %v2621 = vlaneseq
    %v2622 = vshrl.u32 %v2621, 7
    %v2623 = vsub.s32 %v2620, %v2622
    %v2624 = vrot.slane %v2608, %v2623
    %v2626 = vunpack.c.l.s4 1966171168
    %v2627 = vunpack.c.0.s8 %v2626
    %v2628 = vlaneseq
    %v2629 = vshrl.u32 %v2628, 7
    %v2630 = vsub.s32 %v2627, %v2629
    %v2631 = vrot.slane %v2609, %v2630
    %v2633 = vunpack.c.l.s4 1966171168
    %v2634 = vunpack.c.0.s8 %v2633
    %v2635 = vlaneseq
    %v2636 = vshrl.u32 %v2635, 7
    %v2637 = vsub.s32 %v2634, %v2636
    %v2638 = vrot.slane %v2610, %v2637
    %v2639 = vcombine.low %v2617, %v2624
    %v2640 = vcombine.low %v2631, %v2638
    %v2642 = vunpack.c.l.s4 1966171168
    %v2643 = vunpack.c.0.s8 %v2642
    %v2644 = vlaneseq
    %v2645 = vshrl.u32 %v2644, 7
    %v2646 = vsub.s32 %v2643, %v2645
    %v2647 = vrot.slane %v2639, %v2646
    %v2649 = vunpack.c.l.s4 1966171168
    %v2650 = vunpack.c.0.s8 %v2649
    %v2651 = vlaneseq
    %v2652 = vshrl.u32 %v2651, 7
    %v2653 = vsub.s32 %v2650, %v2652
    %v2654 = vrot.slane %v2640, %v2653
    %v2655 = vcombine.low %v2647, %v2654
    %2657 = vst [vmem:[#allocation3] sm:$0xff] %v2655
    %v2658 = vtanh.pop %v2591
    %v2659 = vtanh.pop %v2592
    %v2660 = vtanh.pop %v2593
    %v2661 = vtanh.pop %v2594
    %v2662 = vtanh.pop %v2595
    %v2663 = vtanh.pop %v2596
    %v2664 = vtanh.pop %v2597
    %v2665 = vtanh.pop %v2598
    %v2666 = vmax.f32 %v2658, 0.0
    %v2667 = vmax.f32 %v2659, 0.0
    %v2668 = vmax.f32 %v2660, 0.0
    %v2669 = vmax.f32 %v2661, 0.0
    %v2670 = vmax.f32 %v2662, 0.0
    %v2671 = vmax.f32 %v2663, 0.0
    %v2672 = vmax.f32 %v2664, 0.0
    %v2673 = vmax.f32 %v2665, 0.0
    %v2674 = vcombine.high %v30, %v30
    %v2675 = vcombine.high %v31, %v31
    %v2676 = vcombine.high %v32, %v32
    %v2677 = vcombine.high %v33, %v33
    %vm2682 = vcmask 1041408
    %v2683 = vsel %vm2682, %v30, 1.0
    %v2684 = vsel %vm2682, %v2674, 1.0
    %v2685 = vsel %vm2682, %v31, 1.0
    %v2686 = vsel %vm2682, %v2675, 1.0
    %v2687 = vsel %vm2682, %v32, 1.0
    %v2688 = vsel %vm2682, %v2676, 1.0
    %v2689 = vsel %vm2682, %v33, 1.0
    %v2690 = vsel %vm2682, %v2677, 1.0
    %v2699 = vrot.slane %v2683, 5
    %v2700 = vrot.slane %v2684, 5
    %v2701 = vrot.slane %v2685, 5
    %v2702 = vrot.slane %v2686, 5
    %v2703 = vrot.slane %v2687, 5
    %v2704 = vrot.slane %v2688, 5
    %v2705 = vrot.slane %v2689, 5
    %v2706 = vrot.slane %v2690, 5
    %v2715 = vrot.slane %v2683, 2
    %v2716 = vrot.slane %v2684, 2
    %v2717 = vrot.slane %v2685, 2
    %v2718 = vrot.slane %v2686, 2
    %v2719 = vrot.slane %v2687, 2
    %v2720 = vrot.slane %v2688, 2
    %v2721 = vrot.slane %v2689, 2
    %v2722 = vrot.slane %v2690, 2
    %vm2731 = vcmask 1042432
    %v2732 = vsel %vm2731, %v2683, %v2699
    %v2733 = vsel %vm2731, %v2684, %v2700
    %v2734 = vsel %vm2731, %v2685, %v2701
    %v2735 = vsel %vm2731, %v2686, %v2702
    %v2736 = vsel %vm2731, %v2687, %v2703
    %v2737 = vsel %vm2731, %v2688, %v2704
    %v2738 = vsel %vm2731, %v2689, %v2705
    %v2739 = vsel %vm2731, %v2690, %v2706
    %vm2740 = vcmask 1045504
    %v2741 = vsel %vm2740, %v2732, %v2715
    %v2742 = vsel %vm2740, %v2733, %v2716
    %v2743 = vsel %vm2740, %v2734, %v2717
    %v2744 = vsel %vm2740, %v2735, %v2718
    %v2745 = vsel %vm2740, %v2736, %v2719
    %v2746 = vsel %vm2740, %v2737, %v2720
    %v2747 = vsel %vm2740, %v2738, %v2721
    %v2748 = vsel %vm2740, %v2739, %v2722
    %v2749 = vsel %vm2731, %v386, %v538
    %v2750 = vsel %vm2731, %v390, %v542
    %v2751 = vsel %vm2731, %v394, %v546
    %v2752 = vsel %vm2731, %v398, %v550
    %v2753 = vsel %vm2731, %v402, %v554
    %v2754 = vsel %vm2731, %v406, %v558
    %v2755 = vsel %vm2731, %v410, %v562
    %v2756 = vsel %vm2731, %v414, %v566
    %v2757 = vsel %vm2740, %v2749, 1.0
    %v2758 = vsel %vm2740, %v2750, 1.0
    %v2759 = vsel %vm2740, %v2751, 1.0
    %v2760 = vsel %vm2740, %v2752, 1.0
    %v2761 = vsel %vm2740, %v2753, 1.0
    %v2762 = vsel %vm2740, %v2754, 1.0
    %v2763 = vsel %vm2740, %v2755, 1.0
    %v2764 = vsel %vm2740, %v2756, 1.0
    %v2765 = vmul.f32 %v2757, %v2741
    %v2766 = vmul.f32 %v2758, %v2742
    %v2767 = vmul.f32 %v2759, %v2743
    %v2768 = vmul.f32 %v2760, %v2744
    %v2769 = vmul.f32 %v2761, %v2745
    %v2770 = vmul.f32 %v2762, %v2746
    %v2771 = vmul.f32 %v2763, %v2747
    %v2772 = vmul.f32 %v2764, %v2748
    %v2773 = vmul.f32 %v2666, %v2765
    %v2774 = vmul.f32 %v2667, %v2766
    %v2775 = vmul.f32 %v2668, %v2767
    %v2776 = vmul.f32 %v2669, %v2768
    %v2777 = vmul.f32 %v2670, %v2769
    %v2778 = vmul.f32 %v2671, %v2770
    %v2779 = vmul.f32 %v2672, %v2771
    %v2780 = vmul.f32 %v2673, %v2772
    %v2781 = vmul.f32 %v2666, %v2715
    %v2782 = vmul.f32 %v2667, %v2716
    %v2783 = vmul.f32 %v2668, %v2717
    %v2784 = vmul.f32 %v2669, %v2718
    %v2785 = vmul.f32 %v2670, %v2719
    %v2786 = vmul.f32 %v2671, %v2720
    %v2787 = vmul.f32 %v2672, %v2721
    %v2788 = vmul.f32 %v2673, %v2722
    %2789 = vmatprep.subr.mxu0 %v2774
    %2790 = vmatpush1.xpose.msra.mxu0 %v2773
    %2791 = vmatprep.subr.mxu0 %v2782
    %2792 = vmatpush1.xpose.msra.mxu0 %v2781
    %2793 = vmatprep.subr.mxu0 0.0
    %2794 = vmatpush1.xpose.msra.mxu0 0.0
    %2795 = vmatprep.subr.mxu0 0.0
    %2796 = vmatpush1.xpose.msra.mxu0 0.0
    %2797 = vmatprep.subr.mxu0 0.0
    %2798 = vmatpush1.xpose.msra.mxu0 0.0
    %2799 = vmatprep.subr.mxu0 0.0
    %2800 = vmatpush1.xpose.msra.mxu0 0.0
    %2801 = vmatprep.subr.mxu0 0.0
    %2802 = vmatpush1.xpose.msra.mxu0 0.0
    %2803 = vmatprep.subr.mxu0 0.0
    %2804 = vmatpush1.xpose.msra.mxu0 0.0
    %2805 = vmatprep.subr.mxu0 0.0
    %2806 = vmatpush1.xpose.msra.mxu0 0.0
    %2807 = vmatprep.subr.mxu0 0.0
    %2808 = vmatpush1.xpose.msra.mxu0 0.0
    %2809 = vmatprep.subr.mxu0 0.0
    %2810 = vmatpush1.xpose.msra.mxu0 0.0
    %2811 = vmatprep.subr.mxu0 0.0
    %2812 = vmatpush1.xpose.msra.mxu0 0.0
    %2813 = vmatprep.subr.mxu0 0.0
    %2814 = vmatpush1.xpose.msra.mxu0 0.0
    %2815 = vmatprep.subr.mxu0 0.0
    %2816 = vmatpush1.xpose.msra.mxu0 0.0
    %2817 = vmatprep.subr.mxu0 0.0
    %2818 = vmatpush1.xpose.msra.mxu0 0.0
    %2819 = vmatprep.subr.mxu0 0.0
    %2820 = vmatpush1.xpose.msra.mxu0 0.0
    %2821 = vmatprep.subr.mxu0 0.0
    %2822 = vmatpush1.xpose.msra.mxu0 0.0
    %2823 = vmatprep.subr.mxu0 0.0
    %2824 = vmatpush1.xpose.msra.mxu0 0.0
    %2825 = vmatprep.subr.mxu0 0.0
    %2826 = vmatpush1.xpose.msra.mxu0 0.0
    %2827 = vmatprep.subr.mxu0 0.0
    %2828 = vmatpush1.xpose.msra.mxu0 0.0
    %2829 = vmatprep.subr.mxu0 0.0
    %2830 = vmatpush1.xpose.msra.mxu0 0.0
    %2831 = vmatprep.subr.mxu0 0.0
    %2832 = vmatpush1.xpose.msra.mxu0 0.0
    %2833 = vmatprep.subr.mxu0 0.0
    %2834 = vmatpush1.xpose.msra.mxu0 0.0
    %2835 = vmatprep.subr.mxu0 0.0
    %2836 = vmatpush1.xpose.msra.mxu0 0.0
    %2837 = vmatprep.subr.mxu0 0.0
    %2838 = vmatpush1.xpose.msra.mxu0 0.0
    %2839 = vmatprep.subr.mxu0 0.0
    %2840 = vmatpush1.xpose.msra.mxu0 0.0
    %2841 = vmatprep.subr.mxu0 0.0
    %2842 = vmatpush1.xpose.msra.mxu0 0.0
    %2843 = vmatprep.subr.mxu0 0.0
    %2844 = vmatpush1.xpose.msra.mxu0 0.0
    %2845 = vmatprep.subr.mxu0 0.0
    %2846 = vmatpush1.xpose.msra.mxu0 0.0
    %2847 = vmatprep.subr.mxu0 0.0
    %2848 = vmatpush1.xpose.msra.mxu0 0.0
    %2849 = vmatprep.subr.mxu0 0.0
    %2850 = vmatpush1.xpose.msra.mxu0 0.0
    %2851 = vmatprep.subr.mxu0 0.0
    %2852 = vmatpush1.xpose.msra.mxu0 0.0
    %2853 = vmatprep.mubr.f32.mxu0 %v2766
    %2854 = vmatmul.mubr.f32.gmra.mrb[0].mxu0 %v2765
    %v2855 = vpop.f32.mrb[0].mxu0
    %v2856 = vadd.f32 0.0, %v2855
    %v2857 = vpop.f32.mrb[0].mxu0
    %2858 = vmatprep.mubr.f32.mxu0 %v2716
    %2859 = vmatmul.mubr.f32.gmra.mrb[0].mxu0 %v2715
    %v2860 = vpop.f32.mrb[0].mxu0
    %v2861 = vadd.f32 0.0, %v2860
    %v2862 = vpop.f32.mrb[0].mxu0
    %2863 = vdwg.mxu0
    %2864 = vmatprep.subr.mxu0 %v2776
    %2865 = vmatpush1.xpose.msra.mxu0 %v2775
    %2866 = vmatprep.subr.mxu0 %v2784
    %2867 = vmatpush1.xpose.msra.mxu0 %v2783
    %2868 = vmatprep.subr.mxu0 0.0
    %2869 = vmatpush1.xpose.msra.mxu0 0.0
    %2870 = vmatprep.subr.mxu0 0.0
    %2871 = vmatpush1.xpose.msra.mxu0 0.0
    %2872 = vmatprep.subr.mxu0 0.0
    %2873 = vmatpush1.xpose.msra.mxu0 0.0
    %2874 = vmatprep.subr.mxu0 0.0
    %2875 = vmatpush1.xpose.msra.mxu0 0.0
    %2876 = vmatprep.subr.mxu0 0.0
    %2877 = vmatpush1.xpose.msra.mxu0 0.0
    %2878 = vmatprep.subr.mxu0 0.0
    %2879 = vmatpush1.xpose.msra.mxu0 0.0
    %2880 = vmatprep.subr.mxu0 0.0
    %2881 = vmatpush1.xpose.msra.mxu0 0.0
    %2882 = vmatprep.subr.mxu0 0.0
    %2883 = vmatpush1.xpose.msra.mxu0 0.0
    %2884 = vmatprep.subr.mxu0 0.0
    %2885 = vmatpush1.xpose.msra.mxu0 0.0
    %2886 = vmatprep.subr.mxu0 0.0
    %2887 = vmatpush1.xpose.msra.mxu0 0.0
    %2888 = vmatprep.subr.mxu0 0.0
    %2889 = vmatpush1.xpose.msra.mxu0 0.0
    %2890 = vmatprep.subr.mxu0 0.0
    %2891 = vmatpush1.xpose.msra.mxu0 0.0
    %2892 = vmatprep.subr.mxu0 0.0
    %2893 = vmatpush1.xpose.msra.mxu0 0.0
    %2894 = vmatprep.subr.mxu0 0.0
    %2895 = vmatpush1.xpose.msra.mxu0 0.0
    %2896 = vmatprep.subr.mxu0 0.0
    %2897 = vmatpush1.xpose.msra.mxu0 0.0
    %2898 = vmatprep.subr.mxu0 0.0
    %2899 = vmatpush1.xpose.msra.mxu0 0.0
    %2900 = vmatprep.subr.mxu0 0.0
    %2901 = vmatpush1.xpose.msra.mxu0 0.0
    %2902 = vmatprep.subr.mxu0 0.0
    %2903 = vmatpush1.xpose.msra.mxu0 0.0
    %2904 = vmatprep.subr.mxu0 0.0
    %2905 = vmatpush1.xpose.msra.mxu0 0.0
    %2906 = vmatprep.subr.mxu0 0.0
    %2907 = vmatpush1.xpose.msra.mxu0 0.0
    %2908 = vmatprep.subr.mxu0 0.0
    %2909 = vmatpush1.xpose.msra.mxu0 0.0
    %2910 = vmatprep.subr.mxu0 0.0
    %2911 = vmatpush1.xpose.msra.mxu0 0.0
    %2912 = vmatprep.subr.mxu0 0.0
    %2913 = vmatpush1.xpose.msra.mxu0 0.0
    %2914 = vmatprep.subr.mxu0 0.0
    %2915 = vmatpush1.xpose.msra.mxu0 0.0
    %2916 = vmatprep.subr.mxu0 0.0
    %2917 = vmatpush1.xpose.msra.mxu0 0.0
    %2918 = vmatprep.subr.mxu0 0.0
    %2919 = vmatpush1.xpose.msra.mxu0 0.0
    %2920 = vmatprep.subr.mxu0 0.0
    %2921 = vmatpush1.xpose.msra.mxu0 0.0
    %2922 = vmatprep.subr.mxu0 0.0
    %2923 = vmatpush1.xpose.msra.mxu0 0.0
    %2924 = vmatprep.subr.mxu0 0.0
    %2925 = vmatpush1.xpose.msra.mxu0 0.0
    %2926 = vmatprep.subr.mxu0 0.0
    %2927 = vmatpush1.xpose.msra.mxu0 0.0
    %2928 = vmatprep.mubr.f32.mxu0 %v2768
    %2929 = vmatmul.mubr.f32.gmra.mrb[0].mxu0 %v2767
    %v2930 = vpop.f32.mrb[0].mxu0
    %v2931 = vadd.f32 0.0, %v2930
    %v2932 = vpop.f32.mrb[0].mxu0
    %2933 = vmatprep.mubr.f32.mxu0 %v2718
    %2934 = vmatmul.mubr.f32.gmra.mrb[0].mxu0 %v2717
    %v2935 = vpop.f32.mrb[0].mxu0
    %v2936 = vadd.f32 0.0, %v2935
    %v2937 = vpop.f32.mrb[0].mxu0
    %2938 = vdwg.mxu0
    %2939 = vmatprep.subr.mxu0 %v2778
    %2940 = vmatpush1.xpose.msra.mxu0 %v2777
    %2941 = vmatprep.subr.mxu0 %v2786
    %2942 = vmatpush1.xpose.msra.mxu0 %v2785
    %2943 = vmatprep.subr.mxu0 0.0
    %2944 = vmatpush1.xpose.msra.mxu0 0.0
    %2945 = vmatprep.subr.mxu0 0.0
    %2946 = vmatpush1.xpose.msra.mxu0 0.0
    %2947 = vmatprep.subr.mxu0 0.0
    %2948 = vmatpush1.xpose.msra.mxu0 0.0
    %2949 = vmatprep.subr.mxu0 0.0
    %2950 = vmatpush1.xpose.msra.mxu0 0.0
    %2951 = vmatprep.subr.mxu0 0.0
    %2952 = vmatpush1.xpose.msra.mxu0 0.0
    %2953 = vmatprep.subr.mxu0 0.0
    %2954 = vmatpush1.xpose.msra.mxu0 0.0
    %2955 = vmatprep.subr.mxu0 0.0
    %2956 = vmatpush1.xpose.msra.mxu0 0.0
    %2957 = vmatprep.subr.mxu0 0.0
    %2958 = vmatpush1.xpose.msra.mxu0 0.0
    %2959 = vmatprep.subr.mxu0 0.0
    %2960 = vmatpush1.xpose.msra.mxu0 0.0
    %2961 = vmatprep.subr.mxu0 0.0
    %2962 = vmatpush1.xpose.msra.mxu0 0.0
    %2963 = vmatprep.subr.mxu0 0.0
    %2964 = vmatpush1.xpose.msra.mxu0 0.0
    %2965 = vmatprep.subr.mxu0 0.0
    %2966 = vmatpush1.xpose.msra.mxu0 0.0
    %2967 = vmatprep.subr.mxu0 0.0
    %2968 = vmatpush1.xpose.msra.mxu0 0.0
    %2969 = vmatprep.subr.mxu0 0.0
    %2970 = vmatpush1.xpose.msra.mxu0 0.0
    %2971 = vmatprep.subr.mxu0 0.0
    %2972 = vmatpush1.xpose.msra.mxu0 0.0
    %2973 = vmatprep.subr.mxu0 0.0
    %2974 = vmatpush1.xpose.msra.mxu0 0.0
    %2975 = vmatprep.subr.mxu0 0.0
    %2976 = vmatpush1.xpose.msra.mxu0 0.0
    %2977 = vmatprep.subr.mxu0 0.0
    %2978 = vmatpush1.xpose.msra.mxu0 0.0
    %2979 = vmatprep.subr.mxu0 0.0
    %2980 = vmatpush1.xpose.msra.mxu0 0.0
    %2981 = vmatprep.subr.mxu0 0.0
    %2982 = vmatpush1.xpose.msra.mxu0 0.0
    %2983 = vmatprep.subr.mxu0 0.0
    %2984 = vmatpush1.xpose.msra.mxu0 0.0
    %2985 = vmatprep.subr.mxu0 0.0
    %2986 = vmatpush1.xpose.msra.mxu0 0.0
    %2987 = vmatprep.subr.mxu0 0.0
    %2988 = vmatpush1.xpose.msra.mxu0 0.0
    %2989 = vmatprep.subr.mxu0 0.0
    %2990 = vmatpush1.xpose.msra.mxu0 0.0
    %2991 = vmatprep.subr.mxu0 0.0
    %2992 = vmatpush1.xpose.msra.mxu0 0.0
    %2993 = vmatprep.subr.mxu0 0.0
    %2994 = vmatpush1.xpose.msra.mxu0 0.0
    %2995 = vmatprep.subr.mxu0 0.0
    %2996 = vmatpush1.xpose.msra.mxu0 0.0
    %2997 = vmatprep.subr.mxu0 0.0
    %2998 = vmatpush1.xpose.msra.mxu0 0.0
    %2999 = vmatprep.subr.mxu0 0.0
    %3000 = vmatpush1.xpose.msra.mxu0 0.0
    %3001 = vmatprep.subr.mxu0 0.0
    %3002 = vmatpush1.xpose.msra.mxu0 0.0
    %3003 = vmatprep.mubr.f32.mxu0 %v2770
    %3004 = vmatmul.mubr.f32.gmra.mrb[0].mxu0 %v2769
    %v3005 = vpop.f32.mrb[0].mxu0
    %v3006 = vadd.f32 0.0, %v3005
    %v3007 = vpop.f32.mrb[0].mxu0
    %3008 = vmatprep.mubr.f32.mxu0 %v2720
    %3009 = vmatmul.mubr.f32.gmra.mrb[0].mxu0 %v2719
    %v3010 = vpop.f32.mrb[0].mxu0
    %v3011 = vadd.f32 0.0, %v3010
    %v3012 = vpop.f32.mrb[0].mxu0
    %3013 = vdwg.mxu0
    %3014 = vmatprep.subr.mxu0 %v2780
    %3015 = vmatpush1.xpose.msra.mxu0 %v2779
    %3016 = vmatprep.subr.mxu0 %v2788
    %3017 = vmatpush1.xpose.msra.mxu0 %v2787
    %3018 = vmatprep.subr.mxu0 0.0
    %3019 = vmatpush1.xpose.msra.mxu0 0.0
    %3020 = vmatprep.subr.mxu0 0.0
    %3021 = vmatpush1.xpose.msra.mxu0 0.0
    %3022 = vmatprep.subr.mxu0 0.0
    %3023 = vmatpush1.xpose.msra.mxu0 0.0
    %3024 = vmatprep.subr.mxu0 0.0
    %3025 = vmatpush1.xpose.msra.mxu0 0.0
    %3026 = vmatprep.subr.mxu0 0.0
    %3027 = vmatpush1.xpose.msra.mxu0 0.0
    %3028 = vmatprep.subr.mxu0 0.0
    %3029 = vmatpush1.xpose.msra.mxu0 0.0
    %3030 = vmatprep.subr.mxu0 0.0
    %3031 = vmatpush1.xpose.msra.mxu0 0.0
    %3032 = vmatprep.subr.mxu0 0.0
    %3033 = vmatpush1.xpose.msra.mxu0 0.0
    %3034 = vmatprep.subr.mxu0 0.0
    %3035 = vmatpush1.xpose.msra.mxu0 0.0
    %3036 = vmatprep.subr.mxu0 0.0
    %3037 = vmatpush1.xpose.msra.mxu0 0.0
    %3038 = vmatprep.subr.mxu0 0.0
    %3039 = vmatpush1.xpose.msra.mxu0 0.0
    %3040 = vmatprep.subr.mxu0 0.0
    %3041 = vmatpush1.xpose.msra.mxu0 0.0
    %3042 = vmatprep.subr.mxu0 0.0
    %3043 = vmatpush1.xpose.msra.mxu0 0.0
    %3044 = vmatprep.subr.mxu0 0.0
    %3045 = vmatpush1.xpose.msra.mxu0 0.0
    %3046 = vmatprep.subr.mxu0 0.0
    %3047 = vmatpush1.xpose.msra.mxu0 0.0
    %3048 = vmatprep.subr.mxu0 0.0
    %3049 = vmatpush1.xpose.msra.mxu0 0.0
    %3050 = vmatprep.subr.mxu0 0.0
    %3051 = vmatpush1.xpose.msra.mxu0 0.0
    %3052 = vmatprep.subr.mxu0 0.0
    %3053 = vmatpush1.xpose.msra.mxu0 0.0
    %3054 = vmatprep.subr.mxu0 0.0
    %3055 = vmatpush1.xpose.msra.mxu0 0.0
    %3056 = vmatprep.subr.mxu0 0.0
    %3057 = vmatpush1.xpose.msra.mxu0 0.0
    %3058 = vmatprep.subr.mxu0 0.0
    %3059 = vmatpush1.xpose.msra.mxu0 0.0
    %3060 = vmatprep.subr.mxu0 0.0
    %3061 = vmatpush1.xpose.msra.mxu0 0.0
    %3062 = vmatprep.subr.mxu0 0.0
    %3063 = vmatpush1.xpose.msra.mxu0 0.0
    %3064 = vmatprep.subr.mxu0 0.0
    %3065 = vmatpush1.xpose.msra.mxu0 0.0
    %3066 = vmatprep.subr.mxu0 0.0
    %3067 = vmatpush1.xpose.msra.mxu0 0.0
    %3068 = vmatprep.subr.mxu0 0.0
    %3069 = vmatpush1.xpose.msra.mxu0 0.0
    %3070 = vmatprep.subr.mxu0 0.0
    %3071 = vmatpush1.xpose.msra.mxu0 0.0
    %3072 = vmatprep.subr.mxu0 0.0
    %3073 = vmatpush1.xpose.msra.mxu0 0.0
    %3074 = vmatprep.subr.mxu0 0.0
    %3075 = vmatpush1.xpose.msra.mxu0 0.0
    %3076 = vmatprep.subr.mxu0 0.0
    %3077 = vmatpush1.xpose.msra.mxu0 0.0
    %3078 = vmatprep.mubr.f32.mxu0 %v2772
    %3079 = vmatmul.mubr.f32.gmra.mrb[0].mxu0 %v2771
    %v3080 = vpop.f32.mrb[0].mxu0
    %v3081 = vadd.f32 0.0, %v3080
    %v3082 = vpop.f32.mrb[0].mxu0
    %3083 = vmatprep.mubr.f32.mxu0 %v2722
    %3084 = vmatmul.mubr.f32.gmra.mrb[0].mxu0 %v2721
    %v3085 = vpop.f32.mrb[0].mxu0
    %v3086 = vadd.f32 0.0, %v3085
    %v3087 = vpop.f32.mrb[0].mxu0
    %3088 = vdwg.mxu0
    %vm3089 = vcmask 72704
    %3090 = vst.msk [vmem:[%s8] sm:$0xff] %vm3089, %v2856
    %vm3091 = vcmask 65536
    %3092 = vst.msk [vmem:[%s8 + $0x8] sm:$0x1] %vm3091, %v2861
    %3093 = vst.msk [vmem:[%s8 + $0x10] sm:$0xff] %vm3089, %v2931
    %3094 = vst.msk [vmem:[%s8 + $0x18] sm:$0x1] %vm3091, %v2936
    %3095 = vst.msk [vmem:[%s8 + $0x20] sm:$0xff] %vm3089, %v3006
    %3096 = vst.msk [vmem:[%s8 + $0x28] sm:$0x1] %vm3091, %v3011
    %3097 = vst.msk [vmem:[%s8 + $0x30] sm:$0xff] %vm3089, %v3081
    %3098 = vst.msk [vmem:[%s8 + $0x38] sm:$0x1] %vm3091, %v3086
    // Predicated region
    $region30: #{tpu_custom_call.1} parent=1 // pred_check
      _
    $region31: #{tpu_custom_call.1} parent=1 // pred_check_branch
      %3100 = sbr.rel (0) target = $region33
    $region32: #{tpu_custom_call.1} parent=1 // pred_region
      %s3102 = ssub.s32 128, 128
      %3103 = vsyncadd [#allocation4], %s3102
      %s3105 = sshll.u32 [#allocation3], 4
      %s3106 = int_to_ptr.vmem [resolvable:$true] %s3105
      %3108 = dma.vmem_to_hbm [thread:$0]  %s3106, 128, %s7, [#allocation4]
    $region33: #{tpu_custom_call.1} parent=1 // pred_fallthru
      _
    // Predicated region
    $region34: #{tpu_custom_call.1} parent=1 // pred_check
      _
    $region35: #{tpu_custom_call.1} parent=1 // pred_check_branch
      %3110 = sbr.rel (0) target = $region37
    $region36: #{tpu_custom_call.1} parent=1 // pred_region
      _
    $region37: #{tpu_custom_call.1} parent=1 // pred_fallthru
      _
    // Predicated region
    $region38: #{tpu_custom_call.1} parent=1 // pred_check
      _
    $region39: #{tpu_custom_call.1} parent=1 // pred_check_branch
      %3112 = sbr.rel (0) target = $region41
    $region40: #{tpu_custom_call.1} parent=1 // pred_region
      %3113 = dma.done [#allocation4], 128
    $region41: #{tpu_custom_call.1} parent=1 // pred_fallthru
      _
    // Predicated region
    $region42: #{tpu_custom_call.1} parent=1 // pred_check
      _
    $region43: #{tpu_custom_call.1} parent=1 // pred_check_branch
      %3115 = sbr.rel (0) target = $region45
    $region44: #{tpu_custom_call.1} parent=1 // pred_region
      _
    $region45: #{tpu_custom_call.1} parent=1 // pred_fallthru
      _
    %3116 = vsyncpa [#allocation4], 1

</llo_original>
